<compile_context>
chip_gen: v7x
topology: tpu7x:2x2x1
jax: 0.10.0
libtpu: 0.0.40
codegen_flags: <defaults>
</compile_context>

<pallas_src>
import functools
import math

import jax
import jax.numpy as jnp
from jax.experimental import pallas as pl
from jax.experimental.pallas import tpu as pltpu


# ----------------------------------------------------------------------------
# Math helpers (usable inside Pallas kernels and in the pure-JAX reference).
# ----------------------------------------------------------------------------
_ERF_ALPHA = (-2.72614225801306e-10, 2.77068142495902e-08, -2.10102402082508e-06,
              -5.69250639462346e-05, -7.34990630326855e-04, -2.95459980854025e-03,
              -1.60960333262415e-02)
_ERF_BETA = (-1.45660718464996e-05, -2.13374055278905e-04, -1.68282697438203e-03,
             -7.37332916720468e-03, -1.42647390514189e-02)


def _erf(x):
    # f32 rational erf approximation (same form XLA uses); ~f32-accurate.
    x = jnp.clip(x, -4.0, 4.0)
    x2 = x * x
    p = jnp.full_like(x2, _ERF_ALPHA[0])
    for a in _ERF_ALPHA[1:]:
        p = p * x2 + a
    q = jnp.full_like(x2, _ERF_BETA[0])
    for b in _ERF_BETA[1:]:
        q = q * x2 + b
    return x * p / q


def _gelu_exact(x):
    # PyTorch nn.GELU() default (approximate='none').
    # TODO(synk): on v5e, consider tanh-GELU (EUP) if the FFN turns VALU-bound.
    return 0.5 * x * (1.0 + _erf(x * (1.0 / math.sqrt(2.0))))


def _layernorm(x, gamma, beta, eps=1e-5):
    mean = jnp.mean(x, axis=-1, keepdims=True)
    var = jnp.mean((x - mean) ** 2, axis=-1, keepdims=True)
    return (x - mean) * jax.lax.rsqrt(var + eps) * gamma + beta


# ----------------------------------------------------------------------------
# In-kernel fused multi-head attention block (operates on VMEM values).
# ----------------------------------------------------------------------------
def _mha_block(xq, xkv, wq_t, wkv_t, bq, bkv, wo_t, bo,
               *, nhead, scale, cdt, approx_recip):
    """xq: (Lq, H) f32, xkv: (Lkv, H) f32.  Weights pre-transposed, dtype=cdt."""
    H = xq.shape[-1]
    hd = H // nhead

    # Fused, lane-dense projections: Q once, K and V together.
    q = jnp.dot(xq.astype(cdt), wq_t, preferred_element_type=jnp.float32) + bq
    kv = jnp.dot(xkv.astype(cdt), wkv_t, preferred_element_type=jnp.float32) + bkv
    k = kv[:, :H]
    v = kv[:, H:]

    heads = []
    for h in range(nhead):                       # static unroll, nhead is small
        sl = slice(h * hd, (h + 1) * hd)
        qh = q[:, sl].astype(cdt)                # (Lq, hd)
        kh = k[:, sl].astype(cdt)                # (Lkv, hd)
        vh = v[:, sl].astype(cdt)                # (Lkv, hd)
        s = jax.lax.dot_general(qh, kh, (((1,), (1,)), ((), ())),
                                preferred_element_type=jnp.float32) * scale
        s = s - jnp.max(s, axis=-1, keepdims=True)
        e = jnp.exp(s)
        denom = jnp.sum(e, axis=-1, keepdims=True)
        if approx_recip:
            p = e * pl.reciprocal(denom, approx=True)   # EUP slot (bf16 path)
        else:
            p = e / denom                               # exact (f32 validation)
        heads.append(jnp.dot(p.astype(cdt), vh, preferred_element_type=jnp.float32))

    attn = jnp.concatenate(heads, axis=-1)              # (Lq, H)
    # Single lane-dense output projection.
    return jnp.dot(attn.astype(cdt), wo_t, preferred_element_type=jnp.float32) + bo


# ----------------------------------------------------------------------------
# Pallas kernels
# ----------------------------------------------------------------------------
def _layer_attn_kernel(q_ref, img_ref,
                       s_wq, s_wkv, s_bq, s_bkv, s_wo, s_bo,
                       c_wq, c_wkv, c_bq, c_bkv, c_wo, c_bo,
                       o_ref, *, nhead, scale, cdt, approx_recip):
    """self_attn(q,q,q) followed by cross_attn(q, img, img); q stays in VMEM."""
    kw = dict(nhead=nhead, scale=scale, cdt=cdt, approx_recip=approx_recip)
    x = q_ref[0]                                   # (Lq, H)
    img = img_ref[0]                               # (Lkv, H)
    x = _mha_block(x, x, s_wq[...], s_wkv[...], s_bq[...], s_bkv[...],
                   s_wo[...], s_bo[...], **kw)
    x = _mha_block(x, img, c_wq[...], c_wkv[...], c_bq[...], c_bkv[...],
                   c_wo[...], c_bo[...], **kw)
    o_ref[0] = x


def _ffn_kernel(x_ref, g1_ref, be1_ref, w1t_ref, b1_ref, w2t_ref, b2_ref,
                g2_ref, be2_ref, o_ref, *, cdt):
    """LayerNorm -> Linear(H,4H) -> GELU -> Linear(4H,H) -> LayerNorm, row-tiled."""
    x = x_ref[...]                                                      # (TM, H)
    h = _layernorm(x, g1_ref[...], be1_ref[...])
    y = jnp.dot(h.astype(cdt), w1t_ref[...],
                preferred_element_type=jnp.float32) + b1_ref[...]       # (TM, 4H)
    y = _gelu_exact(y)
    y = jnp.dot(y.astype(cdt), w2t_ref[...],
                preferred_element_type=jnp.float32) + b2_ref[...]       # (TM, H)
    o_ref[...] = _layernorm(y, g2_ref[...], be2_ref[...])


def _linear_kernel(x_ref, wt_ref, b_ref, o_ref, *, cdt):
    o_ref[...] = (jnp.dot(x_ref[...].astype(cdt), wt_ref[...],
                          preferred_element_type=jnp.float32) + b_ref[...])


# ----------------------------------------------------------------------------
# BlockSpec helpers
# ----------------------------------------------------------------------------
def _row_block(n):
    """Largest (8,*)-friendly row tile that still yields >= 2 grid steps."""
    divisors = [t for t in (256, 128, 64, 32, 16, 8) if n % t == 0]
    for t in divisors:
        if n // t >= 2:
            return t
    return divisors[0] if divisors else n


def _const_spec(shape, single_buffer=False):
    idx = lambda *_: (0,) * len(shape)
    if single_buffer:
        # Constant-index weights gain nothing from double buffering (v7x VMEM).
        return pl.BlockSpec(shape, idx, pipeline_mode=pl.Buffered(1))
    return pl.BlockSpec(shape, idx)


# ----------------------------------------------------------------------------
# Wrappers (pallas_call plumbing)
# ----------------------------------------------------------------------------
def layer_attn_pallas(xq, img, sp, cp, nhead, compute_dtype):
    B, Lq, H = xq.shape
    Lkv = img.shape[1]
    hd = H // nhead
    cdt = jnp.dtype(compute_dtype)
    kernel = functools.partial(
        _layer_attn_kernel, nhead=nhead, scale=1.0 / math.sqrt(hd),
        cdt=cdt, approx_recip=(cdt == jnp.dtype(jnp.bfloat16)))

    def attn_specs():
        return [_const_spec((H, H)), _const_spec((H, 2 * H)),
                _const_spec((1, H)), _const_spec((1, 2 * H)),
                _const_spec((H, H)), _const_spec((1, H))]

    return pl.pallas_call(
        kernel,
        out_shape=jax.ShapeDtypeStruct((B, Lq, H), jnp.float32),
        grid=(B,),
        in_specs=[pl.BlockSpec((1, Lq, H), lambda b: (b, 0, 0)),
                  pl.BlockSpec((1, Lkv, H), lambda b: (b, 0, 0))]
                 + attn_specs() + attn_specs(),
        out_specs=pl.BlockSpec((1, Lq, H), lambda b: (b, 0, 0)),
        compiler_params=pltpu.CompilerParams(dimension_semantics=("parallel",)),
    )(xq, img,
      sp["wq_t"], sp["wkv_t"], sp["bq"], sp["bkv"], sp["wo_t"], sp["bo"],
      cp["wq_t"], cp["wkv_t"], cp["bq"], cp["bkv"], cp["wo_t"], cp["bo"])


def ffn_pallas(x, p, compute_dtype):
    B, L, H = x.shape
    Hf = p["w1t"].shape[1]
    BL = B * L
    TM = _row_block(BL)
    xf = x.reshape(BL, H)
    # Only single-buffer constant weights when they are actually big.
    wbytes = (p["w1t"].size + p["w2t"].size) * p["w1t"].dtype.itemsize
    big = wbytes > (8 << 20)
    out = pl.pallas_call(
        functools.partial(_ffn_kernel, cdt=jnp.dtype(compute_dtype)),
        out_shape=jax.ShapeDtypeStruct((BL, H), jnp.float32),
        grid=(BL // TM,),
        in_specs=[
            pl.BlockSpec((TM, H), lambda i: (i, 0)),
            _const_spec((1, H)), _const_spec((1, H)),        # ln1 gamma / beta
            _const_spec((H, Hf), big),                       # w1^T
            _const_spec((1, Hf)),                            # b1
            _const_spec((Hf, H), big),                       # w2^T
            _const_spec((1, H)),                             # b2
            _const_spec((1, H)), _const_spec((1, H)),        # ln2 gamma / beta
        ],
        out_specs=pl.BlockSpec((TM, H), lambda i: (i, 0)),
        compiler_params=pltpu.CompilerParams(dimension_semantics=("parallel",)),
    )(xf, p["ln1_g"], p["ln1_b"], p["w1t"], p["b1"], p["w2t"], p["b2"],
      p["ln2_g"], p["ln2_b"])
    return out.reshape(B, L, H)


def linear_pallas(x, wt, b, compute_dtype):
    B, L, H = x.shape
    O = wt.shape[1]
    BL = B * L
    TM = _row_block(BL)
    xf = x.reshape(BL, H)
    out = pl.pallas_call(
        functools.partial(_linear_kernel, cdt=jnp.dtype(compute_dtype)),
        out_shape=jax.ShapeDtypeStruct((BL, O), jnp.float32),
        grid=(BL // TM,),
        in_specs=[pl.BlockSpec((TM, H), lambda i: (i, 0)),
                  _const_spec((H, O)), _const_spec((1, O))],
        out_specs=pl.BlockSpec((TM, O), lambda i: (i, 0)),
        compiler_params=pltpu.CompilerParams(dimension_semantics=("parallel",)),
    )(xf, wt, b)
    return out.reshape(B, L, O)


# ----------------------------------------------------------------------------
# One-time parameter preparation (outside the forward loop): transpose, fuse
# K/V, optionally cast weights to the compute dtype.  Biases / LN stay f32.
# ----------------------------------------------------------------------------
def prepare_params(params, compute_dtype=jnp.float32):
    cdt = jnp.dtype(compute_dtype)

    def prep_attn(p):
        return dict(
            wq_t=p["wq"].T.astype(cdt),                                         # (H, H)
            wkv_t=jnp.concatenate([p["wk"].T, p["wv"].T], axis=1).astype(cdt),  # (H, 2H)
            bq=p["bq"].astype(jnp.float32),                                     # (1, H)
            bkv=jnp.concatenate([p["bk"], p["bv"]], axis=1).astype(jnp.float32),
            wo_t=p["wo"].T.astype(cdt),                                         # (H, H)
            bo=p["bo"].astype(jnp.float32),                                     # (1, H)
        )

    def prep_ffn(p):
        return dict(
            ln1_g=p["ln1_g"], ln1_b=p["ln1_b"],
            w1t=p["w1"].T.astype(cdt), b1=p["b1"],
            w2t=p["w2"].T.astype(cdt), b2=p["b2"],
            ln2_g=p["ln2_g"], ln2_b=p["ln2_b"],
        )

    return dict(
        query_tokens=params["query_tokens"],
        layers=[dict(self_attn=prep_attn(l["self_attn"]),
                     cross_attn=prep_attn(l["cross_attn"]),
                     ffn=prep_ffn(l["ffn"]))
                for l in params["layers"]],
        fc_wt=params["fc_w"].T.astype(cdt),
        fc_b=params["fc_b"],
    )


def qformer_forward(prepared, image_embeds, nhead, compute_dtype=jnp.float32):
    B = image_embeds.shape[0]
    qt = prepared["query_tokens"]
    q = jnp.broadcast_to(qt, (B,) + qt.shape[1:])
    for layer in prepared["layers"]:
        q = layer_attn_pallas(q, image_embeds, layer["self_attn"],
                              layer["cross_attn"], nhead, compute_dtype)
        q = ffn_pallas(q, layer["ffn"], compute_dtype)
    return linear_pallas(q, prepared["fc_wt"], prepared["fc_b"], compute_dtype)


# ----------------------------------------------------------------------------
# Pure-JAX reference (mirrors PyTorch semantics) for validation.
# ----------------------------------------------------------------------------
def _ref_mha(xq, xkv, p, nhead):
    B, Lq, H = xq.shape
    Lkv = xkv.shape[1]
    hd = H // nhead
    qp = xq @ p["wq"].T + p["bq"]
    kp = xkv @ p["wk"].T + p["bk"]
    vp = xkv @ p["wv"].T + p["bv"]
    qh = qp.reshape(B, Lq, nhead, hd).transpose(0, 2, 1, 3)
    kh = kp.reshape(B, Lkv, nhead, hd).transpose(0, 2, 1, 3)
    vh = vp.reshape(B, Lkv, nhead, hd).transpose(0, 2, 1, 3)
    s = jnp.einsum("bhqd,bhkd->bhqk", qh, kh) / math.sqrt(hd)
    a = jax.nn.softmax(s, axis=-1)
    o = jnp.einsum("bhqk,bhkd->bhqd", a, vh).transpose(0, 2, 1, 3).reshape(B, Lq, H)
    return o @ p["wo"].T + p["bo"]


def _ref_ffn(x, p):
    h = _layernorm(x, p["ln1_g"][0], p["ln1_b"][0])
    y = h @ p["w1"].T + p["b1"]
    y = jax.nn.gelu(y, approximate=False)
    y = y @ p["w2"].T + p["b2"]
    return _layernorm(y, p["ln2_g"][0], p["ln2_b"][0])


def ref_forward(params, image_embeds, nhead):
    B = image_embeds.shape[0]
    q = jnp.broadcast_to(params["query_tokens"],
                         (B,) + params["query_tokens"].shape[1:])
    for layer in params["layers"]:
        q = _ref_mha(q, q, layer["self_attn"], nhead)
        q = _ref_mha(q, image_embeds, layer["cross_attn"], nhead)
        q = _ref_ffn(q, layer["ffn"])
    return q @ params["fc_w"].T + params["fc_b"]


# ----------------------------------------------------------------------------
# Deterministic parameter construction (shapes mirror the PyTorch __init__).
# ----------------------------------------------------------------------------
def init_params(key, hidden_dim, num_query_tokens, num_layers, nhead):
    H = hidden_dim
    keys = iter(jax.random.split(key, 8 + num_layers * 32))

    def nxt():
        return next(keys)

    def w(shape, scale=0.2):
        return scale * jax.random.normal(nxt(), shape, dtype=jnp.float32)

    def attn_params():
        in_proj = w((3 * H, H))            # in_proj_weight
        in_bias = w((1, 3 * H), 0.02)      # in_proj_bias
        return dict(
            wq=in_proj[:H], wk=in_proj[H:2 * H], wv=in_proj[2 * H:],
            bq=in_bias[:, :H], bk=in_bias[:, H:2 * H], bv=in_bias[:, 2 * H:],
            wo=w((H, H)), bo=w((1, H), 0.02),
        )

    def ffn_params():
        return dict(
            ln1_g=1.0 + w((1, H), 0.05), ln1_b=w((1, H), 0.05),
            w1=w((4 * H, H)), b1=w((1, 4 * H), 0.02),
            w2=w((H, 4 * H)), b2=w((1, H), 0.02),
            ln2_g=1.0 + w((1, H), 0.05), ln2_b=w((1, H), 0.05),
        )

    layers = [dict(self_attn=attn_params(), cross_attn=attn_params(),
                   ffn=ffn_params()) for _ in range(num_layers)]
    return dict(
        query_tokens=jax.random.normal(nxt(), (1, num_query_tokens, H),
                                       dtype=jnp.float32),
        layers=layers,
        fc_w=w((H, H)), fc_b=w((1, H), 0.02),
    )


# ----------------------------------------------------------------------------
if __name__ == "__main__":
    B, S_IMG, H = 2, 16, 32
    NHEAD, NUM_QUERY, NUM_LAYERS = 4, 8, 2

    root = jax.random.PRNGKey(0)
    k_params, k_img = jax.random.split(root)
    params = init_params(k_params, H, NUM_QUERY, NUM_LAYERS, NHEAD)
    image_embeds = jax.random.normal(k_img, (B, S_IMG, H), dtype=jnp.float32)

    # References at both XLA matmul precisions; the f32 Pallas path must match
    # whichever rounding the MXU applies to tight tolerance.
    ref_def = ref_forward(params, image_embeds, NHEAD)
    with jax.default_matmul_precision("highest"):
        ref_hi = ref_forward(params, image_embeds, NHEAD)

    # ---- f32 path: strict functional validation ---------------------------
    prep_f32 = prepare_params(params, jnp.float32)
    out_f32 = jax.block_until_ready(
        qformer_forward(prep_f32, image_embeds, NHEAD, jnp.float32))
    assert out_f32.shape == (B, NUM_QUERY, H), out_f32.shape
    err_f32 = min(float(jnp.max(jnp.abs(out_f32 - ref_hi))),
                  float(jnp.max(jnp.abs(out_f32 - ref_def))))
    if err_f32 > 5e-3:
        raise SystemExit(f"f32 mismatch vs reference, max abs err = {err_f32}")

    # ---- bf16-operand fast path (MXU fast path on v6e/v7x): sanity check ---
    prep_bf16 = prepare_params(params, jnp.bfloat16)
    out_bf16 = jax.block_until_ready(
        qformer_forward(prep_bf16, image_embeds, NHEAD, jnp.bfloat16))
    assert out_bf16.shape == (B, NUM_QUERY, H), out_bf16.shape
    err_bf16 = float(jnp.max(jnp.abs(out_bf16 - ref_hi)))
    if not (err_bf16 < 1.0 and bool(jnp.all(jnp.isfinite(out_bf16)))):
        raise SystemExit(f"bf16 sanity check failed, max abs err = {err_bf16}")

    print("KERNEL_OK")
</pallas_src>

<mosaic_0001>
module attributes {stable_mosaic.version = 11 : i64} {
  func.func @_layer_attn_kernel(%arg0: i32, %arg1: memref<1x8x32xf32, #tpu.memory_space<vmem>>, %arg2: memref<1x16x32xf32, #tpu.memory_space<vmem>>, %arg3: memref<32x32xf32, #tpu.memory_space<vmem>>, %arg4: memref<32x64xf32, #tpu.memory_space<vmem>>, %arg5: memref<1x32xf32, #tpu.memory_space<vmem>>, %arg6: memref<1x64xf32, #tpu.memory_space<vmem>>, %arg7: memref<32x32xf32, #tpu.memory_space<vmem>>, %arg8: memref<1x32xf32, #tpu.memory_space<vmem>>, %arg9: memref<32x32xf32, #tpu.memory_space<vmem>>, %arg10: memref<32x64xf32, #tpu.memory_space<vmem>>, %arg11: memref<1x32xf32, #tpu.memory_space<vmem>>, %arg12: memref<1x64xf32, #tpu.memory_space<vmem>>, %arg13: memref<32x32xf32, #tpu.memory_space<vmem>>, %arg14: memref<1x32xf32, #tpu.memory_space<vmem>>, %arg15: memref<1x8x32xf32, #tpu.memory_space<vmem>>) attributes {dimension_semantics = [#tpu.dimension_semantics<parallel>], iteration_bounds = array<i64: 2>, scalar_prefetch = 0 : i64, scratch_operands = 0 : i64, tpu.core_type = #tpu.core_type<tc>, window_params = [{transform_indices = @transform_0, window_bounds = array<i64: 1, 8, 32>}, {transform_indices = @transform_1, window_bounds = array<i64: 1, 16, 32>}, {pipeline_mode = #tpu.pipeline_mode<synchronous>, transform_indices = @transform_2, window_bounds = array<i64: 32, 32>}, {pipeline_mode = #tpu.pipeline_mode<synchronous>, transform_indices = @transform_3, window_bounds = array<i64: 32, 64>}, {pipeline_mode = #tpu.pipeline_mode<synchronous>, transform_indices = @transform_4, window_bounds = array<i64: 1, 32>}, {pipeline_mode = #tpu.pipeline_mode<synchronous>, transform_indices = @transform_5, window_bounds = array<i64: 1, 64>}, {pipeline_mode = #tpu.pipeline_mode<synchronous>, transform_indices = @transform_6, window_bounds = array<i64: 32, 32>}, {pipeline_mode = #tpu.pipeline_mode<synchronous>, transform_indices = @transform_7, window_bounds = array<i64: 1, 32>}, {pipeline_mode = #tpu.pipeline_mode<synchronous>, transform_indices = @transform_8, window_bounds = array<i64: 32, 32>}, {pipeline_mode = #tpu.pipeline_mode<synchronous>, transform_indices = @transform_9, window_bounds = array<i64: 32, 64>}, {pipeline_mode = #tpu.pipeline_mode<synchronous>, transform_indices = @transform_10, window_bounds = array<i64: 1, 32>}, {pipeline_mode = #tpu.pipeline_mode<synchronous>, transform_indices = @transform_11, window_bounds = array<i64: 1, 64>}, {pipeline_mode = #tpu.pipeline_mode<synchronous>, transform_indices = @transform_12, window_bounds = array<i64: 32, 32>}, {pipeline_mode = #tpu.pipeline_mode<synchronous>, transform_indices = @transform_13, window_bounds = array<i64: 1, 32>}, {transform_indices = @transform_14, window_bounds = array<i64: 1, 8, 32>}]} {
    %c0 = arith.constant 0 : index
    %c0_0 = arith.constant 0 : index
    %c0_1 = arith.constant 0 : index
    %0 = vector.load %arg1[%c0, %c0_0, %c0_1] : memref<1x8x32xf32, #tpu.memory_space<vmem>>, vector<1x8x32xf32>
    %1 = vector.shape_cast %0 : vector<1x8x32xf32> to vector<8x32xf32>
    %c0_2 = arith.constant 0 : index
    %c0_3 = arith.constant 0 : index
    %c0_4 = arith.constant 0 : index
    %2 = vector.load %arg2[%c0_2, %c0_3, %c0_4] : memref<1x16x32xf32, #tpu.memory_space<vmem>>, vector<1x16x32xf32>
    %3 = vector.shape_cast %2 : vector<1x16x32xf32> to vector<16x32xf32>
    %c0_5 = arith.constant 0 : index
    %c0_6 = arith.constant 0 : index
    %4 = vector.load %arg3[%c0_5, %c0_6] : memref<32x32xf32, #tpu.memory_space<vmem>>, vector<32x32xf32>
    %c0_7 = arith.constant 0 : index
    %c0_8 = arith.constant 0 : index
    %5 = vector.load %arg4[%c0_7, %c0_8] : memref<32x64xf32, #tpu.memory_space<vmem>>, vector<32x64xf32>
    %c0_9 = arith.constant 0 : index
    %c0_10 = arith.constant 0 : index
    %6 = vector.load %arg5[%c0_9, %c0_10] : memref<1x32xf32, #tpu.memory_space<vmem>>, vector<1x32xf32>
    %c0_11 = arith.constant 0 : index
    %c0_12 = arith.constant 0 : index
    %7 = vector.load %arg6[%c0_11, %c0_12] : memref<1x64xf32, #tpu.memory_space<vmem>>, vector<1x64xf32>
    %c0_13 = arith.constant 0 : index
    %c0_14 = arith.constant 0 : index
    %8 = vector.load %arg7[%c0_13, %c0_14] : memref<32x32xf32, #tpu.memory_space<vmem>>, vector<32x32xf32>
    %c0_15 = arith.constant 0 : index
    %c0_16 = arith.constant 0 : index
    %9 = vector.load %arg8[%c0_15, %c0_16] : memref<1x32xf32, #tpu.memory_space<vmem>>, vector<1x32xf32>
    %cst = arith.constant dense<0.000000e+00> : vector<8x32xf32>
    %10 = tpu.matmul %1, %4, %cst {dimension_numbers = #tpu.dot_dimension_numbers<[1], [0], [0], [1], [0, 0, 1, 1], [], []>} : vector<8x32xf32>, vector<32x32xf32>, vector<8x32xf32> -> vector<8x32xf32>
    %11 = vector.broadcast %6 : vector<1x32xf32> to vector<8x32xf32>
    %12 = arith.addf %10, %11 : vector<8x32xf32>
    %cst_17 = arith.constant dense<0.000000e+00> : vector<8x64xf32>
    %13 = tpu.matmul %1, %5, %cst_17 {dimension_numbers = #tpu.dot_dimension_numbers<[1], [0], [0], [1], [0, 0, 1, 1], [], []>} : vector<8x32xf32>, vector<32x64xf32>, vector<8x64xf32> -> vector<8x64xf32>
    %14 = vector.broadcast %7 : vector<1x64xf32> to vector<8x64xf32>
    %15 = arith.addf %13, %14 : vector<8x64xf32>
    %16 = vector.extract_strided_slice %15 {offsets = [0, 0], sizes = [8, 32], strides = [1, 1]} : vector<8x64xf32> to vector<8x32xf32>
    %17 = vector.extract_strided_slice %15 {offsets = [0, 32], sizes = [8, 32], strides = [1, 1]} : vector<8x64xf32> to vector<8x32xf32>
    %18 = vector.extract_strided_slice %12 {offsets = [0, 0], sizes = [8, 8], strides = [1, 1]} : vector<8x32xf32> to vector<8x8xf32>
    %19 = vector.extract_strided_slice %16 {offsets = [0, 0], sizes = [8, 8], strides = [1, 1]} : vector<8x32xf32> to vector<8x8xf32>
    %20 = vector.extract_strided_slice %17 {offsets = [0, 0], sizes = [8, 8], strides = [1, 1]} : vector<8x32xf32> to vector<8x8xf32>
    %cst_18 = arith.constant dense<0.000000e+00> : vector<8x8xf32>
    %21 = tpu.matmul %18, %19, %cst_18 {dimension_numbers = #tpu.dot_dimension_numbers<[1], [1], [0], [0], [0, 0, 1, 0], [], []>} : vector<8x8xf32>, vector<8x8xf32>, vector<8x8xf32> -> vector<8x8xf32>
    %cst_19 = arith.constant 0.353553385 : f32
    %22 = vector.broadcast %cst_19 : f32 to vector<8x8xf32>
    %23 = arith.mulf %21, %22 : vector<8x8xf32>
    %cst_20 = arith.constant dense<0xFF800000> : vector<8xf32>
    %24 = vector.multi_reduction <maximumf>, %23, %cst_20 [1] : vector<8x8xf32> to vector<8xf32>
    %25 = vector.shape_cast %24 : vector<8xf32> to vector<8x1xf32>
    %26 = vector.broadcast %25 : vector<8x1xf32> to vector<8x8xf32>
    %27 = arith.subf %23, %26 : vector<8x8xf32>
    %28 = math.exp %27 : vector<8x8xf32>
    %cst_21 = arith.constant dense<0.000000e+00> : vector<8xf32>
    %29 = vector.multi_reduction <add>, %28, %cst_21 [1] : vector<8x8xf32> to vector<8xf32>
    %30 = vector.shape_cast %29 : vector<8xf32> to vector<8x1xf32>
    %31 = vector.broadcast %30 : vector<8x1xf32> to vector<8x8xf32>
    %32 = arith.divf %28, %31 : vector<8x8xf32>
    %cst_22 = arith.constant dense<0.000000e+00> : vector<8x8xf32>
    %33 = tpu.matmul %32, %20, %cst_22 {dimension_numbers = #tpu.dot_dimension_numbers<[1], [0], [0], [1], [0, 0, 1, 1], [], []>} : vector<8x8xf32>, vector<8x8xf32>, vector<8x8xf32> -> vector<8x8xf32>
    %34 = vector.extract_strided_slice %12 {offsets = [0, 8], sizes = [8, 8], strides = [1, 1]} : vector<8x32xf32> to vector<8x8xf32>
    %35 = vector.extract_strided_slice %16 {offsets = [0, 8], sizes = [8, 8], strides = [1, 1]} : vector<8x32xf32> to vector<8x8xf32>
    %36 = vector.extract_strided_slice %17 {offsets = [0, 8], sizes = [8, 8], strides = [1, 1]} : vector<8x32xf32> to vector<8x8xf32>
    %cst_23 = arith.constant dense<0.000000e+00> : vector<8x8xf32>
    %37 = tpu.matmul %34, %35, %cst_23 {dimension_numbers = #tpu.dot_dimension_numbers<[1], [1], [0], [0], [0, 0, 1, 0], [], []>} : vector<8x8xf32>, vector<8x8xf32>, vector<8x8xf32> -> vector<8x8xf32>
    %cst_24 = arith.constant 0.353553385 : f32
    %38 = vector.broadcast %cst_24 : f32 to vector<8x8xf32>
    %39 = arith.mulf %37, %38 : vector<8x8xf32>
    %cst_25 = arith.constant dense<0xFF800000> : vector<8xf32>
    %40 = vector.multi_reduction <maximumf>, %39, %cst_25 [1] : vector<8x8xf32> to vector<8xf32>
    %41 = vector.shape_cast %40 : vector<8xf32> to vector<8x1xf32>
    %42 = vector.broadcast %41 : vector<8x1xf32> to vector<8x8xf32>
    %43 = arith.subf %39, %42 : vector<8x8xf32>
    %44 = math.exp %43 : vector<8x8xf32>
    %cst_26 = arith.constant dense<0.000000e+00> : vector<8xf32>
    %45 = vector.multi_reduction <add>, %44, %cst_26 [1] : vector<8x8xf32> to vector<8xf32>
    %46 = vector.shape_cast %45 : vector<8xf32> to vector<8x1xf32>
    %47 = vector.broadcast %46 : vector<8x1xf32> to vector<8x8xf32>
    %48 = arith.divf %44, %47 : vector<8x8xf32>
    %cst_27 = arith.constant dense<0.000000e+00> : vector<8x8xf32>
    %49 = tpu.matmul %48, %36, %cst_27 {dimension_numbers = #tpu.dot_dimension_numbers<[1], [0], [0], [1], [0, 0, 1, 1], [], []>} : vector<8x8xf32>, vector<8x8xf32>, vector<8x8xf32> -> vector<8x8xf32>
    %50 = vector.extract_strided_slice %12 {offsets = [0, 16], sizes = [8, 8], strides = [1, 1]} : vector<8x32xf32> to vector<8x8xf32>
    %51 = vector.extract_strided_slice %16 {offsets = [0, 16], sizes = [8, 8], strides = [1, 1]} : vector<8x32xf32> to vector<8x8xf32>
    %52 = vector.extract_strided_slice %17 {offsets = [0, 16], sizes = [8, 8], strides = [1, 1]} : vector<8x32xf32> to vector<8x8xf32>
    %cst_28 = arith.constant dense<0.000000e+00> : vector<8x8xf32>
    %53 = tpu.matmul %50, %51, %cst_28 {dimension_numbers = #tpu.dot_dimension_numbers<[1], [1], [0], [0], [0, 0, 1, 0], [], []>} : vector<8x8xf32>, vector<8x8xf32>, vector<8x8xf32> -> vector<8x8xf32>
    %cst_29 = arith.constant 0.353553385 : f32
    %54 = vector.broadcast %cst_29 : f32 to vector<8x8xf32>
    %55 = arith.mulf %53, %54 : vector<8x8xf32>
    %cst_30 = arith.constant dense<0xFF800000> : vector<8xf32>
    %56 = vector.multi_reduction <maximumf>, %55, %cst_30 [1] : vector<8x8xf32> to vector<8xf32>
    %57 = vector.shape_cast %56 : vector<8xf32> to vector<8x1xf32>
    %58 = vector.broadcast %57 : vector<8x1xf32> to vector<8x8xf32>
    %59 = arith.subf %55, %58 : vector<8x8xf32>
    %60 = math.exp %59 : vector<8x8xf32>
    %cst_31 = arith.constant dense<0.000000e+00> : vector<8xf32>
    %61 = vector.multi_reduction <add>, %60, %cst_31 [1] : vector<8x8xf32> to vector<8xf32>
    %62 = vector.shape_cast %61 : vector<8xf32> to vector<8x1xf32>
    %63 = vector.broadcast %62 : vector<8x1xf32> to vector<8x8xf32>
    %64 = arith.divf %60, %63 : vector<8x8xf32>
    %cst_32 = arith.constant dense<0.000000e+00> : vector<8x8xf32>
    %65 = tpu.matmul %64, %52, %cst_32 {dimension_numbers = #tpu.dot_dimension_numbers<[1], [0], [0], [1], [0, 0, 1, 1], [], []>} : vector<8x8xf32>, vector<8x8xf32>, vector<8x8xf32> -> vector<8x8xf32>
    %66 = vector.extract_strided_slice %12 {offsets = [0, 24], sizes = [8, 8], strides = [1, 1]} : vector<8x32xf32> to vector<8x8xf32>
    %67 = vector.extract_strided_slice %16 {offsets = [0, 24], sizes = [8, 8], strides = [1, 1]} : vector<8x32xf32> to vector<8x8xf32>
    %68 = vector.extract_strided_slice %17 {offsets = [0, 24], sizes = [8, 8], strides = [1, 1]} : vector<8x32xf32> to vector<8x8xf32>
    %cst_33 = arith.constant dense<0.000000e+00> : vector<8x8xf32>
    %69 = tpu.matmul %66, %67, %cst_33 {dimension_numbers = #tpu.dot_dimension_numbers<[1], [1], [0], [0], [0, 0, 1, 0], [], []>} : vector<8x8xf32>, vector<8x8xf32>, vector<8x8xf32> -> vector<8x8xf32>
    %cst_34 = arith.constant 0.353553385 : f32
    %70 = vector.broadcast %cst_34 : f32 to vector<8x8xf32>
    %71 = arith.mulf %69, %70 : vector<8x8xf32>
    %cst_35 = arith.constant dense<0xFF800000> : vector<8xf32>
    %72 = vector.multi_reduction <maximumf>, %71, %cst_35 [1] : vector<8x8xf32> to vector<8xf32>
    %73 = vector.shape_cast %72 : vector<8xf32> to vector<8x1xf32>
    %74 = vector.broadcast %73 : vector<8x1xf32> to vector<8x8xf32>
    %75 = arith.subf %71, %74 : vector<8x8xf32>
    %76 = math.exp %75 : vector<8x8xf32>
    %cst_36 = arith.constant dense<0.000000e+00> : vector<8xf32>
    %77 = vector.multi_reduction <add>, %76, %cst_36 [1] : vector<8x8xf32> to vector<8xf32>
    %78 = vector.shape_cast %77 : vector<8xf32> to vector<8x1xf32>
    %79 = vector.broadcast %78 : vector<8x1xf32> to vector<8x8xf32>
    %80 = arith.divf %76, %79 : vector<8x8xf32>
    %cst_37 = arith.constant dense<0.000000e+00> : vector<8x8xf32>
    %81 = tpu.matmul %80, %68, %cst_37 {dimension_numbers = #tpu.dot_dimension_numbers<[1], [0], [0], [1], [0, 0, 1, 1], [], []>} : vector<8x8xf32>, vector<8x8xf32>, vector<8x8xf32> -> vector<8x8xf32>
    %82 = tpu.concatenate %33, %49, %65, %81 in 1 : vector<8x8xf32>, vector<8x8xf32>, vector<8x8xf32>, vector<8x8xf32> -> vector<8x32xf32>
    %cst_38 = arith.constant dense<0.000000e+00> : vector<8x32xf32>
    %83 = tpu.matmul %82, %8, %cst_38 {dimension_numbers = #tpu.dot_dimension_numbers<[1], [0], [0], [1], [0, 0, 1, 1], [], []>} : vector<8x32xf32>, vector<32x32xf32>, vector<8x32xf32> -> vector<8x32xf32>
    %84 = vector.broadcast %9 : vector<1x32xf32> to vector<8x32xf32>
    %85 = arith.addf %83, %84 : vector<8x32xf32>
    %c0_39 = arith.constant 0 : index
    %c0_40 = arith.constant 0 : index
    %86 = vector.load %arg9[%c0_39, %c0_40] : memref<32x32xf32, #tpu.memory_space<vmem>>, vector<32x32xf32>
    %c0_41 = arith.constant 0 : index
    %c0_42 = arith.constant 0 : index
    %87 = vector.load %arg10[%c0_41, %c0_42] : memref<32x64xf32, #tpu.memory_space<vmem>>, vector<32x64xf32>
    %c0_43 = arith.constant 0 : index
    %c0_44 = arith.constant 0 : index
    %88 = vector.load %arg11[%c0_43, %c0_44] : memref<1x32xf32, #tpu.memory_space<vmem>>, vector<1x32xf32>
    %c0_45 = arith.constant 0 : index
    %c0_46 = arith.constant 0 : index
    %89 = vector.load %arg12[%c0_45, %c0_46] : memref<1x64xf32, #tpu.memory_space<vmem>>, vector<1x64xf32>
    %c0_47 = arith.constant 0 : index
    %c0_48 = arith.constant 0 : index
    %90 = vector.load %arg13[%c0_47, %c0_48] : memref<32x32xf32, #tpu.memory_space<vmem>>, vector<32x32xf32>
    %c0_49 = arith.constant 0 : index
    %c0_50 = arith.constant 0 : index
    %91 = vector.load %arg14[%c0_49, %c0_50] : memref<1x32xf32, #tpu.memory_space<vmem>>, vector<1x32xf32>
    %cst_51 = arith.constant dense<0.000000e+00> : vector<8x32xf32>
    %92 = tpu.matmul %85, %86, %cst_51 {dimension_numbers = #tpu.dot_dimension_numbers<[1], [0], [0], [1], [0, 0, 1, 1], [], []>} : vector<8x32xf32>, vector<32x32xf32>, vector<8x32xf32> -> vector<8x32xf32>
    %93 = vector.broadcast %88 : vector<1x32xf32> to vector<8x32xf32>
    %94 = arith.addf %92, %93 : vector<8x32xf32>
    %cst_52 = arith.constant dense<0.000000e+00> : vector<16x64xf32>
    %95 = tpu.matmul %3, %87, %cst_52 {dimension_numbers = #tpu.dot_dimension_numbers<[1], [0], [0], [1], [0, 0, 1, 1], [], []>} : vector<16x32xf32>, vector<32x64xf32>, vector<16x64xf32> -> vector<16x64xf32>
    %96 = vector.broadcast %89 : vector<1x64xf32> to vector<16x64xf32>
    %97 = arith.addf %95, %96 : vector<16x64xf32>
    %98 = vector.extract_strided_slice %97 {offsets = [0, 0], sizes = [16, 32], strides = [1, 1]} : vector<16x64xf32> to vector<16x32xf32>
    %99 = vector.extract_strided_slice %97 {offsets = [0, 32], sizes = [16, 32], strides = [1, 1]} : vector<16x64xf32> to vector<16x32xf32>
    %100 = vector.extract_strided_slice %94 {offsets = [0, 0], sizes = [8, 8], strides = [1, 1]} : vector<8x32xf32> to vector<8x8xf32>
    %101 = vector.extract_strided_slice %98 {offsets = [0, 0], sizes = [16, 8], strides = [1, 1]} : vector<16x32xf32> to vector<16x8xf32>
    %102 = vector.extract_strided_slice %99 {offsets = [0, 0], sizes = [16, 8], strides = [1, 1]} : vector<16x32xf32> to vector<16x8xf32>
    %cst_53 = arith.constant dense<0.000000e+00> : vector<8x16xf32>
    %103 = tpu.matmul %100, %101, %cst_53 {dimension_numbers = #tpu.dot_dimension_numbers<[1], [1], [0], [0], [0, 0, 1, 0], [], []>} : vector<8x8xf32>, vector<16x8xf32>, vector<8x16xf32> -> vector<8x16xf32>
    %cst_54 = arith.constant 0.353553385 : f32
    %104 = vector.broadcast %cst_54 : f32 to vector<8x16xf32>
    %105 = arith.mulf %103, %104 : vector<8x16xf32>
    %cst_55 = arith.constant dense<0xFF800000> : vector<8xf32>
    %106 = vector.multi_reduction <maximumf>, %105, %cst_55 [1] : vector<8x16xf32> to vector<8xf32>
    %107 = vector.shape_cast %106 : vector<8xf32> to vector<8x1xf32>
    %108 = vector.broadcast %107 : vector<8x1xf32> to vector<8x16xf32>
    %109 = arith.subf %105, %108 : vector<8x16xf32>
    %110 = math.exp %109 : vector<8x16xf32>
    %cst_56 = arith.constant dense<0.000000e+00> : vector<8xf32>
    %111 = vector.multi_reduction <add>, %110, %cst_56 [1] : vector<8x16xf32> to vector<8xf32>
    %112 = vector.shape_cast %111 : vector<8xf32> to vector<8x1xf32>
    %113 = vector.broadcast %112 : vector<8x1xf32> to vector<8x16xf32>
    %114 = arith.divf %110, %113 : vector<8x16xf32>
    %cst_57 = arith.constant dense<0.000000e+00> : vector<8x8xf32>
    %115 = tpu.matmul %114, %102, %cst_57 {dimension_numbers = #tpu.dot_dimension_numbers<[1], [0], [0], [1], [0, 0, 1, 1], [], []>} : vector<8x16xf32>, vector<16x8xf32>, vector<8x8xf32> -> vector<8x8xf32>
    %116 = vector.extract_strided_slice %94 {offsets = [0, 8], sizes = [8, 8], strides = [1, 1]} : vector<8x32xf32> to vector<8x8xf32>
    %117 = vector.extract_strided_slice %98 {offsets = [0, 8], sizes = [16, 8], strides = [1, 1]} : vector<16x32xf32> to vector<16x8xf32>
    %118 = vector.extract_strided_slice %99 {offsets = [0, 8], sizes = [16, 8], strides = [1, 1]} : vector<16x32xf32> to vector<16x8xf32>
    %cst_58 = arith.constant dense<0.000000e+00> : vector<8x16xf32>
    %119 = tpu.matmul %116, %117, %cst_58 {dimension_numbers = #tpu.dot_dimension_numbers<[1], [1], [0], [0], [0, 0, 1, 0], [], []>} : vector<8x8xf32>, vector<16x8xf32>, vector<8x16xf32> -> vector<8x16xf32>
    %cst_59 = arith.constant 0.353553385 : f32
    %120 = vector.broadcast %cst_59 : f32 to vector<8x16xf32>
    %121 = arith.mulf %119, %120 : vector<8x16xf32>
    %cst_60 = arith.constant dense<0xFF800000> : vector<8xf32>
    %122 = vector.multi_reduction <maximumf>, %121, %cst_60 [1] : vector<8x16xf32> to vector<8xf32>
    %123 = vector.shape_cast %122 : vector<8xf32> to vector<8x1xf32>
    %124 = vector.broadcast %123 : vector<8x1xf32> to vector<8x16xf32>
    %125 = arith.subf %121, %124 : vector<8x16xf32>
    %126 = math.exp %125 : vector<8x16xf32>
    %cst_61 = arith.constant dense<0.000000e+00> : vector<8xf32>
    %127 = vector.multi_reduction <add>, %126, %cst_61 [1] : vector<8x16xf32> to vector<8xf32>
    %128 = vector.shape_cast %127 : vector<8xf32> to vector<8x1xf32>
    %129 = vector.broadcast %128 : vector<8x1xf32> to vector<8x16xf32>
    %130 = arith.divf %126, %129 : vector<8x16xf32>
    %cst_62 = arith.constant dense<0.000000e+00> : vector<8x8xf32>
    %131 = tpu.matmul %130, %118, %cst_62 {dimension_numbers = #tpu.dot_dimension_numbers<[1], [0], [0], [1], [0, 0, 1, 1], [], []>} : vector<8x16xf32>, vector<16x8xf32>, vector<8x8xf32> -> vector<8x8xf32>
    %132 = vector.extract_strided_slice %94 {offsets = [0, 16], sizes = [8, 8], strides = [1, 1]} : vector<8x32xf32> to vector<8x8xf32>
    %133 = vector.extract_strided_slice %98 {offsets = [0, 16], sizes = [16, 8], strides = [1, 1]} : vector<16x32xf32> to vector<16x8xf32>
    %134 = vector.extract_strided_slice %99 {offsets = [0, 16], sizes = [16, 8], strides = [1, 1]} : vector<16x32xf32> to vector<16x8xf32>
    %cst_63 = arith.constant dense<0.000000e+00> : vector<8x16xf32>
    %135 = tpu.matmul %132, %133, %cst_63 {dimension_numbers = #tpu.dot_dimension_numbers<[1], [1], [0], [0], [0, 0, 1, 0], [], []>} : vector<8x8xf32>, vector<16x8xf32>, vector<8x16xf32> -> vector<8x16xf32>
    %cst_64 = arith.constant 0.353553385 : f32
    %136 = vector.broadcast %cst_64 : f32 to vector<8x16xf32>
    %137 = arith.mulf %135, %136 : vector<8x16xf32>
    %cst_65 = arith.constant dense<0xFF800000> : vector<8xf32>
    %138 = vector.multi_reduction <maximumf>, %137, %cst_65 [1] : vector<8x16xf32> to vector<8xf32>
    %139 = vector.shape_cast %138 : vector<8xf32> to vector<8x1xf32>
    %140 = vector.broadcast %139 : vector<8x1xf32> to vector<8x16xf32>
    %141 = arith.subf %137, %140 : vector<8x16xf32>
    %142 = math.exp %141 : vector<8x16xf32>
    %cst_66 = arith.constant dense<0.000000e+00> : vector<8xf32>
    %143 = vector.multi_reduction <add>, %142, %cst_66 [1] : vector<8x16xf32> to vector<8xf32>
    %144 = vector.shape_cast %143 : vector<8xf32> to vector<8x1xf32>
    %145 = vector.broadcast %144 : vector<8x1xf32> to vector<8x16xf32>
    %146 = arith.divf %142, %145 : vector<8x16xf32>
    %cst_67 = arith.constant dense<0.000000e+00> : vector<8x8xf32>
    %147 = tpu.matmul %146, %134, %cst_67 {dimension_numbers = #tpu.dot_dimension_numbers<[1], [0], [0], [1], [0, 0, 1, 1], [], []>} : vector<8x16xf32>, vector<16x8xf32>, vector<8x8xf32> -> vector<8x8xf32>
    %148 = vector.extract_strided_slice %94 {offsets = [0, 24], sizes = [8, 8], strides = [1, 1]} : vector<8x32xf32> to vector<8x8xf32>
    %149 = vector.extract_strided_slice %98 {offsets = [0, 24], sizes = [16, 8], strides = [1, 1]} : vector<16x32xf32> to vector<16x8xf32>
    %150 = vector.extract_strided_slice %99 {offsets = [0, 24], sizes = [16, 8], strides = [1, 1]} : vector<16x32xf32> to vector<16x8xf32>
    %cst_68 = arith.constant dense<0.000000e+00> : vector<8x16xf32>
    %151 = tpu.matmul %148, %149, %cst_68 {dimension_numbers = #tpu.dot_dimension_numbers<[1], [1], [0], [0], [0, 0, 1, 0], [], []>} : vector<8x8xf32>, vector<16x8xf32>, vector<8x16xf32> -> vector<8x16xf32>
    %cst_69 = arith.constant 0.353553385 : f32
    %152 = vector.broadcast %cst_69 : f32 to vector<8x16xf32>
    %153 = arith.mulf %151, %152 : vector<8x16xf32>
    %cst_70 = arith.constant dense<0xFF800000> : vector<8xf32>
    %154 = vector.multi_reduction <maximumf>, %153, %cst_70 [1] : vector<8x16xf32> to vector<8xf32>
    %155 = vector.shape_cast %154 : vector<8xf32> to vector<8x1xf32>
    %156 = vector.broadcast %155 : vector<8x1xf32> to vector<8x16xf32>
    %157 = arith.subf %153, %156 : vector<8x16xf32>
    %158 = math.exp %157 : vector<8x16xf32>
    %cst_71 = arith.constant dense<0.000000e+00> : vector<8xf32>
    %159 = vector.multi_reduction <add>, %158, %cst_71 [1] : vector<8x16xf32> to vector<8xf32>
    %160 = vector.shape_cast %159 : vector<8xf32> to vector<8x1xf32>
    %161 = vector.broadcast %160 : vector<8x1xf32> to vector<8x16xf32>
    %162 = arith.divf %158, %161 : vector<8x16xf32>
    %cst_72 = arith.constant dense<0.000000e+00> : vector<8x8xf32>
    %163 = tpu.matmul %162, %150, %cst_72 {dimension_numbers = #tpu.dot_dimension_numbers<[1], [0], [0], [1], [0, 0, 1, 1], [], []>} : vector<8x16xf32>, vector<16x8xf32>, vector<8x8xf32> -> vector<8x8xf32>
    %164 = tpu.concatenate %115, %131, %147, %163 in 1 : vector<8x8xf32>, vector<8x8xf32>, vector<8x8xf32>, vector<8x8xf32> -> vector<8x32xf32>
    %cst_73 = arith.constant dense<0.000000e+00> : vector<8x32xf32>
    %165 = tpu.matmul %164, %90, %cst_73 {dimension_numbers = #tpu.dot_dimension_numbers<[1], [0], [0], [1], [0, 0, 1, 1], [], []>} : vector<8x32xf32>, vector<32x32xf32>, vector<8x32xf32> -> vector<8x32xf32>
    %166 = vector.broadcast %91 : vector<1x32xf32> to vector<8x32xf32>
    %167 = arith.addf %165, %166 : vector<8x32xf32>
    %c0_74 = arith.constant 0 : index
    %c0_75 = arith.constant 0 : index
    %c0_76 = arith.constant 0 : index
    %168 = vector.load %arg15[%c0_74, %c0_75, %c0_76] : memref<1x8x32xf32, #tpu.memory_space<vmem>>, vector<1x8x32xf32>
    %169 = vector.shape_cast %168 : vector<1x8x32xf32> to vector<8x32xf32>
    %170 = vector.shape_cast %167 : vector<8x32xf32> to vector<1x8x32xf32>
    tpu.vector_store %arg15[%c0_74, %c0_75, %c0_76], %170 {strides = array<i32>} : memref<1x8x32xf32, #tpu.memory_space<vmem>>, vector<1x8x32xf32>,
    return
  }
  func.func @transform_0(%arg0: i32) -> (i32, i32, i32) {
    %c0_i32 = arith.constant 0 : i32
    %c0_i32_0 = arith.constant 0 : i32
    %c0_i32_1 = arith.constant 0 : i32
    return %arg0, %c0_i32, %c0_i32_0 : i32, i32, i32
  }
  func.func @transform_1(%arg0: i32) -> (i32, i32, i32) {
    %c0_i32 = arith.constant 0 : i32
    %c0_i32_0 = arith.constant 0 : i32
    %c0_i32_1 = arith.constant 0 : i32
    return %arg0, %c0_i32, %c0_i32_0 : i32, i32, i32
  }
  func.func @transform_2(%arg0: i32) -> (i32, i32) {
    %c0_i32 = arith.constant 0 : i32
    %c0_i32_0 = arith.constant 0 : i32
    %c0_i32_1 = arith.constant 0 : i32
    return %c0_i32, %c0_i32_0 : i32, i32
  }
  func.func @transform_3(%arg0: i32) -> (i32, i32) {
    %c0_i32 = arith.constant 0 : i32
    %c0_i32_0 = arith.constant 0 : i32
    %c0_i32_1 = arith.constant 0 : i32
    return %c0_i32, %c0_i32_0 : i32, i32
  }
  func.func @transform_4(%arg0: i32) -> (i32, i32) {
    %c0_i32 = arith.constant 0 : i32
    %c0_i32_0 = arith.constant 0 : i32
    %c0_i32_1 = arith.constant 0 : i32
    return %c0_i32, %c0_i32_0 : i32, i32
  }
  func.func @transform_5(%arg0: i32) -> (i32, i32) {
    %c0_i32 = arith.constant 0 : i32
    %c0_i32_0 = arith.constant 0 : i32
    %c0_i32_1 = arith.constant 0 : i32
    return %c0_i32, %c0_i32_0 : i32, i32
  }
  func.func @transform_6(%arg0: i32) -> (i32, i32) {
    %c0_i32 = arith.constant 0 : i32
    %c0_i32_0 = arith.constant 0 : i32
    %c0_i32_1 = arith.constant 0 : i32
    return %c0_i32, %c0_i32_0 : i32, i32
  }
  func.func @transform_7(%arg0: i32) -> (i32, i32) {
    %c0_i32 = arith.constant 0 : i32
    %c0_i32_0 = arith.constant 0 : i32
    %c0_i32_1 = arith.constant 0 : i32
    return %c0_i32, %c0_i32_0 : i32, i32
  }
  func.func @transform_8(%arg0: i32) -> (i32, i32) {
    %c0_i32 = arith.constant 0 : i32
    %c0_i32_0 = arith.constant 0 : i32
    %c0_i32_1 = arith.constant 0 : i32
    return %c0_i32, %c0_i32_0 : i32, i32
  }
  func.func @transform_9(%arg0: i32) -> (i32, i32) {
    %c0_i32 = arith.constant 0 : i32
    %c0_i32_0 = arith.constant 0 : i32
    %c0_i32_1 = arith.constant 0 : i32
    return %c0_i32, %c0_i32_0 : i32, i32
  }
  func.func @transform_10(%arg0: i32) -> (i32, i32) {
    %c0_i32 = arith.constant 0 : i32
    %c0_i32_0 = arith.constant 0 : i32
    %c0_i32_1 = arith.constant 0 : i32
    return %c0_i32, %c0_i32_0 : i32, i32
  }
  func.func @transform_11(%arg0: i32) -> (i32, i32) {
    %c0_i32 = arith.constant 0 : i32
    %c0_i32_0 = arith.constant 0 : i32
    %c0_i32_1 = arith.constant 0 : i32
    return %c0_i32, %c0_i32_0 : i32, i32
  }
  func.func @transform_12(%arg0: i32) -> (i32, i32) {
    %c0_i32 = arith.constant 0 : i32
    %c0_i32_0 = arith.constant 0 : i32
    %c0_i32_1 = arith.constant 0 : i32
    return %c0_i32, %c0_i32_0 : i32, i32
  }
  func.func @transform_13(%arg0: i32) -> (i32, i32) {
    %c0_i32 = arith.constant 0 : i32
    %c0_i32_0 = arith.constant 0 : i32
    %c0_i32_1 = arith.constant 0 : i32
    return %c0_i32, %c0_i32_0 : i32, i32
  }
  func.func @transform_14(%arg0: i32) -> (i32, i32, i32) {
    %c0_i32 = arith.constant 0 : i32
    %c0_i32_0 = arith.constant 0 : i32
    %c0_i32_1 = arith.constant 0 : i32
    return %arg0, %c0_i32, %c0_i32_0 : i32, i32, i32
  }
}

</mosaic_0001>

<llo_original>
// kernel: tpu_custom_call.1
$region0: #{tpu_custom_call.1}
  #allocation0 [shape = 'u32[]', space=smem, size = 0x4, offset = 0x4, fixed_abs, tag = 'smem constant byte address 0x4 - core index']
  #allocation1 [shape = 'u32[144,128]{1,0:T(1,128)}', space=vmem, size = 0x12000, scoped, tag = 'internal scratch']
  %s0 = inlined_call_operand.hbm [shape: f32[2,8,32], index: 0, kind: input, shape index: {}]
  %s1 = inlined_call_operand.hbm [shape: f32[2,16,32], index: 1, kind: input, shape index: {}]
  %s2 = inlined_call_operand.hbm [shape: f32[32,32], index: 2, kind: input, shape index: {}]
  %s3 = inlined_call_operand.hbm [shape: f32[32,64], index: 3, kind: input, shape index: {}]
  %s4 = inlined_call_operand.vmem [shape: f32[1,32], index: 4, kind: input, shape index: {}]
  %s5 = inlined_call_operand.vmem [shape: f32[1,64], index: 5, kind: input, shape index: {}]
  %s6 = inlined_call_operand.hbm [shape: f32[32,32], index: 6, kind: input, shape index: {}]
  %s7 = inlined_call_operand.hbm [shape: f32[1,32], index: 7, kind: input, shape index: {}]
  %s8 = inlined_call_operand.hbm [shape: f32[32,32], index: 8, kind: input, shape index: {}]
  %s9 = inlined_call_operand.vmem [shape: f32[32,64], index: 9, kind: input, shape index: {}]
  %s10 = inlined_call_operand.vmem [shape: f32[1,32], index: 10, kind: input, shape index: {}]
  %s11 = inlined_call_operand.vmem [shape: f32[1,64], index: 11, kind: input, shape index: {}]
  %s12 = inlined_call_operand.hbm [shape: f32[32,32], index: 12, kind: input, shape index: {}]
  %s13 = inlined_call_operand.vmem [shape: f32[1,32], index: 13, kind: input, shape index: {}]
  %s14 = inlined_call_operand.hbm [shape: f32[2,8,32], index: 14, kind: output, shape index: {}]
  %s15 = sld [smem:[#allocation0]]
  $region121: #{tpu_custom_call.1} parent=0
    _
  %s17 = ssub.s32 1, %s15
  %s18 = scalar_select 0, %s17, %s15
  $region1: #{tpu_custom_call.1} parent=0
    #allocation2 [shape = 'u8[8192]{0}', space=vmem, size = 0x2000, scoped, tag = 'input window, operand 0']
    #allocation3 [shape = 's32[2]{0}', space=sflag, size = 0x8, scoped, tag = 'scoped memory for tpu_custom_call.1']
    #allocation4 [shape = 's32[2]{0}', space=sflag, size = 0x8, scoped, tag = 'scoped memory for tpu_custom_call.1']
    #allocation5 [shape = 'u8[16384]{0}', space=vmem, size = 0x4000, scoped, tag = 'input window, operand 1']
    #allocation6 [shape = 's32[2]{0}', space=sflag, size = 0x8, scoped, tag = 'scoped memory for tpu_custom_call.1']
    #allocation7 [shape = 'u8[16384]{0}', space=vmem, size = 0x4000, scoped, tag = 'input window, operand 2, single buffered']
    #allocation8 [shape = 'u8[16384]{0}', space=vmem, size = 0x4000, scoped, tag = 'input window, operand 3, single buffered']
    #allocation9 [shape = 's32[1]{0}', space=sflag, size = 0x4, scoped, tag = 'scoped memory for tpu_custom_call.1']
    #allocation10 [shape = 'u8[16384]{0}', space=vmem, size = 0x4000, scoped, tag = 'input window, operand 6, single buffered']
    #allocation11 [shape = 'u8[512]{0}', space=vmem, size = 0x400, scoped, tag = 'input window, operand 7, single buffered']
    #allocation12 [shape = 's32[1]{0}', space=sflag, size = 0x4, scoped, tag = 'scoped memory for tpu_custom_call.1']
    #allocation13 [shape = 'u8[16384]{0}', space=vmem, size = 0x4000, scoped, tag = 'input window, operand 8, single buffered']
    #allocation14 [shape = 'u8[16384]{0}', space=vmem, size = 0x4000, scoped, tag = 'input window, operand 12, single buffered']
    #allocation15 [shape = 's32[1]{0}', space=sflag, size = 0x4, scoped, tag = 'scoped memory for tpu_custom_call.1']
    #allocation16 [shape = 'u8[8192]{0}', space=vmem, size = 0x2000, scoped, tag = 'output window, operand 0']
    %19 = vsyncpa [#allocation3], 0
    %s20 = scalar_lea.sflag [#allocation3], 1
    %21 = vsyncpa %s20, 0
    %22 = vsyncpa [#allocation6], 0
    %s23 = scalar_lea.sflag [#allocation6], 1
    %24 = vsyncpa %s23, 0
    %25 = vsyncpa [#allocation9], 0
    %26 = vsyncpa [#allocation12], 0
    %27 = vsyncpa [#allocation15], 0
    %28 = vsyncpa [#allocation4], 0
    %s29 = scalar_lea.sflag [#allocation4], 1
    %30 = vsyncpa %s29, 0
    loop: start=0, step=1, limit=4
    $region2: #{tpu_custom_call.1} parent=1 // loop_pre_header
      _
    $region3: #{tpu_custom_call.1} parent=1 // loop_header
      %s32 = sphi 0, %s36
      %p33 = scmp.ge.s32.totalorder %s32, 4
      %s42 = sphi 0, %s44
      %s45 = sphi 0, %s42
      %s46 = sphi 0, %s45
      %s62 = sphi 0, %s46
      %s68 = sphi 0, %s70
      %s71 = sphi 0, %s68
      %s72 = sphi 0, %s71
      %s88 = sphi 0, %s72
      %s92 = sphi 0, %s92
      %s94 = sphi 0, %s92
      %s95 = sphi 0, %s94
      %s109 = sphi 0, %s95
      %s113 = sphi 0, %s113
      %s115 = sphi 0, %s113
      %s116 = sphi 0, %s115
      %s130 = sphi 0, %s116
      %s134 = sphi 0, %s134
      %s136 = sphi 0, %s134
      %s137 = sphi 0, %s136
      %s151 = sphi 0, %s137
      %s155 = sphi 0, %s155
      %s157 = sphi 0, %s155
      %s158 = sphi 0, %s157
      %s172 = sphi 0, %s158
      %s176 = sphi 0, %s176
      %s178 = sphi 0, %s176
      %s179 = sphi 0, %s178
      %s193 = sphi 0, %s179
      %s197 = sphi 0, %s197
      %s199 = sphi 0, %s197
      %s200 = sphi 0, %s199
      %s214 = sphi 0, %s200
      %s218 = sphi 0, %s218
      %s220 = sphi 0, %s218
      %s221 = sphi 0, %s220
      %s235 = sphi 0, %s221
      %s239 = sphi 0, %s239
      %s241 = sphi 0, %s239
      %s242 = sphi 0, %s241
      %s256 = sphi 0, %s242
      %s260 = sphi 0, %s260
      %s262 = sphi 0, %s260
      %s263 = sphi 0, %s262
      %s277 = sphi 0, %s263
      %s281 = sphi 0, %s281
      %s283 = sphi 0, %s281
      %s284 = sphi 0, %s283
      %s298 = sphi 0, %s284
      %s302 = sphi 0, %s302
      %s304 = sphi 0, %s302
      %s305 = sphi 0, %s304
      %s319 = sphi 0, %s305
      %s323 = sphi 0, %s323
      %s325 = sphi 0, %s323
      %s326 = sphi 0, %s325
      %s340 = sphi 0, %s326
      %s346 = sphi 0, %s348
      %s349 = sphi 0, %s346
      %s350 = sphi 0, %s349
      %s366 = sphi 0, %s350
    $region4: #{tpu_custom_call.1} parent=1 // loop_header_branch
      %35 = sbr.rel (%p33) target = $region8
    $region5: #{tpu_custom_call.1} parent=1 // loop_body
      %s37 = ssub.s32 %s32, 1
      %s38 = ssub.s32 %s32, 2
      %s39 = sadd.s32 %s32, 1
      %s40 = ssub.s32 %s32, %s39
      %p41 = scmp.eq.s32.totalorder %s40, 0
      %s43 = sadd.s32 %s42, 1
      %s44 = scalar_select %p41, %s42, %s43
      %p47 = pneg %p41
      %p48 = scmp.eq.s32.totalorder %s32, 1
      %p49 = por %p47, %p48
      %p50 = scmp.ne.s32.totalorder %s42, %s45
      %p51 = scmp.eq.s32.totalorder %s32, 0
      %p52 = por %p50, %p51
      %p53 = scmp.ne.s32.totalorder %s42, %s45
      %p54 = scmp.eq.s32.totalorder %s37, 1
      %p55 = por %p53, %p54
      %p56 = scmp.ne.s32.totalorder %s45, %s46
      %p57 = scmp.eq.s32.totalorder %s37, 0
      %p58 = por %p56, %p57
      %p59 = scmp.ne.s32.totalorder %s45, %s46
      %p60 = scmp.eq.s32.totalorder %s38, 1
      %p61 = por %p59, %p60
      %p63 = scmp.ne.s32.totalorder %s46, %s62
      %p64 = scmp.eq.s32.totalorder %s38, 0
      %p65 = por %p63, %p64
      %s66 = ssub.s32 %s32, %s39
      %p67 = scmp.eq.s32.totalorder %s66, 0
      %s69 = sadd.s32 %s68, 1
      %s70 = scalar_select %p67, %s68, %s69
      %p73 = pneg %p67
      %p74 = scmp.eq.s32.totalorder %s32, 1
      %p75 = por %p73, %p74
      %p76 = scmp.ne.s32.totalorder %s68, %s71
      %p77 = scmp.eq.s32.totalorder %s32, 0
      %p78 = por %p76, %p77
      %p79 = scmp.ne.s32.totalorder %s68, %s71
      %p80 = scmp.eq.s32.totalorder %s37, 1
      %p81 = por %p79, %p80
      %p82 = scmp.ne.s32.totalorder %s71, %s72
      %p83 = scmp.eq.s32.totalorder %s37, 0
      %p84 = por %p82, %p83
      %p85 = scmp.ne.s32.totalorder %s71, %s72
      %p86 = scmp.eq.s32.totalorder %s38, 1
      %p87 = por %p85, %p86
      %p89 = scmp.ne.s32.totalorder %s72, %s88
      %p90 = scmp.eq.s32.totalorder %s38, 0
      %p91 = por %p89, %p90
      %s93 = sadd.s32 %s92, 1
      %p96 = scmp.eq.s32.totalorder %s32, 1
      %p97 = scmp.ne.s32.totalorder %s92, %s94
      %p98 = scmp.eq.s32.totalorder %s32, 0
      %p99 = por %p97, %p98
      %p100 = scmp.ne.s32.totalorder %s92, %s94
      %p101 = scmp.eq.s32.totalorder %s37, 1
      %p102 = por %p100, %p101
      %p103 = scmp.ne.s32.totalorder %s94, %s95
      %p104 = scmp.eq.s32.totalorder %s37, 0
      %p105 = por %p103, %p104
      %p106 = scmp.ne.s32.totalorder %s94, %s95
      %p107 = scmp.eq.s32.totalorder %s38, 1
      %p108 = por %p106, %p107
      %p110 = scmp.ne.s32.totalorder %s95, %s109
      %p111 = scmp.eq.s32.totalorder %s38, 0
      %p112 = por %p110, %p111
      %s114 = sadd.s32 %s113, 1
      %p117 = scmp.eq.s32.totalorder %s32, 1
      %p118 = scmp.ne.s32.totalorder %s113, %s115
      %p119 = scmp.eq.s32.totalorder %s32, 0
      %p120 = por %p118, %p119
      %p121 = scmp.ne.s32.totalorder %s113, %s115
      %p122 = scmp.eq.s32.totalorder %s37, 1
      %p123 = por %p121, %p122
      %p124 = scmp.ne.s32.totalorder %s115, %s116
      %p125 = scmp.eq.s32.totalorder %s37, 0
      %p126 = por %p124, %p125
      %p127 = scmp.ne.s32.totalorder %s115, %s116
      %p128 = scmp.eq.s32.totalorder %s38, 1
      %p129 = por %p127, %p128
      %p131 = scmp.ne.s32.totalorder %s116, %s130
      %p132 = scmp.eq.s32.totalorder %s38, 0
      %p133 = por %p131, %p132
      %s135 = sadd.s32 %s134, 1
      %p138 = scmp.eq.s32.totalorder %s32, 1
      %p139 = scmp.ne.s32.totalorder %s134, %s136
      %p140 = scmp.eq.s32.totalorder %s32, 0
      %p141 = por %p139, %p140
      %p142 = scmp.ne.s32.totalorder %s134, %s136
      %p143 = scmp.eq.s32.totalorder %s37, 1
      %p144 = por %p142, %p143
      %p145 = scmp.ne.s32.totalorder %s136, %s137
      %p146 = scmp.eq.s32.totalorder %s37, 0
      %p147 = por %p145, %p146
      %p148 = scmp.ne.s32.totalorder %s136, %s137
      %p149 = scmp.eq.s32.totalorder %s38, 1
      %p150 = por %p148, %p149
      %p152 = scmp.ne.s32.totalorder %s137, %s151
      %p153 = scmp.eq.s32.totalorder %s38, 0
      %p154 = por %p152, %p153
      %s156 = sadd.s32 %s155, 1
      %p159 = scmp.eq.s32.totalorder %s32, 1
      %p160 = scmp.ne.s32.totalorder %s155, %s157
      %p161 = scmp.eq.s32.totalorder %s32, 0
      %p162 = por %p160, %p161
      %p163 = scmp.ne.s32.totalorder %s155, %s157
      %p164 = scmp.eq.s32.totalorder %s37, 1
      %p165 = por %p163, %p164
      %p166 = scmp.ne.s32.totalorder %s157, %s158
      %p167 = scmp.eq.s32.totalorder %s37, 0
      %p168 = por %p166, %p167
      %p169 = scmp.ne.s32.totalorder %s157, %s158
      %p170 = scmp.eq.s32.totalorder %s38, 1
      %p171 = por %p169, %p170
      %p173 = scmp.ne.s32.totalorder %s158, %s172
      %p174 = scmp.eq.s32.totalorder %s38, 0
      %p175 = por %p173, %p174
      %s177 = sadd.s32 %s176, 1
      %p180 = scmp.eq.s32.totalorder %s32, 1
      %p181 = scmp.ne.s32.totalorder %s176, %s178
      %p182 = scmp.eq.s32.totalorder %s32, 0
      %p183 = por %p181, %p182
      %p184 = scmp.ne.s32.totalorder %s176, %s178
      %p185 = scmp.eq.s32.totalorder %s37, 1
      %p186 = por %p184, %p185
      %p187 = scmp.ne.s32.totalorder %s178, %s179
      %p188 = scmp.eq.s32.totalorder %s37, 0
      %p189 = por %p187, %p188
      %p190 = scmp.ne.s32.totalorder %s178, %s179
      %p191 = scmp.eq.s32.totalorder %s38, 1
      %p192 = por %p190, %p191
      %p194 = scmp.ne.s32.totalorder %s179, %s193
      %p195 = scmp.eq.s32.totalorder %s38, 0
      %p196 = por %p194, %p195
      %s198 = sadd.s32 %s197, 1
      %p201 = scmp.eq.s32.totalorder %s32, 1
      %p202 = scmp.ne.s32.totalorder %s197, %s199
      %p203 = scmp.eq.s32.totalorder %s32, 0
      %p204 = por %p202, %p203
      %p205 = scmp.ne.s32.totalorder %s197, %s199
      %p206 = scmp.eq.s32.totalorder %s37, 1
      %p207 = por %p205, %p206
      %p208 = scmp.ne.s32.totalorder %s199, %s200
      %p209 = scmp.eq.s32.totalorder %s37, 0
      %p210 = por %p208, %p209
      %p211 = scmp.ne.s32.totalorder %s199, %s200
      %p212 = scmp.eq.s32.totalorder %s38, 1
      %p213 = por %p211, %p212
      %p215 = scmp.ne.s32.totalorder %s200, %s214
      %p216 = scmp.eq.s32.totalorder %s38, 0
      %p217 = por %p215, %p216
      %s219 = sadd.s32 %s218, 1
      %p222 = scmp.eq.s32.totalorder %s32, 1
      %p223 = scmp.ne.s32.totalorder %s218, %s220
      %p224 = scmp.eq.s32.totalorder %s32, 0
      %p225 = por %p223, %p224
      %p226 = scmp.ne.s32.totalorder %s218, %s220
      %p227 = scmp.eq.s32.totalorder %s37, 1
      %p228 = por %p226, %p227
      %p229 = scmp.ne.s32.totalorder %s220, %s221
      %p230 = scmp.eq.s32.totalorder %s37, 0
      %p231 = por %p229, %p230
      %p232 = scmp.ne.s32.totalorder %s220, %s221
      %p233 = scmp.eq.s32.totalorder %s38, 1
      %p234 = por %p232, %p233
      %p236 = scmp.ne.s32.totalorder %s221, %s235
      %p237 = scmp.eq.s32.totalorder %s38, 0
      %p238 = por %p236, %p237
      %s240 = sadd.s32 %s239, 1
      %p243 = scmp.eq.s32.totalorder %s32, 1
      %p244 = scmp.ne.s32.totalorder %s239, %s241
      %p245 = scmp.eq.s32.totalorder %s32, 0
      %p246 = por %p244, %p245
      %p247 = scmp.ne.s32.totalorder %s239, %s241
      %p248 = scmp.eq.s32.totalorder %s37, 1
      %p249 = por %p247, %p248
      %p250 = scmp.ne.s32.totalorder %s241, %s242
      %p251 = scmp.eq.s32.totalorder %s37, 0
      %p252 = por %p250, %p251
      %p253 = scmp.ne.s32.totalorder %s241, %s242
      %p254 = scmp.eq.s32.totalorder %s38, 1
      %p255 = por %p253, %p254
      %p257 = scmp.ne.s32.totalorder %s242, %s256
      %p258 = scmp.eq.s32.totalorder %s38, 0
      %p259 = por %p257, %p258
      %s261 = sadd.s32 %s260, 1
      %p264 = scmp.eq.s32.totalorder %s32, 1
      %p265 = scmp.ne.s32.totalorder %s260, %s262
      %p266 = scmp.eq.s32.totalorder %s32, 0
      %p267 = por %p265, %p266
      %p268 = scmp.ne.s32.totalorder %s260, %s262
      %p269 = scmp.eq.s32.totalorder %s37, 1
      %p270 = por %p268, %p269
      %p271 = scmp.ne.s32.totalorder %s262, %s263
      %p272 = scmp.eq.s32.totalorder %s37, 0
      %p273 = por %p271, %p272
      %p274 = scmp.ne.s32.totalorder %s262, %s263
      %p275 = scmp.eq.s32.totalorder %s38, 1
      %p276 = por %p274, %p275
      %p278 = scmp.ne.s32.totalorder %s263, %s277
      %p279 = scmp.eq.s32.totalorder %s38, 0
      %p280 = por %p278, %p279
      %s282 = sadd.s32 %s281, 1
      %p285 = scmp.eq.s32.totalorder %s32, 1
      %p286 = scmp.ne.s32.totalorder %s281, %s283
      %p287 = scmp.eq.s32.totalorder %s32, 0
      %p288 = por %p286, %p287
      %p289 = scmp.ne.s32.totalorder %s281, %s283
      %p290 = scmp.eq.s32.totalorder %s37, 1
      %p291 = por %p289, %p290
      %p292 = scmp.ne.s32.totalorder %s283, %s284
      %p293 = scmp.eq.s32.totalorder %s37, 0
      %p294 = por %p292, %p293
      %p295 = scmp.ne.s32.totalorder %s283, %s284
      %p296 = scmp.eq.s32.totalorder %s38, 1
      %p297 = por %p295, %p296
      %p299 = scmp.ne.s32.totalorder %s284, %s298
      %p300 = scmp.eq.s32.totalorder %s38, 0
      %p301 = por %p299, %p300
      %s303 = sadd.s32 %s302, 1
      %p306 = scmp.eq.s32.totalorder %s32, 1
      %p307 = scmp.ne.s32.totalorder %s302, %s304
      %p308 = scmp.eq.s32.totalorder %s32, 0
      %p309 = por %p307, %p308
      %p310 = scmp.ne.s32.totalorder %s302, %s304
      %p311 = scmp.eq.s32.totalorder %s37, 1
      %p312 = por %p310, %p311
      %p313 = scmp.ne.s32.totalorder %s304, %s305
      %p314 = scmp.eq.s32.totalorder %s37, 0
      %p315 = por %p313, %p314
      %p316 = scmp.ne.s32.totalorder %s304, %s305
      %p317 = scmp.eq.s32.totalorder %s38, 1
      %p318 = por %p316, %p317
      %p320 = scmp.ne.s32.totalorder %s305, %s319
      %p321 = scmp.eq.s32.totalorder %s38, 0
      %p322 = por %p320, %p321
      %s324 = sadd.s32 %s323, 1
      %p327 = scmp.eq.s32.totalorder %s32, 1
      %p328 = scmp.ne.s32.totalorder %s323, %s325
      %p329 = scmp.eq.s32.totalorder %s32, 0
      %p330 = por %p328, %p329
      %p331 = scmp.ne.s32.totalorder %s323, %s325
      %p332 = scmp.eq.s32.totalorder %s37, 1
      %p333 = por %p331, %p332
      %p334 = scmp.ne.s32.totalorder %s325, %s326
      %p335 = scmp.eq.s32.totalorder %s37, 0
      %p336 = por %p334, %p335
      %p337 = scmp.ne.s32.totalorder %s325, %s326
      %p338 = scmp.eq.s32.totalorder %s38, 1
      %p339 = por %p337, %p338
      %p341 = scmp.ne.s32.totalorder %s326, %s340
      %p342 = scmp.eq.s32.totalorder %s38, 0
      %p343 = por %p341, %p342
      %s344 = ssub.s32 %s32, %s39
      %p345 = scmp.eq.s32.totalorder %s344, 0
      %s347 = sadd.s32 %s346, 1
      %s348 = scalar_select %p345, %s346, %s347
      %p351 = pneg %p345
      %p352 = scmp.eq.s32.totalorder %s32, 1
      %p353 = por %p351, %p352
      %p354 = scmp.ne.s32.totalorder %s346, %s349
      %p355 = scmp.eq.s32.totalorder %s32, 0
      %p356 = por %p354, %p355
      %p357 = scmp.ne.s32.totalorder %s346, %s349
      %p358 = scmp.eq.s32.totalorder %s37, 1
      %p359 = por %p357, %p358
      %p360 = scmp.ne.s32.totalorder %s349, %s350
      %p361 = scmp.eq.s32.totalorder %s37, 0
      %p362 = por %p360, %p361
      %p363 = scmp.ne.s32.totalorder %s349, %s350
      %p364 = scmp.eq.s32.totalorder %s38, 1
      %p365 = por %p363, %p364
      %p367 = scmp.ne.s32.totalorder %s350, %s366
      %p368 = scmp.eq.s32.totalorder %s38, 0
      %p369 = por %p367, %p368
      %p370 = scmp.le.s32.totalorder 1, %s32
      %p371 = scmp.lt.s32.totalorder %s32, 3
      %p372 = pnand %p370, %p371
      %p373 = pneg %p372
      // Predicated region
      $region9: #{tpu_custom_call.1} parent=5 // pred_check
        _
      $region10: #{tpu_custom_call.1} parent=5 // pred_check_branch
        %375 = sbr.rel (%p372) target = $region12
      $region11: #{tpu_custom_call.1} parent=5 // pred_region
        %s376 = ssub.s32 %s32, 1
        // Predicated region
        $region13: #{tpu_custom_call.1} parent=11 // pred_check
          %p377 = pneg %p105
        $region14: #{tpu_custom_call.1} parent=11 // pred_check_branch
          %379 = sbr.rel (%p377) target = $region16
        $region15: #{tpu_custom_call.1} parent=11 // pred_region
          %s381 = ssub.s32 512, 512
          %382 = vsyncadd [#allocation6], %s381
          %s383 = sshll.u32 [#allocation7], 4
          %s384 = int_to_ptr.vmem [resolvable:$true] %s383
          %389 = dma.hbm_to_vmem [thread:$0]  %s2, 512, %s384, [#allocation6], 128, 128, 8
        $region16: #{tpu_custom_call.1} parent=11 // pred_fallthru
          _
        // Predicated region
        $region17: #{tpu_custom_call.1} parent=11 // pred_check
          %p390 = pneg %p126
        $region18: #{tpu_custom_call.1} parent=11 // pred_check_branch
          %392 = sbr.rel (%p390) target = $region20
        $region19: #{tpu_custom_call.1} parent=11 // pred_region
          %s394 = ssub.s32 512, 512
          %395 = vsyncadd [#allocation9], %s394
          %s396 = sshll.u32 [#allocation8], 4
          %s397 = int_to_ptr.vmem [resolvable:$true] %s396
          %402 = dma.hbm_to_vmem [thread:$0]  %s3, 512, %s397, [#allocation9], 128, 128, 8
        $region20: #{tpu_custom_call.1} parent=11 // pred_fallthru
          _
        // Predicated region
        $region21: #{tpu_custom_call.1} parent=11 // pred_check
          %p403 = pneg %p147
        $region22: #{tpu_custom_call.1} parent=11 // pred_check_branch
          %405 = sbr.rel (%p403) target = $region24
        $region23: #{tpu_custom_call.1} parent=11 // pred_region
          _
        $region24: #{tpu_custom_call.1} parent=11 // pred_fallthru
          _
        // Predicated region
        $region25: #{tpu_custom_call.1} parent=11 // pred_check
          %p406 = pneg %p168
        $region26: #{tpu_custom_call.1} parent=11 // pred_check_branch
          %408 = sbr.rel (%p406) target = $region28
        $region27: #{tpu_custom_call.1} parent=11 // pred_region
          _
        $region28: #{tpu_custom_call.1} parent=11 // pred_fallthru
          _
        // Predicated region
        $region29: #{tpu_custom_call.1} parent=11 // pred_check
          %p409 = pneg %p189
        $region30: #{tpu_custom_call.1} parent=11 // pred_check_branch
          %411 = sbr.rel (%p409) target = $region32
        $region31: #{tpu_custom_call.1} parent=11 // pred_region
          %s413 = ssub.s32 512, 512
          %414 = vsyncadd [#allocation9], %s413
          %s415 = sshll.u32 [#allocation10], 4
          %s416 = int_to_ptr.vmem [resolvable:$true] %s415
          %421 = dma.hbm_to_vmem [thread:$0]  %s6, 512, %s416, [#allocation9], 128, 128, 8
        $region32: #{tpu_custom_call.1} parent=11 // pred_fallthru
          _
        // Predicated region
        $region33: #{tpu_custom_call.1} parent=11 // pred_check
          %p422 = pneg %p210
        $region34: #{tpu_custom_call.1} parent=11 // pred_check_branch
          %424 = sbr.rel (%p422) target = $region36
        $region35: #{tpu_custom_call.1} parent=11 // pred_region
          %s426 = ssub.s32 16, 16
          %427 = vsyncadd [#allocation12], %s426
          %s429 = sshll.u32 [#allocation11], 4
          %s430 = int_to_ptr.vmem [resolvable:$true] %s429
          %432 = dma.hbm_to_vmem [thread:$0]  %s7, 16, %s430, [#allocation12]
        $region36: #{tpu_custom_call.1} parent=11 // pred_fallthru
          _
        // Predicated region
        $region37: #{tpu_custom_call.1} parent=11 // pred_check
          %p433 = pneg %p231
        $region38: #{tpu_custom_call.1} parent=11 // pred_check_branch
          %435 = sbr.rel (%p433) target = $region40
        $region39: #{tpu_custom_call.1} parent=11 // pred_region
          %s437 = ssub.s32 512, 512
          %438 = vsyncadd [#allocation12], %s437
          %s439 = sshll.u32 [#allocation13], 4
          %s440 = int_to_ptr.vmem [resolvable:$true] %s439
          %445 = dma.hbm_to_vmem [thread:$0]  %s8, 512, %s440, [#allocation12], 128, 128, 8
        $region40: #{tpu_custom_call.1} parent=11 // pred_fallthru
          _
        // Predicated region
        $region41: #{tpu_custom_call.1} parent=11 // pred_check
          %p446 = pneg %p252
        $region42: #{tpu_custom_call.1} parent=11 // pred_check_branch
          %448 = sbr.rel (%p446) target = $region44
        $region43: #{tpu_custom_call.1} parent=11 // pred_region
          _
        $region44: #{tpu_custom_call.1} parent=11 // pred_fallthru
          _
        // Predicated region
        $region45: #{tpu_custom_call.1} parent=11 // pred_check
          %p449 = pneg %p273
        $region46: #{tpu_custom_call.1} parent=11 // pred_check_branch
          %451 = sbr.rel (%p449) target = $region48
        $region47: #{tpu_custom_call.1} parent=11 // pred_region
          _
        $region48: #{tpu_custom_call.1} parent=11 // pred_fallthru
          _
        // Predicated region
        $region49: #{tpu_custom_call.1} parent=11 // pred_check
          %p452 = pneg %p294
        $region50: #{tpu_custom_call.1} parent=11 // pred_check_branch
          %454 = sbr.rel (%p452) target = $region52
        $region51: #{tpu_custom_call.1} parent=11 // pred_region
          _
        $region52: #{tpu_custom_call.1} parent=11 // pred_fallthru
          _
        // Predicated region
        $region53: #{tpu_custom_call.1} parent=11 // pred_check
          %p455 = pneg %p315
        $region54: #{tpu_custom_call.1} parent=11 // pred_check_branch
          %457 = sbr.rel (%p455) target = $region56
        $region55: #{tpu_custom_call.1} parent=11 // pred_region
          %s459 = ssub.s32 512, 512
          %460 = vsyncadd [#allocation15], %s459
          %s461 = sshll.u32 [#allocation14], 4
          %s462 = int_to_ptr.vmem [resolvable:$true] %s461
          %467 = dma.hbm_to_vmem [thread:$0]  %s12, 512, %s462, [#allocation15], 128, 128, 8
        $region56: #{tpu_custom_call.1} parent=11 // pred_fallthru
          _
        // Predicated region
        $region57: #{tpu_custom_call.1} parent=11 // pred_check
          %p468 = pneg %p336
        $region58: #{tpu_custom_call.1} parent=11 // pred_check_branch
          %470 = sbr.rel (%p468) target = $region60
        $region59: #{tpu_custom_call.1} parent=11 // pred_region
          _
        $region60: #{tpu_custom_call.1} parent=11 // pred_fallthru
          _
      $region12: #{tpu_custom_call.1} parent=5 // pred_fallthru
        _
      %p471 = scmp.lt.s32.totalorder %s32, 2
      // Predicated region
      $region61: #{tpu_custom_call.1} parent=5 // pred_check
        %p472 = pneg %p471
      $region62: #{tpu_custom_call.1} parent=5 // pred_check_branch
        %474 = sbr.rel (%p472) target = $region64
      $region63: #{tpu_custom_call.1} parent=5 // pred_region
        // Predicated region
        $region65: #{tpu_custom_call.1} parent=63 // pred_check
          %p475 = pneg %p52
        $region66: #{tpu_custom_call.1} parent=63 // pred_check_branch
          %477 = sbr.rel (%p475) target = $region68
        $region67: #{tpu_custom_call.1} parent=63 // pred_region
          %s478 = sand.u32 %s42, 1
          %s479 = scalar_lea.sflag [#allocation3], %s478
          %s480 = sand.u32 %s42, 1
          %s481 = smul.addr %s480, 8
          %s482 = scalar_lea.vmem [#allocation2], %s481
          %s484 = ssub.s32 128, 128
          %485 = vsyncadd %s479, %s484
          %s486 = smul.addr %s32, 128
          %s487 = scalar_lea.hbm %s0, %s486
          %s489 = sshll.u32 %s482, 4
          %s490 = int_to_ptr.vmem [resolvable:$true] %s489
          %492 = dma.hbm_to_vmem [thread:$0]  %s487, 128, %s490, %s479
        $region68: #{tpu_custom_call.1} parent=63 // pred_fallthru
          _
        // Predicated region
        $region69: #{tpu_custom_call.1} parent=63 // pred_check
          %p493 = pneg %p78
        $region70: #{tpu_custom_call.1} parent=63 // pred_check_branch
          %495 = sbr.rel (%p493) target = $region72
        $region71: #{tpu_custom_call.1} parent=63 // pred_region
          %s496 = sand.u32 %s32, 1
          %s497 = scalar_lea.sflag [#allocation6], %s496
          %s498 = sand.u32 %s68, 1
          %s499 = smul.addr %s498, 16
          %s500 = scalar_lea.vmem [#allocation5], %s499
          %s502 = ssub.s32 256, 256
          %503 = vsyncadd %s497, %s502
          %s504 = smul.addr %s32, 2
          %s505 = smul.addr %s504, 128
          %s506 = scalar_lea.hbm %s1, %s505
          %s507 = sshll.u32 %s500, 4
          %s508 = int_to_ptr.vmem [resolvable:$true] %s507
          %513 = dma.hbm_to_vmem [thread:$0]  %s506, 256, %s508, %s497, 128, 128, 8
        $region72: #{tpu_custom_call.1} parent=63 // pred_fallthru
          _
      $region64: #{tpu_custom_call.1} parent=5 // pred_fallthru
        _
      %p514 = scmp.le.s32.totalorder 1, %s32
      %p515 = scmp.lt.s32.totalorder %s32, 3
      %p516 = pnand %p514, %p515
      %p517 = pneg %p516
      // Predicated region
      $region73: #{tpu_custom_call.1} parent=5 // pred_check
        _
      $region74: #{tpu_custom_call.1} parent=5 // pred_check_branch
        %519 = sbr.rel (%p516) target = $region76
      $region75: #{tpu_custom_call.1} parent=5 // pred_region
        %s520 = ssub.s32 %s32, 1
        %s521 = sand.u32 %s45, 1
        %s522 = scalar_lea.sflag [#allocation3], %s521
        %s523 = sand.u32 %s45, 1
        %s524 = smul.addr %s523, 8
        %s525 = scalar_lea.vmem [#allocation2], %s524
        // Predicated region
        $region77: #{tpu_custom_call.1} parent=75 // pred_check
          %p526 = pneg %p58
        $region78: #{tpu_custom_call.1} parent=75 // pred_check_branch
          %528 = sbr.rel (%p526) target = $region80
        $region79: #{tpu_custom_call.1} parent=75 // pred_region
          %529 = dma.done %s522, 128
        $region80: #{tpu_custom_call.1} parent=75 // pred_fallthru
          _
        %s530 = sand.u32 %s37, 1
        %s531 = scalar_lea.sflag [#allocation6], %s530
        %s532 = sand.u32 %s71, 1
        %s533 = smul.addr %s532, 16
        %s534 = scalar_lea.vmem [#allocation5], %s533
        // Predicated region
        $region81: #{tpu_custom_call.1} parent=75 // pred_check
          %p535 = pneg %p84
        $region82: #{tpu_custom_call.1} parent=75 // pred_check_branch
          %537 = sbr.rel (%p535) target = $region84
        $region83: #{tpu_custom_call.1} parent=75 // pred_region
          %538 = dma.done %s531, 256
        $region84: #{tpu_custom_call.1} parent=75 // pred_fallthru
          _
        // Predicated region
        $region85: #{tpu_custom_call.1} parent=75 // pred_check
          %p539 = pneg %p105
        $region86: #{tpu_custom_call.1} parent=75 // pred_check_branch
          %541 = sbr.rel (%p539) target = $region88
        $region87: #{tpu_custom_call.1} parent=75 // pred_region
          %542 = dma.done [#allocation6], 512
        $region88: #{tpu_custom_call.1} parent=75 // pred_fallthru
          _
        // Predicated region
        $region89: #{tpu_custom_call.1} parent=75 // pred_check
          %p543 = pneg %p126
        $region90: #{tpu_custom_call.1} parent=75 // pred_check_branch
          %545 = sbr.rel (%p543) target = $region92
        $region91: #{tpu_custom_call.1} parent=75 // pred_region
          %546 = dma.done [#allocation9], 512
        $region92: #{tpu_custom_call.1} parent=75 // pred_fallthru
          _
        // Predicated region
        $region93: #{tpu_custom_call.1} parent=75 // pred_check
          %p547 = pneg %p189
        $region94: #{tpu_custom_call.1} parent=75 // pred_check_branch
          %549 = sbr.rel (%p547) target = $region96
        $region95: #{tpu_custom_call.1} parent=75 // pred_region
          %550 = dma.done [#allocation9], 512
        $region96: #{tpu_custom_call.1} parent=75 // pred_fallthru
          _
        // Predicated region
        $region97: #{tpu_custom_call.1} parent=75 // pred_check
          %p551 = pneg %p210
        $region98: #{tpu_custom_call.1} parent=75 // pred_check_branch
          %553 = sbr.rel (%p551) target = $region100
        $region99: #{tpu_custom_call.1} parent=75 // pred_region
          %554 = dma.done [#allocation12], 16
        $region100: #{tpu_custom_call.1} parent=75 // pred_fallthru
          _
        // Predicated region
        $region101: #{tpu_custom_call.1} parent=75 // pred_check
          %p555 = pneg %p231
        $region102: #{tpu_custom_call.1} parent=75 // pred_check_branch
          %557 = sbr.rel (%p555) target = $region104
        $region103: #{tpu_custom_call.1} parent=75 // pred_region
          %558 = dma.done [#allocation12], 512
        $region104: #{tpu_custom_call.1} parent=75 // pred_fallthru
          _
        // Predicated region
        $region105: #{tpu_custom_call.1} parent=75 // pred_check
          %p559 = pneg %p315
        $region106: #{tpu_custom_call.1} parent=75 // pred_check_branch
          %561 = sbr.rel (%p559) target = $region108
        $region107: #{tpu_custom_call.1} parent=75 // pred_region
          %562 = dma.done [#allocation15], 512
        $region108: #{tpu_custom_call.1} parent=75 // pred_fallthru
          _
        %s563 = sand.u32 %s45, 1
        %s564 = scalar_lea.sflag [#allocation3], %s563
        %s565 = sand.u32 %s45, 1
        %s566 = smul.addr %s565, 8
        %s567 = scalar_lea.vmem [#allocation2], %s566
        %p568 = pneg %p58
        %p569 = pneg %p55
        %s570 = sand.u32 %s37, 1
        %s571 = scalar_lea.sflag [#allocation6], %s570
        %s572 = sand.u32 %s71, 1
        %s573 = smul.addr %s572, 16
        %s574 = scalar_lea.vmem [#allocation5], %s573
        %p575 = pneg %p84
        %p576 = pneg %p81
        %p577 = pneg %p105
        %p578 = pneg %p102
        %p579 = pneg %p126
        %p580 = pneg %p123
        %p581 = pneg %p147
        %p582 = pneg %p144
        %p583 = pneg %p168
        %p584 = pneg %p165
        %p585 = pneg %p189
        %p586 = pneg %p186
        %p587 = pneg %p210
        %p588 = pneg %p207
        %p589 = pneg %p231
        %p590 = pneg %p228
        %p591 = pneg %p252
        %p592 = pneg %p249
        %p593 = pneg %p273
        %p594 = pneg %p270
        %p595 = pneg %p294
        %p596 = pneg %p291
        %p597 = pneg %p315
        %p598 = pneg %p312
        %p599 = pneg %p336
        %p600 = pneg %p333
        %p601 = pneg %p362
        %p602 = pneg %p359
        %s603 = sand.u32 %s349, 1
        %s604 = scalar_lea.sflag [#allocation4], %s603
        %s605 = sand.u32 %s349, 1
        %s606 = smul.addr %s605, 8
        %s607 = scalar_lea.vmem [#allocation16], %s606
        %v608 = vld [vmem:[%s525] sm:$0xff]
        %v609 = vld [vmem:[%s534] sm:$0xff]
        %v610 = vld [vmem:[%s534 + $0x8] sm:$0xff]
        %v611 = vld [vmem:[#allocation7] sm:$0xff]
        %v612 = vld [vmem:[#allocation7 + $0x8] sm:$0xff]
        %v613 = vld [vmem:[#allocation7 + $0x10] sm:$0xff]
        %v614 = vld [vmem:[#allocation7 + $0x18] sm:$0xff]
        %v615 = vld [vmem:[#allocation8] sm:$0xff]
        %v616 = vld [vmem:[#allocation8 + $0x8] sm:$0xff]
        %v617 = vld [vmem:[#allocation8 + $0x10] sm:$0xff]
        %v618 = vld [vmem:[#allocation8 + $0x18] sm:$0xff]
        %v619 = vld [vmem:[%s4] sm:$0x1]
        %v620 = vld [vmem:[%s5] sm:$0x1]
        %v621 = vld [vmem:[#allocation10] sm:$0xff]
        %v622 = vld [vmem:[#allocation10 + $0x8] sm:$0xff]
        %v623 = vld [vmem:[#allocation10 + $0x10] sm:$0xff]
        %v624 = vld [vmem:[#allocation10 + $0x18] sm:$0xff]
        %v625 = vld [vmem:[#allocation11] sm:$0x1]
        %v627 = vlaneseq
        %v628 = vshrl.u32 %v627, 7
        %v629 = vsub.s32 0, %v628
        %v630 = vrot.slane %v619, %v629
        %vm632 = vcmask 261120
        %v634 = vsel %vm632, %v608, 0
        %636 = vmatprep.subr.mxu0 0.0
        %637 = vmatpush1.msra.mxu0 %v611
        %638 = vmatprep.subr.mxu0 0.0
        %639 = vmatpush1.msra.mxu0 %v612
        %640 = vmatprep.subr.mxu0 0.0
        %641 = vmatpush1.msra.mxu0 %v613
        %642 = vmatprep.subr.mxu0 0.0
        %643 = vmatpush1.msra.mxu0 %v614
        %644 = vmatprep.subr.mxu0 0.0
        %645 = vmatpush1.msra.mxu0 0.0
        %646 = vmatprep.subr.mxu0 0.0
        %647 = vmatpush1.msra.mxu0 0.0
        %648 = vmatprep.subr.mxu0 0.0
        %649 = vmatpush1.msra.mxu0 0.0
        %650 = vmatprep.subr.mxu0 0.0
        %651 = vmatpush1.msra.mxu0 0.0
        %652 = vmatprep.subr.mxu0 0.0
        %653 = vmatpush1.msra.mxu0 0.0
        %654 = vmatprep.subr.mxu0 0.0
        %655 = vmatpush1.msra.mxu0 0.0
        %656 = vmatprep.subr.mxu0 0.0
        %657 = vmatpush1.msra.mxu0 0.0
        %658 = vmatprep.subr.mxu0 0.0
        %659 = vmatpush1.msra.mxu0 0.0
        %660 = vmatprep.subr.mxu0 0.0
        %661 = vmatpush1.msra.mxu0 0.0
        %662 = vmatprep.subr.mxu0 0.0
        %663 = vmatpush1.msra.mxu0 0.0
        %664 = vmatprep.subr.mxu0 0.0
        %665 = vmatpush1.msra.mxu0 0.0
        %666 = vmatprep.subr.mxu0 0.0
        %667 = vmatpush1.msra.mxu0 0.0
        %668 = vmatprep.subr.mxu0 0.0
        %669 = vmatpush1.msra.mxu0 0.0
        %670 = vmatprep.subr.mxu0 0.0
        %671 = vmatpush1.msra.mxu0 0.0
        %672 = vmatprep.subr.mxu0 0.0
        %673 = vmatpush1.msra.mxu0 0.0
        %674 = vmatprep.subr.mxu0 0.0
        %675 = vmatpush1.msra.mxu0 0.0
        %676 = vmatprep.subr.mxu0 0.0
        %677 = vmatpush1.msra.mxu0 0.0
        %678 = vmatprep.subr.mxu0 0.0
        %679 = vmatpush1.msra.mxu0 0.0
        %680 = vmatprep.subr.mxu0 0.0
        %681 = vmatpush1.msra.mxu0 0.0
        %682 = vmatprep.subr.mxu0 0.0
        %683 = vmatpush1.msra.mxu0 0.0
        %684 = vmatprep.subr.mxu0 0.0
        %685 = vmatpush1.msra.mxu0 0.0
        %686 = vmatprep.subr.mxu0 0.0
        %687 = vmatpush1.msra.mxu0 0.0
        %688 = vmatprep.subr.mxu0 0.0
        %689 = vmatpush1.msra.mxu0 0.0
        %690 = vmatprep.subr.mxu0 0.0
        %691 = vmatpush1.msra.mxu0 0.0
        %692 = vmatprep.subr.mxu0 0.0
        %693 = vmatpush1.msra.mxu0 0.0
        %694 = vmatprep.subr.mxu0 0.0
        %695 = vmatpush1.msra.mxu0 0.0
        %696 = vmatprep.subr.mxu0 0.0
        %697 = vmatpush1.msra.mxu0 0.0
        %698 = vmatprep.subr.mxu0 0.0
        %699 = vmatpush1.msra.mxu0 0.0
        %700 = vmatprep.mubr.f32.mxu0 0.0
        %701 = vmatmul.mubr.f32.gmra.mrb[0].mxu0 %v634
        %v702 = vpop.f32.mrb[0].mxu0
        %v703 = vadd.f32 %v630, %v702
        %v704 = vpop.f32.mrb[0].mxu0
        %705 = vdwg.mxu0
        %v707 = vlaneseq
        %v708 = vshrl.u32 %v707, 7
        %v709 = vsub.s32 0, %v708
        %v710 = vrot.slane %v620, %v709
        %712 = vmatprep.subr.mxu0 0.0
        %713 = vmatpush1.msra.mxu0 %v615
        %714 = vmatprep.subr.mxu0 0.0
        %715 = vmatpush1.msra.mxu0 %v616
        %716 = vmatprep.subr.mxu0 0.0
        %717 = vmatpush1.msra.mxu0 %v617
        %718 = vmatprep.subr.mxu0 0.0
        %719 = vmatpush1.msra.mxu0 %v618
        %720 = vmatprep.subr.mxu0 0.0
        %721 = vmatpush1.msra.mxu0 0.0
        %722 = vmatprep.subr.mxu0 0.0
        %723 = vmatpush1.msra.mxu0 0.0
        %724 = vmatprep.subr.mxu0 0.0
        %725 = vmatpush1.msra.mxu0 0.0
        %726 = vmatprep.subr.mxu0 0.0
        %727 = vmatpush1.msra.mxu0 0.0
        %728 = vmatprep.subr.mxu0 0.0
        %729 = vmatpush1.msra.mxu0 0.0
        %730 = vmatprep.subr.mxu0 0.0
        %731 = vmatpush1.msra.mxu0 0.0
        %732 = vmatprep.subr.mxu0 0.0
        %733 = vmatpush1.msra.mxu0 0.0
        %734 = vmatprep.subr.mxu0 0.0
        %735 = vmatpush1.msra.mxu0 0.0
        %736 = vmatprep.subr.mxu0 0.0
        %737 = vmatpush1.msra.mxu0 0.0
        %738 = vmatprep.subr.mxu0 0.0
        %739 = vmatpush1.msra.mxu0 0.0
        %740 = vmatprep.subr.mxu0 0.0
        %741 = vmatpush1.msra.mxu0 0.0
        %742 = vmatprep.subr.mxu0 0.0
        %743 = vmatpush1.msra.mxu0 0.0
        %744 = vmatprep.subr.mxu0 0.0
        %745 = vmatpush1.msra.mxu0 0.0
        %746 = vmatprep.subr.mxu0 0.0
        %747 = vmatpush1.msra.mxu0 0.0
        %748 = vmatprep.subr.mxu0 0.0
        %749 = vmatpush1.msra.mxu0 0.0
        %750 = vmatprep.subr.mxu0 0.0
        %751 = vmatpush1.msra.mxu0 0.0
        %752 = vmatprep.subr.mxu0 0.0
        %753 = vmatpush1.msra.mxu0 0.0
        %754 = vmatprep.subr.mxu0 0.0
        %755 = vmatpush1.msra.mxu0 0.0
        %756 = vmatprep.subr.mxu0 0.0
        %757 = vmatpush1.msra.mxu0 0.0
        %758 = vmatprep.subr.mxu0 0.0
        %759 = vmatpush1.msra.mxu0 0.0
        %760 = vmatprep.subr.mxu0 0.0
        %761 = vmatpush1.msra.mxu0 0.0
        %762 = vmatprep.subr.mxu0 0.0
        %763 = vmatpush1.msra.mxu0 0.0
        %764 = vmatprep.subr.mxu0 0.0
        %765 = vmatpush1.msra.mxu0 0.0
        %766 = vmatprep.subr.mxu0 0.0
        %767 = vmatpush1.msra.mxu0 0.0
        %768 = vmatprep.subr.mxu0 0.0
        %769 = vmatpush1.msra.mxu0 0.0
        %770 = vmatprep.subr.mxu0 0.0
        %771 = vmatpush1.msra.mxu0 0.0
        %772 = vmatprep.subr.mxu0 0.0
        %773 = vmatpush1.msra.mxu0 0.0
        %774 = vmatprep.subr.mxu0 0.0
        %775 = vmatpush1.msra.mxu0 0.0
        %776 = vmatprep.mubr.f32.mxu0 0.0
        %777 = vmatmul.mubr.f32.gmra.mrb[0].mxu0 %v634
        %v778 = vpop.f32.mrb[0].mxu0
        %v779 = vadd.f32 %v710, %v778
        %v780 = vpop.f32.mrb[0].mxu0
        %781 = vdwg.mxu0
        %vm782 = vcmask 64512
        %v784 = vsel %vm782, %v703, 0
        %v787 = vsel %vm782, %v779, 0
        %789 = vmatprep.subr.mxu0 0.0
        %790 = vmatpush1.xpose.msra.mxu0 %v787
        %791 = vmatprep.subr.mxu0 0.0
        %792 = vmatpush1.xpose.msra.mxu0 0.0
        %793 = vmatprep.subr.mxu0 0.0
        %794 = vmatpush1.xpose.msra.mxu0 0.0
        %795 = vmatprep.subr.mxu0 0.0
        %796 = vmatpush1.xpose.msra.mxu0 0.0
        %797 = vmatprep.subr.mxu0 0.0
        %798 = vmatpush1.xpose.msra.mxu0 0.0
        %799 = vmatprep.subr.mxu0 0.0
        %800 = vmatpush1.xpose.msra.mxu0 0.0
        %801 = vmatprep.subr.mxu0 0.0
        %802 = vmatpush1.xpose.msra.mxu0 0.0
        %803 = vmatprep.subr.mxu0 0.0
        %804 = vmatpush1.xpose.msra.mxu0 0.0
        %805 = vmatprep.subr.mxu0 0.0
        %806 = vmatpush1.xpose.msra.mxu0 0.0
        %807 = vmatprep.subr.mxu0 0.0
        %808 = vmatpush1.xpose.msra.mxu0 0.0
        %809 = vmatprep.subr.mxu0 0.0
        %810 = vmatpush1.xpose.msra.mxu0 0.0
        %811 = vmatprep.subr.mxu0 0.0
        %812 = vmatpush1.xpose.msra.mxu0 0.0
        %813 = vmatprep.subr.mxu0 0.0
        %814 = vmatpush1.xpose.msra.mxu0 0.0
        %815 = vmatprep.subr.mxu0 0.0
        %816 = vmatpush1.xpose.msra.mxu0 0.0
        %817 = vmatprep.subr.mxu0 0.0
        %818 = vmatpush1.xpose.msra.mxu0 0.0
        %819 = vmatprep.subr.mxu0 0.0
        %820 = vmatpush1.xpose.msra.mxu0 0.0
        %821 = vmatprep.subr.mxu0 0.0
        %822 = vmatpush1.xpose.msra.mxu0 0.0
        %823 = vmatprep.subr.mxu0 0.0
        %824 = vmatpush1.xpose.msra.mxu0 0.0
        %825 = vmatprep.subr.mxu0 0.0
        %826 = vmatpush1.xpose.msra.mxu0 0.0
        %827 = vmatprep.subr.mxu0 0.0
        %828 = vmatpush1.xpose.msra.mxu0 0.0
        %829 = vmatprep.subr.mxu0 0.0
        %830 = vmatpush1.xpose.msra.mxu0 0.0
        %831 = vmatprep.subr.mxu0 0.0
        %832 = vmatpush1.xpose.msra.mxu0 0.0
        %833 = vmatprep.subr.mxu0 0.0
        %834 = vmatpush1.xpose.msra.mxu0 0.0
        %835 = vmatprep.subr.mxu0 0.0
        %836 = vmatpush1.xpose.msra.mxu0 0.0
        %837 = vmatprep.subr.mxu0 0.0
        %838 = vmatpush1.xpose.msra.mxu0 0.0
        %839 = vmatprep.subr.mxu0 0.0
        %840 = vmatpush1.xpose.msra.mxu0 0.0
        %841 = vmatprep.subr.mxu0 0.0
        %842 = vmatpush1.xpose.msra.mxu0 0.0
        %843 = vmatprep.subr.mxu0 0.0
        %844 = vmatpush1.xpose.msra.mxu0 0.0
        %845 = vmatprep.subr.mxu0 0.0
        %846 = vmatpush1.xpose.msra.mxu0 0.0
        %847 = vmatprep.subr.mxu0 0.0
        %848 = vmatpush1.xpose.msra.mxu0 0.0
        %849 = vmatprep.subr.mxu0 0.0
        %850 = vmatpush1.xpose.msra.mxu0 0.0
        %851 = vmatprep.subr.mxu0 0.0
        %852 = vmatpush1.xpose.msra.mxu0 0.0
        %853 = vmatprep.mubr.f32.mxu0 0.0
        %854 = vmatmul.mubr.f32.gmra.mrb[0].mxu0 %v784
        %v855 = vpop.f32.mrb[0].mxu0
        %v856 = vadd.f32 0.0, %v855
        %v857 = vpop.f32.mrb[0].mxu0
        %858 = vdwg.mxu0
        %v859 = vmul.f32 %v856, 0.35355338
        %v860 = vsel %vm782, %v859, -inf
        %861 = vmax.xlane.f32.xlu0 %v860
        %v862 = vpop.xlane.xlu0 %861
        %v863 = vsub.f32 %v859, %v862
        %v864 = vmul.f32 %v863, 1.442695
        %v865 = vpow.pop %v864
        %v866 = vsel %vm782, %v865, 0.0
        %867 = vadd.xlane.f32.xlu0 %v866
        %v868 = vpop.xlane.xlu0 %867
        %v869 = vrcp.pop %v868
        %v870 = vmul.f32 %v865, %v869
        %871 = vrot.lane.b32.xlu0 %v779, 96
        %v872 = vpop.permute.xlu0 %871
        %v875 = vsel %vm782, %v870, 0
        %877 = vmatprep.subr.mxu0 0.0
        %878 = vmatpush1.msra.mxu0 %v872
        %879 = vmatprep.subr.mxu0 0.0
        %880 = vmatpush1.msra.mxu0 0.0
        %881 = vmatprep.subr.mxu0 0.0
        %882 = vmatpush1.msra.mxu0 0.0
        %883 = vmatprep.subr.mxu0 0.0
        %884 = vmatpush1.msra.mxu0 0.0
        %885 = vmatprep.subr.mxu0 0.0
        %886 = vmatpush1.msra.mxu0 0.0
        %887 = vmatprep.subr.mxu0 0.0
        %888 = vmatpush1.msra.mxu0 0.0
        %889 = vmatprep.subr.mxu0 0.0
        %890 = vmatpush1.msra.mxu0 0.0
        %891 = vmatprep.subr.mxu0 0.0
        %892 = vmatpush1.msra.mxu0 0.0
        %893 = vmatprep.subr.mxu0 0.0
        %894 = vmatpush1.msra.mxu0 0.0
        %895 = vmatprep.subr.mxu0 0.0
        %896 = vmatpush1.msra.mxu0 0.0
        %897 = vmatprep.subr.mxu0 0.0
        %898 = vmatpush1.msra.mxu0 0.0
        %899 = vmatprep.subr.mxu0 0.0
        %900 = vmatpush1.msra.mxu0 0.0
        %901 = vmatprep.subr.mxu0 0.0
        %902 = vmatpush1.msra.mxu0 0.0
        %903 = vmatprep.subr.mxu0 0.0
        %904 = vmatpush1.msra.mxu0 0.0
        %905 = vmatprep.subr.mxu0 0.0
        %906 = vmatpush1.msra.mxu0 0.0
        %907 = vmatprep.subr.mxu0 0.0
        %908 = vmatpush1.msra.mxu0 0.0
        %909 = vmatprep.subr.mxu0 0.0
        %910 = vmatpush1.msra.mxu0 0.0
        %911 = vmatprep.subr.mxu0 0.0
        %912 = vmatpush1.msra.mxu0 0.0
        %913 = vmatprep.subr.mxu0 0.0
        %914 = vmatpush1.msra.mxu0 0.0
        %915 = vmatprep.subr.mxu0 0.0
        %916 = vmatpush1.msra.mxu0 0.0
        %917 = vmatprep.subr.mxu0 0.0
        %918 = vmatpush1.msra.mxu0 0.0
        %919 = vmatprep.subr.mxu0 0.0
        %920 = vmatpush1.msra.mxu0 0.0
        %921 = vmatprep.subr.mxu0 0.0
        %922 = vmatpush1.msra.mxu0 0.0
        %923 = vmatprep.subr.mxu0 0.0
        %924 = vmatpush1.msra.mxu0 0.0
        %925 = vmatprep.subr.mxu0 0.0
        %926 = vmatpush1.msra.mxu0 0.0
        %927 = vmatprep.subr.mxu0 0.0
        %928 = vmatpush1.msra.mxu0 0.0
        %929 = vmatprep.subr.mxu0 0.0
        %930 = vmatpush1.msra.mxu0 0.0
        %931 = vmatprep.subr.mxu0 0.0
        %932 = vmatpush1.msra.mxu0 0.0
        %933 = vmatprep.subr.mxu0 0.0
        %934 = vmatpush1.msra.mxu0 0.0
        %935 = vmatprep.subr.mxu0 0.0
        %936 = vmatpush1.msra.mxu0 0.0
        %937 = vmatprep.subr.mxu0 0.0
        %938 = vmatpush1.msra.mxu0 0.0
        %939 = vmatprep.subr.mxu0 0.0
        %940 = vmatpush1.msra.mxu0 0.0
        %941 = vmatprep.mubr.f32.mxu0 0.0
        %942 = vmatmul.mubr.f32.gmra.mrb[0].mxu0 %v875
        %v943 = vpop.f32.mrb[0].mxu0
        %v944 = vadd.f32 0.0, %v943
        %v945 = vpop.f32.mrb[0].mxu0
        %946 = vdwg.mxu0
        %947 = vrot.lane.b32.xlu0 %v703, 120
        %v948 = vpop.permute.xlu0 %947
        %949 = vrot.lane.b32.xlu0 %v779, 120
        %v950 = vpop.permute.xlu0 %949
        %v951 = vsel %vm782, %v948, 0
        %v953 = vsel %vm782, %v950, 0
        %955 = vmatprep.subr.mxu0 0.0
        %956 = vmatpush1.xpose.msra.mxu0 %v953
        %957 = vmatprep.subr.mxu0 0.0
        %958 = vmatpush1.xpose.msra.mxu0 0.0
        %959 = vmatprep.subr.mxu0 0.0
        %960 = vmatpush1.xpose.msra.mxu0 0.0
        %961 = vmatprep.subr.mxu0 0.0
        %962 = vmatpush1.xpose.msra.mxu0 0.0
        %963 = vmatprep.subr.mxu0 0.0
        %964 = vmatpush1.xpose.msra.mxu0 0.0
        %965 = vmatprep.subr.mxu0 0.0
        %966 = vmatpush1.xpose.msra.mxu0 0.0
        %967 = vmatprep.subr.mxu0 0.0
        %968 = vmatpush1.xpose.msra.mxu0 0.0
        %969 = vmatprep.subr.mxu0 0.0
        %970 = vmatpush1.xpose.msra.mxu0 0.0
        %971 = vmatprep.subr.mxu0 0.0
        %972 = vmatpush1.xpose.msra.mxu0 0.0
        %973 = vmatprep.subr.mxu0 0.0
        %974 = vmatpush1.xpose.msra.mxu0 0.0
        %975 = vmatprep.subr.mxu0 0.0
        %976 = vmatpush1.xpose.msra.mxu0 0.0
        %977 = vmatprep.subr.mxu0 0.0
        %978 = vmatpush1.xpose.msra.mxu0 0.0
        %979 = vmatprep.subr.mxu0 0.0
        %980 = vmatpush1.xpose.msra.mxu0 0.0
        %981 = vmatprep.subr.mxu0 0.0
        %982 = vmatpush1.xpose.msra.mxu0 0.0
        %983 = vmatprep.subr.mxu0 0.0
        %984 = vmatpush1.xpose.msra.mxu0 0.0
        %985 = vmatprep.subr.mxu0 0.0
        %986 = vmatpush1.xpose.msra.mxu0 0.0
        %987 = vmatprep.subr.mxu0 0.0
        %988 = vmatpush1.xpose.msra.mxu0 0.0
        %989 = vmatprep.subr.mxu0 0.0
        %990 = vmatpush1.xpose.msra.mxu0 0.0
        %991 = vmatprep.subr.mxu0 0.0
        %992 = vmatpush1.xpose.msra.mxu0 0.0
        %993 = vmatprep.subr.mxu0 0.0
        %994 = vmatpush1.xpose.msra.mxu0 0.0
        %995 = vmatprep.subr.mxu0 0.0
        %996 = vmatpush1.xpose.msra.mxu0 0.0
        %997 = vmatprep.subr.mxu0 0.0
        %998 = vmatpush1.xpose.msra.mxu0 0.0
        %999 = vmatprep.subr.mxu0 0.0
        %1000 = vmatpush1.xpose.msra.mxu0 0.0
        %1001 = vmatprep.subr.mxu0 0.0
        %1002 = vmatpush1.xpose.msra.mxu0 0.0
        %1003 = vmatprep.subr.mxu0 0.0
        %1004 = vmatpush1.xpose.msra.mxu0 0.0
        %1005 = vmatprep.subr.mxu0 0.0
        %1006 = vmatpush1.xpose.msra.mxu0 0.0
        %1007 = vmatprep.subr.mxu0 0.0
        %1008 = vmatpush1.xpose.msra.mxu0 0.0
        %1009 = vmatprep.subr.mxu0 0.0
        %1010 = vmatpush1.xpose.msra.mxu0 0.0
        %1011 = vmatprep.subr.mxu0 0.0
        %1012 = vmatpush1.xpose.msra.mxu0 0.0
        %1013 = vmatprep.subr.mxu0 0.0
        %1014 = vmatpush1.xpose.msra.mxu0 0.0
        %1015 = vmatprep.subr.mxu0 0.0
        %1016 = vmatpush1.xpose.msra.mxu0 0.0
        %1017 = vmatprep.subr.mxu0 0.0
        %1018 = vmatpush1.xpose.msra.mxu0 0.0
        %1019 = vmatprep.mubr.f32.mxu0 0.0
        %1020 = vmatmul.mubr.f32.gmra.mrb[0].mxu0 %v951
        %v1021 = vpop.f32.mrb[0].mxu0
        %v1022 = vadd.f32 0.0, %v1021
        %v1023 = vpop.f32.mrb[0].mxu0
        %1024 = vdwg.mxu0
        %v1025 = vmul.f32 %v1022, 0.35355338
        %v1026 = vsel %vm782, %v1025, -inf
        %1027 = vmax.xlane.f32.xlu0 %v1026
        %v1028 = vpop.xlane.xlu0 %1027
        %v1029 = vsub.f32 %v1025, %v1028
        %v1030 = vmul.f32 %v1029, 1.442695
        %v1031 = vpow.pop %v1030
        %v1032 = vsel %vm782, %v1031, 0.0
        %1033 = vadd.xlane.f32.xlu0 %v1032
        %v1034 = vpop.xlane.xlu0 %1033
        %v1035 = vrcp.pop %v1034
        %v1036 = vmul.f32 %v1031, %v1035
        %1037 = vrot.lane.b32.xlu0 %v779, 88
        %v1038 = vpop.permute.xlu0 %1037
        %v1041 = vsel %vm782, %v1036, 0
        %1043 = vmatprep.subr.mxu0 0.0
        %1044 = vmatpush1.msra.mxu0 %v1038
        %1045 = vmatprep.subr.mxu0 0.0
        %1046 = vmatpush1.msra.mxu0 0.0
        %1047 = vmatprep.subr.mxu0 0.0
        %1048 = vmatpush1.msra.mxu0 0.0
        %1049 = vmatprep.subr.mxu0 0.0
        %1050 = vmatpush1.msra.mxu0 0.0
        %1051 = vmatprep.subr.mxu0 0.0
        %1052 = vmatpush1.msra.mxu0 0.0
        %1053 = vmatprep.subr.mxu0 0.0
        %1054 = vmatpush1.msra.mxu0 0.0
        %1055 = vmatprep.subr.mxu0 0.0
        %1056 = vmatpush1.msra.mxu0 0.0
        %1057 = vmatprep.subr.mxu0 0.0
        %1058 = vmatpush1.msra.mxu0 0.0
        %1059 = vmatprep.subr.mxu0 0.0
        %1060 = vmatpush1.msra.mxu0 0.0
        %1061 = vmatprep.subr.mxu0 0.0
        %1062 = vmatpush1.msra.mxu0 0.0
        %1063 = vmatprep.subr.mxu0 0.0
        %1064 = vmatpush1.msra.mxu0 0.0
        %1065 = vmatprep.subr.mxu0 0.0
        %1066 = vmatpush1.msra.mxu0 0.0
        %1067 = vmatprep.subr.mxu0 0.0
        %1068 = vmatpush1.msra.mxu0 0.0
        %1069 = vmatprep.subr.mxu0 0.0
        %1070 = vmatpush1.msra.mxu0 0.0
        %1071 = vmatprep.subr.mxu0 0.0
        %1072 = vmatpush1.msra.mxu0 0.0
        %1073 = vmatprep.subr.mxu0 0.0
        %1074 = vmatpush1.msra.mxu0 0.0
        %1075 = vmatprep.subr.mxu0 0.0
        %1076 = vmatpush1.msra.mxu0 0.0
        %1077 = vmatprep.subr.mxu0 0.0
        %1078 = vmatpush1.msra.mxu0 0.0
        %1079 = vmatprep.subr.mxu0 0.0
        %1080 = vmatpush1.msra.mxu0 0.0
        %1081 = vmatprep.subr.mxu0 0.0
        %1082 = vmatpush1.msra.mxu0 0.0
        %1083 = vmatprep.subr.mxu0 0.0
        %1084 = vmatpush1.msra.mxu0 0.0
        %1085 = vmatprep.subr.mxu0 0.0
        %1086 = vmatpush1.msra.mxu0 0.0
        %1087 = vmatprep.subr.mxu0 0.0
        %1088 = vmatpush1.msra.mxu0 0.0
        %1089 = vmatprep.subr.mxu0 0.0
        %1090 = vmatpush1.msra.mxu0 0.0
        %1091 = vmatprep.subr.mxu0 0.0
        %1092 = vmatpush1.msra.mxu0 0.0
        %1093 = vmatprep.subr.mxu0 0.0
        %1094 = vmatpush1.msra.mxu0 0.0
        %1095 = vmatprep.subr.mxu0 0.0
        %1096 = vmatpush1.msra.mxu0 0.0
        %1097 = vmatprep.subr.mxu0 0.0
        %1098 = vmatpush1.msra.mxu0 0.0
        %1099 = vmatprep.subr.mxu0 0.0
        %1100 = vmatpush1.msra.mxu0 0.0
        %1101 = vmatprep.subr.mxu0 0.0
        %1102 = vmatpush1.msra.mxu0 0.0
        %1103 = vmatprep.subr.mxu0 0.0
        %1104 = vmatpush1.msra.mxu0 0.0
        %1105 = vmatprep.subr.mxu0 0.0
        %1106 = vmatpush1.msra.mxu0 0.0
        %1107 = vmatprep.mubr.f32.mxu0 0.0
        %1108 = vmatmul.mubr.f32.gmra.mrb[0].mxu0 %v1041
        %v1109 = vpop.f32.mrb[0].mxu0
        %v1110 = vadd.f32 0.0, %v1109
        %v1111 = vpop.f32.mrb[0].mxu0
        %1112 = vdwg.mxu0
        %1113 = vrot.lane.b32.xlu0 %v703, 112
        %v1114 = vpop.permute.xlu0 %1113
        %1115 = vrot.lane.b32.xlu0 %v779, 112
        %v1116 = vpop.permute.xlu0 %1115
        %v1117 = vsel %vm782, %v1114, 0
        %v1119 = vsel %vm782, %v1116, 0
        %1121 = vmatprep.subr.mxu0 0.0
        %1122 = vmatpush1.xpose.msra.mxu0 %v1119
        %1123 = vmatprep.subr.mxu0 0.0
        %1124 = vmatpush1.xpose.msra.mxu0 0.0
        %1125 = vmatprep.subr.mxu0 0.0
        %1126 = vmatpush1.xpose.msra.mxu0 0.0
        %1127 = vmatprep.subr.mxu0 0.0
        %1128 = vmatpush1.xpose.msra.mxu0 0.0
        %1129 = vmatprep.subr.mxu0 0.0
        %1130 = vmatpush1.xpose.msra.mxu0 0.0
        %1131 = vmatprep.subr.mxu0 0.0
        %1132 = vmatpush1.xpose.msra.mxu0 0.0
        %1133 = vmatprep.subr.mxu0 0.0
        %1134 = vmatpush1.xpose.msra.mxu0 0.0
        %1135 = vmatprep.subr.mxu0 0.0
        %1136 = vmatpush1.xpose.msra.mxu0 0.0
        %1137 = vmatprep.subr.mxu0 0.0
        %1138 = vmatpush1.xpose.msra.mxu0 0.0
        %1139 = vmatprep.subr.mxu0 0.0
        %1140 = vmatpush1.xpose.msra.mxu0 0.0
        %1141 = vmatprep.subr.mxu0 0.0
        %1142 = vmatpush1.xpose.msra.mxu0 0.0
        %1143 = vmatprep.subr.mxu0 0.0
        %1144 = vmatpush1.xpose.msra.mxu0 0.0
        %1145 = vmatprep.subr.mxu0 0.0
        %1146 = vmatpush1.xpose.msra.mxu0 0.0
        %1147 = vmatprep.subr.mxu0 0.0
        %1148 = vmatpush1.xpose.msra.mxu0 0.0
        %1149 = vmatprep.subr.mxu0 0.0
        %1150 = vmatpush1.xpose.msra.mxu0 0.0
        %1151 = vmatprep.subr.mxu0 0.0
        %1152 = vmatpush1.xpose.msra.mxu0 0.0
        %1153 = vmatprep.subr.mxu0 0.0
        %1154 = vmatpush1.xpose.msra.mxu0 0.0
        %1155 = vmatprep.subr.mxu0 0.0
        %1156 = vmatpush1.xpose.msra.mxu0 0.0
        %1157 = vmatprep.subr.mxu0 0.0
        %1158 = vmatpush1.xpose.msra.mxu0 0.0
        %1159 = vmatprep.subr.mxu0 0.0
        %1160 = vmatpush1.xpose.msra.mxu0 0.0
        %1161 = vmatprep.subr.mxu0 0.0
        %1162 = vmatpush1.xpose.msra.mxu0 0.0
        %1163 = vmatprep.subr.mxu0 0.0
        %1164 = vmatpush1.xpose.msra.mxu0 0.0
        %1165 = vmatprep.subr.mxu0 0.0
        %1166 = vmatpush1.xpose.msra.mxu0 0.0
        %1167 = vmatprep.subr.mxu0 0.0
        %1168 = vmatpush1.xpose.msra.mxu0 0.0
        %1169 = vmatprep.subr.mxu0 0.0
        %1170 = vmatpush1.xpose.msra.mxu0 0.0
        %1171 = vmatprep.subr.mxu0 0.0
        %1172 = vmatpush1.xpose.msra.mxu0 0.0
        %1173 = vmatprep.subr.mxu0 0.0
        %1174 = vmatpush1.xpose.msra.mxu0 0.0
        %1175 = vmatprep.subr.mxu0 0.0
        %1176 = vmatpush1.xpose.msra.mxu0 0.0
        %1177 = vmatprep.subr.mxu0 0.0
        %1178 = vmatpush1.xpose.msra.mxu0 0.0
        %1179 = vmatprep.subr.mxu0 0.0
        %1180 = vmatpush1.xpose.msra.mxu0 0.0
        %1181 = vmatprep.subr.mxu0 0.0
        %1182 = vmatpush1.xpose.msra.mxu0 0.0
        %1183 = vmatprep.subr.mxu0 0.0
        %1184 = vmatpush1.xpose.msra.mxu0 0.0
        %1185 = vmatprep.mubr.f32.mxu0 0.0
        %1186 = vmatmul.mubr.f32.gmra.mrb[0].mxu0 %v1117
        %v1187 = vpop.f32.mrb[0].mxu0
        %v1188 = vadd.f32 0.0, %v1187
        %v1189 = vpop.f32.mrb[0].mxu0
        %1190 = vdwg.mxu0
        %v1191 = vmul.f32 %v1188, 0.35355338
        %v1192 = vsel %vm782, %v1191, -inf
        %1193 = vmax.xlane.f32.xlu0 %v1192
        %v1194 = vpop.xlane.xlu0 %1193
        %v1195 = vsub.f32 %v1191, %v1194
        %v1196 = vmul.f32 %v1195, 1.442695
        %v1197 = vpow.pop %v1196
        %v1198 = vsel %vm782, %v1197, 0.0
        %1199 = vadd.xlane.f32.xlu0 %v1198
        %v1200 = vpop.xlane.xlu0 %1199
        %v1201 = vrcp.pop %v1200
        %v1202 = vmul.f32 %v1197, %v1201
        %1203 = vrot.lane.b32.xlu0 %v779, 80
        %v1204 = vpop.permute.xlu0 %1203
        %v1207 = vsel %vm782, %v1202, 0
        %1209 = vmatprep.subr.mxu0 0.0
        %1210 = vmatpush1.msra.mxu0 %v1204
        %1211 = vmatprep.subr.mxu0 0.0
        %1212 = vmatpush1.msra.mxu0 0.0
        %1213 = vmatprep.subr.mxu0 0.0
        %1214 = vmatpush1.msra.mxu0 0.0
        %1215 = vmatprep.subr.mxu0 0.0
        %1216 = vmatpush1.msra.mxu0 0.0
        %1217 = vmatprep.subr.mxu0 0.0
        %1218 = vmatpush1.msra.mxu0 0.0
        %1219 = vmatprep.subr.mxu0 0.0
        %1220 = vmatpush1.msra.mxu0 0.0
        %1221 = vmatprep.subr.mxu0 0.0
        %1222 = vmatpush1.msra.mxu0 0.0
        %1223 = vmatprep.subr.mxu0 0.0
        %1224 = vmatpush1.msra.mxu0 0.0
        %1225 = vmatprep.subr.mxu0 0.0
        %1226 = vmatpush1.msra.mxu0 0.0
        %1227 = vmatprep.subr.mxu0 0.0
        %1228 = vmatpush1.msra.mxu0 0.0
        %1229 = vmatprep.subr.mxu0 0.0
        %1230 = vmatpush1.msra.mxu0 0.0
        %1231 = vmatprep.subr.mxu0 0.0
        %1232 = vmatpush1.msra.mxu0 0.0
        %1233 = vmatprep.subr.mxu0 0.0
        %1234 = vmatpush1.msra.mxu0 0.0
        %1235 = vmatprep.subr.mxu0 0.0
        %1236 = vmatpush1.msra.mxu0 0.0
        %1237 = vmatprep.subr.mxu0 0.0
        %1238 = vmatpush1.msra.mxu0 0.0
        %1239 = vmatprep.subr.mxu0 0.0
        %1240 = vmatpush1.msra.mxu0 0.0
        %1241 = vmatprep.subr.mxu0 0.0
        %1242 = vmatpush1.msra.mxu0 0.0
        %1243 = vmatprep.subr.mxu0 0.0
        %1244 = vmatpush1.msra.mxu0 0.0
        %1245 = vmatprep.subr.mxu0 0.0
        %1246 = vmatpush1.msra.mxu0 0.0
        %1247 = vmatprep.subr.mxu0 0.0
        %1248 = vmatpush1.msra.mxu0 0.0
        %1249 = vmatprep.subr.mxu0 0.0
        %1250 = vmatpush1.msra.mxu0 0.0
        %1251 = vmatprep.subr.mxu0 0.0
        %1252 = vmatpush1.msra.mxu0 0.0
        %1253 = vmatprep.subr.mxu0 0.0
        %1254 = vmatpush1.msra.mxu0 0.0
        %1255 = vmatprep.subr.mxu0 0.0
        %1256 = vmatpush1.msra.mxu0 0.0
        %1257 = vmatprep.subr.mxu0 0.0
        %1258 = vmatpush1.msra.mxu0 0.0
        %1259 = vmatprep.subr.mxu0 0.0
        %1260 = vmatpush1.msra.mxu0 0.0
        %1261 = vmatprep.subr.mxu0 0.0
        %1262 = vmatpush1.msra.mxu0 0.0
        %1263 = vmatprep.subr.mxu0 0.0
        %1264 = vmatpush1.msra.mxu0 0.0
        %1265 = vmatprep.subr.mxu0 0.0
        %1266 = vmatpush1.msra.mxu0 0.0
        %1267 = vmatprep.subr.mxu0 0.0
        %1268 = vmatpush1.msra.mxu0 0.0
        %1269 = vmatprep.subr.mxu0 0.0
        %1270 = vmatpush1.msra.mxu0 0.0
        %1271 = vmatprep.subr.mxu0 0.0
        %1272 = vmatpush1.msra.mxu0 0.0
        %1273 = vmatprep.mubr.f32.mxu0 0.0
        %1274 = vmatmul.mubr.f32.gmra.mrb[0].mxu0 %v1207
        %v1275 = vpop.f32.mrb[0].mxu0
        %v1276 = vadd.f32 0.0, %v1275
        %v1277 = vpop.f32.mrb[0].mxu0
        %1278 = vdwg.mxu0
        %1279 = vrot.lane.b32.xlu0 %v703, 104
        %v1280 = vpop.permute.xlu0 %1279
        %1281 = vrot.lane.b32.xlu0 %v779, 104
        %v1282 = vpop.permute.xlu0 %1281
        %v1283 = vsel %vm782, %v1280, 0
        %v1285 = vsel %vm782, %v1282, 0
        %1287 = vmatprep.subr.mxu0 0.0
        %1288 = vmatpush1.xpose.msra.mxu0 %v1285
        %1289 = vmatprep.subr.mxu0 0.0
        %1290 = vmatpush1.xpose.msra.mxu0 0.0
        %1291 = vmatprep.subr.mxu0 0.0
        %1292 = vmatpush1.xpose.msra.mxu0 0.0
        %1293 = vmatprep.subr.mxu0 0.0
        %1294 = vmatpush1.xpose.msra.mxu0 0.0
        %1295 = vmatprep.subr.mxu0 0.0
        %1296 = vmatpush1.xpose.msra.mxu0 0.0
        %1297 = vmatprep.subr.mxu0 0.0
        %1298 = vmatpush1.xpose.msra.mxu0 0.0
        %1299 = vmatprep.subr.mxu0 0.0
        %1300 = vmatpush1.xpose.msra.mxu0 0.0
        %1301 = vmatprep.subr.mxu0 0.0
        %1302 = vmatpush1.xpose.msra.mxu0 0.0
        %1303 = vmatprep.subr.mxu0 0.0
        %1304 = vmatpush1.xpose.msra.mxu0 0.0
        %1305 = vmatprep.subr.mxu0 0.0
        %1306 = vmatpush1.xpose.msra.mxu0 0.0
        %1307 = vmatprep.subr.mxu0 0.0
        %1308 = vmatpush1.xpose.msra.mxu0 0.0
        %1309 = vmatprep.subr.mxu0 0.0
        %1310 = vmatpush1.xpose.msra.mxu0 0.0
        %1311 = vmatprep.subr.mxu0 0.0
        %1312 = vmatpush1.xpose.msra.mxu0 0.0
        %1313 = vmatprep.subr.mxu0 0.0
        %1314 = vmatpush1.xpose.msra.mxu0 0.0
        %1315 = vmatprep.subr.mxu0 0.0
        %1316 = vmatpush1.xpose.msra.mxu0 0.0
        %1317 = vmatprep.subr.mxu0 0.0
        %1318 = vmatpush1.xpose.msra.mxu0 0.0
        %1319 = vmatprep.subr.mxu0 0.0
        %1320 = vmatpush1.xpose.msra.mxu0 0.0
        %1321 = vmatprep.subr.mxu0 0.0
        %1322 = vmatpush1.xpose.msra.mxu0 0.0
        %1323 = vmatprep.subr.mxu0 0.0
        %1324 = vmatpush1.xpose.msra.mxu0 0.0
        %1325 = vmatprep.subr.mxu0 0.0
        %1326 = vmatpush1.xpose.msra.mxu0 0.0
        %1327 = vmatprep.subr.mxu0 0.0
        %1328 = vmatpush1.xpose.msra.mxu0 0.0
        %1329 = vmatprep.subr.mxu0 0.0
        %1330 = vmatpush1.xpose.msra.mxu0 0.0
        %1331 = vmatprep.subr.mxu0 0.0
        %1332 = vmatpush1.xpose.msra.mxu0 0.0
        %1333 = vmatprep.subr.mxu0 0.0
        %1334 = vmatpush1.xpose.msra.mxu0 0.0
        %1335 = vmatprep.subr.mxu0 0.0
        %1336 = vmatpush1.xpose.msra.mxu0 0.0
        %1337 = vmatprep.subr.mxu0 0.0
        %1338 = vmatpush1.xpose.msra.mxu0 0.0
        %1339 = vmatprep.subr.mxu0 0.0
        %1340 = vmatpush1.xpose.msra.mxu0 0.0
        %1341 = vmatprep.subr.mxu0 0.0
        %1342 = vmatpush1.xpose.msra.mxu0 0.0
        %1343 = vmatprep.subr.mxu0 0.0
        %1344 = vmatpush1.xpose.msra.mxu0 0.0
        %1345 = vmatprep.subr.mxu0 0.0
        %1346 = vmatpush1.xpose.msra.mxu0 0.0
        %1347 = vmatprep.subr.mxu0 0.0
        %1348 = vmatpush1.xpose.msra.mxu0 0.0
        %1349 = vmatprep.subr.mxu0 0.0
        %1350 = vmatpush1.xpose.msra.mxu0 0.0
        %1351 = vmatprep.mubr.f32.mxu0 0.0
        %1352 = vmatmul.mubr.f32.gmra.mrb[0].mxu0 %v1283
        %v1353 = vpop.f32.mrb[0].mxu0
        %v1354 = vadd.f32 0.0, %v1353
        %v1355 = vpop.f32.mrb[0].mxu0
        %1356 = vdwg.mxu0
        %v1357 = vmul.f32 %v1354, 0.35355338
        %v1358 = vsel %vm782, %v1357, -inf
        %1359 = vmax.xlane.f32.xlu0 %v1358
        %v1360 = vpop.xlane.xlu0 %1359
        %v1361 = vsub.f32 %v1357, %v1360
        %v1362 = vmul.f32 %v1361, 1.442695
        %v1363 = vpow.pop %v1362
        %v1364 = vsel %vm782, %v1363, 0.0
        %1365 = vadd.xlane.f32.xlu0 %v1364
        %v1366 = vpop.xlane.xlu0 %1365
        %v1367 = vrcp.pop %v1366
        %v1368 = vmul.f32 %v1363, %v1367
        %1369 = vrot.lane.b32.xlu0 %v779, 72
        %v1370 = vpop.permute.xlu0 %1369
        %v1373 = vsel %vm782, %v1368, 0
        %1375 = vmatprep.subr.mxu0 0.0
        %1376 = vmatpush1.msra.mxu0 %v1370
        %1377 = vmatprep.subr.mxu0 0.0
        %1378 = vmatpush1.msra.mxu0 0.0
        %1379 = vmatprep.subr.mxu0 0.0
        %1380 = vmatpush1.msra.mxu0 0.0
        %1381 = vmatprep.subr.mxu0 0.0
        %1382 = vmatpush1.msra.mxu0 0.0
        %1383 = vmatprep.subr.mxu0 0.0
        %1384 = vmatpush1.msra.mxu0 0.0
        %1385 = vmatprep.subr.mxu0 0.0
        %1386 = vmatpush1.msra.mxu0 0.0
        %1387 = vmatprep.subr.mxu0 0.0
        %1388 = vmatpush1.msra.mxu0 0.0
        %1389 = vmatprep.subr.mxu0 0.0
        %1390 = vmatpush1.msra.mxu0 0.0
        %1391 = vmatprep.subr.mxu0 0.0
        %1392 = vmatpush1.msra.mxu0 0.0
        %1393 = vmatprep.subr.mxu0 0.0
        %1394 = vmatpush1.msra.mxu0 0.0
        %1395 = vmatprep.subr.mxu0 0.0
        %1396 = vmatpush1.msra.mxu0 0.0
        %1397 = vmatprep.subr.mxu0 0.0
        %1398 = vmatpush1.msra.mxu0 0.0
        %1399 = vmatprep.subr.mxu0 0.0
        %1400 = vmatpush1.msra.mxu0 0.0
        %1401 = vmatprep.subr.mxu0 0.0
        %1402 = vmatpush1.msra.mxu0 0.0
        %1403 = vmatprep.subr.mxu0 0.0
        %1404 = vmatpush1.msra.mxu0 0.0
        %1405 = vmatprep.subr.mxu0 0.0
        %1406 = vmatpush1.msra.mxu0 0.0
        %1407 = vmatprep.subr.mxu0 0.0
        %1408 = vmatpush1.msra.mxu0 0.0
        %1409 = vmatprep.subr.mxu0 0.0
        %1410 = vmatpush1.msra.mxu0 0.0
        %1411 = vmatprep.subr.mxu0 0.0
        %1412 = vmatpush1.msra.mxu0 0.0
        %1413 = vmatprep.subr.mxu0 0.0
        %1414 = vmatpush1.msra.mxu0 0.0
        %1415 = vmatprep.subr.mxu0 0.0
        %1416 = vmatpush1.msra.mxu0 0.0
        %1417 = vmatprep.subr.mxu0 0.0
        %1418 = vmatpush1.msra.mxu0 0.0
        %1419 = vmatprep.subr.mxu0 0.0
        %1420 = vmatpush1.msra.mxu0 0.0
        %1421 = vmatprep.subr.mxu0 0.0
        %1422 = vmatpush1.msra.mxu0 0.0
        %1423 = vmatprep.subr.mxu0 0.0
        %1424 = vmatpush1.msra.mxu0 0.0
        %1425 = vmatprep.subr.mxu0 0.0
        %1426 = vmatpush1.msra.mxu0 0.0
        %1427 = vmatprep.subr.mxu0 0.0
        %1428 = vmatpush1.msra.mxu0 0.0
        %1429 = vmatprep.subr.mxu0 0.0
        %1430 = vmatpush1.msra.mxu0 0.0
        %1431 = vmatprep.subr.mxu0 0.0
        %1432 = vmatpush1.msra.mxu0 0.0
        %1433 = vmatprep.subr.mxu0 0.0
        %1434 = vmatpush1.msra.mxu0 0.0
        %1435 = vmatprep.subr.mxu0 0.0
        %1436 = vmatpush1.msra.mxu0 0.0
        %1437 = vmatprep.subr.mxu0 0.0
        %1438 = vmatpush1.msra.mxu0 0.0
        %1439 = vmatprep.mubr.f32.mxu0 0.0
        %1440 = vmatmul.mubr.f32.gmra.mrb[0].mxu0 %v1373
        %v1441 = vpop.f32.mrb[0].mxu0
        %v1442 = vadd.f32 0.0, %v1441
        %v1443 = vpop.f32.mrb[0].mxu0
        %1444 = vdwg.mxu0
        %1446 = vrot.lane.b32.xlu0 %v1110, 8
        %v1447 = vpop.permute.xlu0 %1446
        %1450 = vrot.lane.b32.xlu0 %v1276, 16
        %v1451 = vpop.permute.xlu0 %1450
        %1454 = vrot.lane.b32.xlu0 %v1442, 24
        %v1455 = vpop.permute.xlu0 %1454
        %v1457 = vsel %vm782, %v944, %v1447
        %vm1458 = vcmask 130048
        %v1459 = vsel %vm1458, %v1457, %v1451
        %vm1460 = vcmask 195584
        %v1461 = vsel %vm1460, %v1459, %v1455
        %v1463 = vlaneseq
        %v1464 = vshrl.u32 %v1463, 7
        %v1465 = vsub.s32 0, %v1464
        %v1466 = vrot.slane %v625, %v1465
        %v1469 = vsel %vm632, %v1461, 0
        %1471 = vmatprep.subr.mxu0 0.0
        %1472 = vmatpush1.msra.mxu0 %v621
        %1473 = vmatprep.subr.mxu0 0.0
        %1474 = vmatpush1.msra.mxu0 %v622
        %1475 = vmatprep.subr.mxu0 0.0
        %1476 = vmatpush1.msra.mxu0 %v623
        %1477 = vmatprep.subr.mxu0 0.0
        %1478 = vmatpush1.msra.mxu0 %v624
        %1479 = vmatprep.subr.mxu0 0.0
        %1480 = vmatpush1.msra.mxu0 0.0
        %1481 = vmatprep.subr.mxu0 0.0
        %1482 = vmatpush1.msra.mxu0 0.0
        %1483 = vmatprep.subr.mxu0 0.0
        %1484 = vmatpush1.msra.mxu0 0.0
        %1485 = vmatprep.subr.mxu0 0.0
        %1486 = vmatpush1.msra.mxu0 0.0
        %1487 = vmatprep.subr.mxu0 0.0
        %1488 = vmatpush1.msra.mxu0 0.0
        %1489 = vmatprep.subr.mxu0 0.0
        %1490 = vmatpush1.msra.mxu0 0.0
        %1491 = vmatprep.subr.mxu0 0.0
        %1492 = vmatpush1.msra.mxu0 0.0
        %1493 = vmatprep.subr.mxu0 0.0
        %1494 = vmatpush1.msra.mxu0 0.0
        %1495 = vmatprep.subr.mxu0 0.0
        %1496 = vmatpush1.msra.mxu0 0.0
        %1497 = vmatprep.subr.mxu0 0.0
        %1498 = vmatpush1.msra.mxu0 0.0
        %1499 = vmatprep.subr.mxu0 0.0
        %1500 = vmatpush1.msra.mxu0 0.0
        %1501 = vmatprep.subr.mxu0 0.0
        %1502 = vmatpush1.msra.mxu0 0.0
        %1503 = vmatprep.subr.mxu0 0.0
        %1504 = vmatpush1.msra.mxu0 0.0
        %1505 = vmatprep.subr.mxu0 0.0
        %1506 = vmatpush1.msra.mxu0 0.0
        %1507 = vmatprep.subr.mxu0 0.0
        %1508 = vmatpush1.msra.mxu0 0.0
        %1509 = vmatprep.subr.mxu0 0.0
        %1510 = vmatpush1.msra.mxu0 0.0
        %1511 = vmatprep.subr.mxu0 0.0
        %1512 = vmatpush1.msra.mxu0 0.0
        %1513 = vmatprep.subr.mxu0 0.0
        %1514 = vmatpush1.msra.mxu0 0.0
        %1515 = vmatprep.subr.mxu0 0.0
        %1516 = vmatpush1.msra.mxu0 0.0
        %1517 = vmatprep.subr.mxu0 0.0
        %1518 = vmatpush1.msra.mxu0 0.0
        %1519 = vmatprep.subr.mxu0 0.0
        %1520 = vmatpush1.msra.mxu0 0.0
        %1521 = vmatprep.subr.mxu0 0.0
        %1522 = vmatpush1.msra.mxu0 0.0
        %1523 = vmatprep.subr.mxu0 0.0
        %1524 = vmatpush1.msra.mxu0 0.0
        %1525 = vmatprep.subr.mxu0 0.0
        %1526 = vmatpush1.msra.mxu0 0.0
        %1527 = vmatprep.subr.mxu0 0.0
        %1528 = vmatpush1.msra.mxu0 0.0
        %1529 = vmatprep.subr.mxu0 0.0
        %1530 = vmatpush1.msra.mxu0 0.0
        %1531 = vmatprep.subr.mxu0 0.0
        %1532 = vmatpush1.msra.mxu0 0.0
        %1533 = vmatprep.subr.mxu0 0.0
        %1534 = vmatpush1.msra.mxu0 0.0
        %1535 = vmatprep.mubr.f32.mxu0 0.0
        %1536 = vmatmul.mubr.f32.gmra.mrb[0].mxu0 %v1469
        %v1537 = vpop.f32.mrb[0].mxu0
        %v1538 = vadd.f32 %v1466, %v1537
        %v1539 = vpop.f32.mrb[0].mxu0
        %1540 = vdwg.mxu0
        %v1541 = vld [vmem:[#allocation13] sm:$0xff]
        %v1542 = vld [vmem:[#allocation13 + $0x8] sm:$0xff]
        %v1543 = vld [vmem:[#allocation13 + $0x10] sm:$0xff]
        %v1544 = vld [vmem:[#allocation13 + $0x18] sm:$0xff]
        %v1545 = vld [vmem:[%s9] sm:$0xff]
        %v1546 = vld [vmem:[%s9 + $0x8] sm:$0xff]
        %v1547 = vld [vmem:[%s9 + $0x10] sm:$0xff]
        %v1548 = vld [vmem:[%s9 + $0x18] sm:$0xff]
        %v1549 = vld [vmem:[%s10] sm:$0x1]
        %v1550 = vld [vmem:[%s11] sm:$0x1]
        %v1551 = vld [vmem:[#allocation14] sm:$0xff]
        %v1552 = vld [vmem:[#allocation14 + $0x8] sm:$0xff]
        %v1553 = vld [vmem:[#allocation14 + $0x10] sm:$0xff]
        %v1554 = vld [vmem:[#allocation14 + $0x18] sm:$0xff]
        %v1555 = vld [vmem:[%s13] sm:$0x1]
        %v1557 = vlaneseq
        %v1558 = vshrl.u32 %v1557, 7
        %v1559 = vsub.s32 0, %v1558
        %v1560 = vrot.slane %v1549, %v1559
        %v1563 = vsel %vm632, %v1538, 0
        %1565 = vmatprep.subr.mxu0 0.0
        %1566 = vmatpush1.msra.mxu0 %v1541
        %1567 = vmatprep.subr.mxu0 0.0
        %1568 = vmatpush1.msra.mxu0 %v1542
        %1569 = vmatprep.subr.mxu0 0.0
        %1570 = vmatpush1.msra.mxu0 %v1543
        %1571 = vmatprep.subr.mxu0 0.0
        %1572 = vmatpush1.msra.mxu0 %v1544
        %1573 = vmatprep.subr.mxu0 0.0
        %1574 = vmatpush1.msra.mxu0 0.0
        %1575 = vmatprep.subr.mxu0 0.0
        %1576 = vmatpush1.msra.mxu0 0.0
        %1577 = vmatprep.subr.mxu0 0.0
        %1578 = vmatpush1.msra.mxu0 0.0
        %1579 = vmatprep.subr.mxu0 0.0
        %1580 = vmatpush1.msra.mxu0 0.0
        %1581 = vmatprep.subr.mxu0 0.0
        %1582 = vmatpush1.msra.mxu0 0.0
        %1583 = vmatprep.subr.mxu0 0.0
        %1584 = vmatpush1.msra.mxu0 0.0
        %1585 = vmatprep.subr.mxu0 0.0
        %1586 = vmatpush1.msra.mxu0 0.0
        %1587 = vmatprep.subr.mxu0 0.0
        %1588 = vmatpush1.msra.mxu0 0.0
        %1589 = vmatprep.subr.mxu0 0.0
        %1590 = vmatpush1.msra.mxu0 0.0
        %1591 = vmatprep.subr.mxu0 0.0
        %1592 = vmatpush1.msra.mxu0 0.0
        %1593 = vmatprep.subr.mxu0 0.0
        %1594 = vmatpush1.msra.mxu0 0.0
        %1595 = vmatprep.subr.mxu0 0.0
        %1596 = vmatpush1.msra.mxu0 0.0
        %1597 = vmatprep.subr.mxu0 0.0
        %1598 = vmatpush1.msra.mxu0 0.0
        %1599 = vmatprep.subr.mxu0 0.0
        %1600 = vmatpush1.msra.mxu0 0.0
        %1601 = vmatprep.subr.mxu0 0.0
        %1602 = vmatpush1.msra.mxu0 0.0
        %1603 = vmatprep.subr.mxu0 0.0
        %1604 = vmatpush1.msra.mxu0 0.0
        %1605 = vmatprep.subr.mxu0 0.0
        %1606 = vmatpush1.msra.mxu0 0.0
        %1607 = vmatprep.subr.mxu0 0.0
        %1608 = vmatpush1.msra.mxu0 0.0
        %1609 = vmatprep.subr.mxu0 0.0
        %1610 = vmatpush1.msra.mxu0 0.0
        %1611 = vmatprep.subr.mxu0 0.0
        %1612 = vmatpush1.msra.mxu0 0.0
        %1613 = vmatprep.subr.mxu0 0.0
        %1614 = vmatpush1.msra.mxu0 0.0
        %1615 = vmatprep.subr.mxu0 0.0
        %1616 = vmatpush1.msra.mxu0 0.0
        %1617 = vmatprep.subr.mxu0 0.0
        %1618 = vmatpush1.msra.mxu0 0.0
        %1619 = vmatprep.subr.mxu0 0.0
        %1620 = vmatpush1.msra.mxu0 0.0
        %1621 = vmatprep.subr.mxu0 0.0
        %1622 = vmatpush1.msra.mxu0 0.0
        %1623 = vmatprep.subr.mxu0 0.0
        %1624 = vmatpush1.msra.mxu0 0.0
        %1625 = vmatprep.subr.mxu0 0.0
        %1626 = vmatpush1.msra.mxu0 0.0
        %1627 = vmatprep.subr.mxu0 0.0
        %1628 = vmatpush1.msra.mxu0 0.0
        %1629 = vmatprep.mubr.f32.mxu0 0.0
        %1630 = vmatmul.mubr.f32.gmra.mrb[0].mxu0 %v1563
        %v1631 = vpop.f32.mrb[0].mxu0
        %v1632 = vadd.f32 %v1560, %v1631
        %v1633 = vpop.f32.mrb[0].mxu0
        %1634 = vdwg.mxu0
        %v1636 = vlaneseq
        %v1637 = vshrl.u32 %v1636, 7
        %v1638 = vsub.s32 0, %v1637
        %v1639 = vrot.slane %v1550, %v1638
        %v1642 = vsel %vm632, %v609, 0
        %v1645 = vsel %vm632, %v610, 0
        %1647 = vmatprep.subr.mxu0 0.0
        %1648 = vmatpush1.msra.mxu0 %v1545
        %1649 = vmatprep.subr.mxu0 0.0
        %1650 = vmatpush1.msra.mxu0 %v1546
        %1651 = vmatprep.subr.mxu0 0.0
        %1652 = vmatpush1.msra.mxu0 %v1547
        %1653 = vmatprep.subr.mxu0 0.0
        %1654 = vmatpush1.msra.mxu0 %v1548
        %1655 = vmatprep.subr.mxu0 0.0
        %1656 = vmatpush1.msra.mxu0 0.0
        %1657 = vmatprep.subr.mxu0 0.0
        %1658 = vmatpush1.msra.mxu0 0.0
        %1659 = vmatprep.subr.mxu0 0.0
        %1660 = vmatpush1.msra.mxu0 0.0
        %1661 = vmatprep.subr.mxu0 0.0
        %1662 = vmatpush1.msra.mxu0 0.0
        %1663 = vmatprep.subr.mxu0 0.0
        %1664 = vmatpush1.msra.mxu0 0.0
        %1665 = vmatprep.subr.mxu0 0.0
        %1666 = vmatpush1.msra.mxu0 0.0
        %1667 = vmatprep.subr.mxu0 0.0
        %1668 = vmatpush1.msra.mxu0 0.0
        %1669 = vmatprep.subr.mxu0 0.0
        %1670 = vmatpush1.msra.mxu0 0.0
        %1671 = vmatprep.subr.mxu0 0.0
        %1672 = vmatpush1.msra.mxu0 0.0
        %1673 = vmatprep.subr.mxu0 0.0
        %1674 = vmatpush1.msra.mxu0 0.0
        %1675 = vmatprep.subr.mxu0 0.0
        %1676 = vmatpush1.msra.mxu0 0.0
        %1677 = vmatprep.subr.mxu0 0.0
        %1678 = vmatpush1.msra.mxu0 0.0
        %1679 = vmatprep.subr.mxu0 0.0
        %1680 = vmatpush1.msra.mxu0 0.0
        %1681 = vmatprep.subr.mxu0 0.0
        %1682 = vmatpush1.msra.mxu0 0.0
        %1683 = vmatprep.subr.mxu0 0.0
        %1684 = vmatpush1.msra.mxu0 0.0
        %1685 = vmatprep.subr.mxu0 0.0
        %1686 = vmatpush1.msra.mxu0 0.0
        %1687 = vmatprep.subr.mxu0 0.0
        %1688 = vmatpush1.msra.mxu0 0.0
        %1689 = vmatprep.subr.mxu0 0.0
        %1690 = vmatpush1.msra.mxu0 0.0
        %1691 = vmatprep.subr.mxu0 0.0
        %1692 = vmatpush1.msra.mxu0 0.0
        %1693 = vmatprep.subr.mxu0 0.0
        %1694 = vmatpush1.msra.mxu0 0.0
        %1695 = vmatprep.subr.mxu0 0.0
        %1696 = vmatpush1.msra.mxu0 0.0
        %1697 = vmatprep.subr.mxu0 0.0
        %1698 = vmatpush1.msra.mxu0 0.0
        %1699 = vmatprep.subr.mxu0 0.0
        %1700 = vmatpush1.msra.mxu0 0.0
        %1701 = vmatprep.subr.mxu0 0.0
        %1702 = vmatpush1.msra.mxu0 0.0
        %1703 = vmatprep.subr.mxu0 0.0
        %1704 = vmatpush1.msra.mxu0 0.0
        %1705 = vmatprep.subr.mxu0 0.0
        %1706 = vmatpush1.msra.mxu0 0.0
        %1707 = vmatprep.subr.mxu0 0.0
        %1708 = vmatpush1.msra.mxu0 0.0
        %1709 = vmatprep.subr.mxu0 0.0
        %1710 = vmatpush1.msra.mxu0 0.0
        %1711 = vmatprep.mubr.f32.mxu0 0.0
        %1712 = vmatmul.mubr.f32.gmra.mrb[0].mxu0 %v1642
        %v1713 = vpop.f32.mrb[0].mxu0
        %v1714 = vadd.f32 %v1639, %v1713
        %v1715 = vpop.f32.mrb[0].mxu0
        %1716 = vmatprep.mubr.f32.mxu0 0.0
        %1717 = vmatmul.mubr.f32.gmra.mrb[0].mxu0 %v1645
        %v1718 = vpop.f32.mrb[0].mxu0
        %v1719 = vadd.f32 %v1639, %v1718
        %v1720 = vpop.f32.mrb[0].mxu0
        %1721 = vdwg.mxu0
        %v1723 = vsel %vm782, %v1632, 0
        %v1726 = vsel %vm782, %v1714, 0
        %v1729 = vsel %vm782, %v1719, 0
        %1731 = vmatprep.subr.mxu0 0.0
        %1732 = vmatpush1.xpose.msra.mxu0 %v1726
        %1733 = vmatprep.subr.mxu0 0.0
        %1734 = vmatpush1.xpose.msra.mxu0 %v1729
        %1735 = vmatprep.subr.mxu0 0.0
        %1736 = vmatpush1.xpose.msra.mxu0 0.0
        %1737 = vmatprep.subr.mxu0 0.0
        %1738 = vmatpush1.xpose.msra.mxu0 0.0
        %1739 = vmatprep.subr.mxu0 0.0
        %1740 = vmatpush1.xpose.msra.mxu0 0.0
        %1741 = vmatprep.subr.mxu0 0.0
        %1742 = vmatpush1.xpose.msra.mxu0 0.0
        %1743 = vmatprep.subr.mxu0 0.0
        %1744 = vmatpush1.xpose.msra.mxu0 0.0
        %1745 = vmatprep.subr.mxu0 0.0
        %1746 = vmatpush1.xpose.msra.mxu0 0.0
        %1747 = vmatprep.subr.mxu0 0.0
        %1748 = vmatpush1.xpose.msra.mxu0 0.0
        %1749 = vmatprep.subr.mxu0 0.0
        %1750 = vmatpush1.xpose.msra.mxu0 0.0
        %1751 = vmatprep.subr.mxu0 0.0
        %1752 = vmatpush1.xpose.msra.mxu0 0.0
        %1753 = vmatprep.subr.mxu0 0.0
        %1754 = vmatpush1.xpose.msra.mxu0 0.0
        %1755 = vmatprep.subr.mxu0 0.0
        %1756 = vmatpush1.xpose.msra.mxu0 0.0
        %1757 = vmatprep.subr.mxu0 0.0
        %1758 = vmatpush1.xpose.msra.mxu0 0.0
        %1759 = vmatprep.subr.mxu0 0.0
        %1760 = vmatpush1.xpose.msra.mxu0 0.0
        %1761 = vmatprep.subr.mxu0 0.0
        %1762 = vmatpush1.xpose.msra.mxu0 0.0
        %1763 = vmatprep.subr.mxu0 0.0
        %1764 = vmatpush1.xpose.msra.mxu0 0.0
        %1765 = vmatprep.subr.mxu0 0.0
        %1766 = vmatpush1.xpose.msra.mxu0 0.0
        %1767 = vmatprep.subr.mxu0 0.0
        %1768 = vmatpush1.xpose.msra.mxu0 0.0
        %1769 = vmatprep.subr.mxu0 0.0
        %1770 = vmatpush1.xpose.msra.mxu0 0.0
        %1771 = vmatprep.subr.mxu0 0.0
        %1772 = vmatpush1.xpose.msra.mxu0 0.0
        %1773 = vmatprep.subr.mxu0 0.0
        %1774 = vmatpush1.xpose.msra.mxu0 0.0
        %1775 = vmatprep.subr.mxu0 0.0
        %1776 = vmatpush1.xpose.msra.mxu0 0.0
        %1777 = vmatprep.subr.mxu0 0.0
        %1778 = vmatpush1.xpose.msra.mxu0 0.0
        %1779 = vmatprep.subr.mxu0 0.0
        %1780 = vmatpush1.xpose.msra.mxu0 0.0
        %1781 = vmatprep.subr.mxu0 0.0
        %1782 = vmatpush1.xpose.msra.mxu0 0.0
        %1783 = vmatprep.subr.mxu0 0.0
        %1784 = vmatpush1.xpose.msra.mxu0 0.0
        %1785 = vmatprep.subr.mxu0 0.0
        %1786 = vmatpush1.xpose.msra.mxu0 0.0
        %1787 = vmatprep.subr.mxu0 0.0
        %1788 = vmatpush1.xpose.msra.mxu0 0.0
        %1789 = vmatprep.subr.mxu0 0.0
        %1790 = vmatpush1.xpose.msra.mxu0 0.0
        %1791 = vmatprep.subr.mxu0 0.0
        %1792 = vmatpush1.xpose.msra.mxu0 0.0
        %1793 = vmatprep.subr.mxu0 0.0
        %1794 = vmatpush1.xpose.msra.mxu0 0.0
        %1795 = vmatprep.mubr.f32.mxu0 0.0
        %1796 = vmatmul.mubr.f32.gmra.mrb[0].mxu0 %v1723
        %v1797 = vpop.f32.mrb[0].mxu0
        %v1798 = vadd.f32 0.0, %v1797
        %v1799 = vpop.f32.mrb[0].mxu0
        %1800 = vdwg.mxu0
        %v1801 = vmul.f32 %v1798, 0.35355338
        %v1802 = vsel %vm1458, %v1801, -inf
        %1803 = vmax.xlane.f32.xlu0 %v1802
        %v1804 = vpop.xlane.xlu0 %1803
        %v1805 = vsub.f32 %v1801, %v1804
        %v1806 = vmul.f32 %v1805, 1.442695
        %v1807 = vpow.pop %v1806
        %v1808 = vsel %vm1458, %v1807, 0.0
        %1809 = vadd.xlane.f32.xlu0 %v1808
        %v1810 = vpop.xlane.xlu0 %1809
        %v1811 = vrcp.pop %v1810
        %v1812 = vmul.f32 %v1807, %v1811
        %1813 = vrot.lane.b32.xlu0 %v1714, 96
        %v1814 = vpop.permute.xlu0 %1813
        %1815 = vrot.lane.b32.xlu0 %v1719, 96
        %v1816 = vpop.permute.xlu0 %1815
        %v1820 = vsel %vm1458, %v1812, 0
        %1822 = vmatprep.subr.mxu0 0.0
        %1823 = vmatpush1.msra.mxu0 %v1814
        %1824 = vmatprep.subr.mxu0 0.0
        %1825 = vmatpush1.msra.mxu0 %v1816
        %1826 = vmatprep.subr.mxu0 0.0
        %1827 = vmatpush1.msra.mxu0 0.0
        %1828 = vmatprep.subr.mxu0 0.0
        %1829 = vmatpush1.msra.mxu0 0.0
        %1830 = vmatprep.subr.mxu0 0.0
        %1831 = vmatpush1.msra.mxu0 0.0
        %1832 = vmatprep.subr.mxu0 0.0
        %1833 = vmatpush1.msra.mxu0 0.0
        %1834 = vmatprep.subr.mxu0 0.0
        %1835 = vmatpush1.msra.mxu0 0.0
        %1836 = vmatprep.subr.mxu0 0.0
        %1837 = vmatpush1.msra.mxu0 0.0
        %1838 = vmatprep.subr.mxu0 0.0
        %1839 = vmatpush1.msra.mxu0 0.0
        %1840 = vmatprep.subr.mxu0 0.0
        %1841 = vmatpush1.msra.mxu0 0.0
        %1842 = vmatprep.subr.mxu0 0.0
        %1843 = vmatpush1.msra.mxu0 0.0
        %1844 = vmatprep.subr.mxu0 0.0
        %1845 = vmatpush1.msra.mxu0 0.0
        %1846 = vmatprep.subr.mxu0 0.0
        %1847 = vmatpush1.msra.mxu0 0.0
        %1848 = vmatprep.subr.mxu0 0.0
        %1849 = vmatpush1.msra.mxu0 0.0
        %1850 = vmatprep.subr.mxu0 0.0
        %1851 = vmatpush1.msra.mxu0 0.0
        %1852 = vmatprep.subr.mxu0 0.0
        %1853 = vmatpush1.msra.mxu0 0.0
        %1854 = vmatprep.subr.mxu0 0.0
        %1855 = vmatpush1.msra.mxu0 0.0
        %1856 = vmatprep.subr.mxu0 0.0
        %1857 = vmatpush1.msra.mxu0 0.0
        %1858 = vmatprep.subr.mxu0 0.0
        %1859 = vmatpush1.msra.mxu0 0.0
        %1860 = vmatprep.subr.mxu0 0.0
        %1861 = vmatpush1.msra.mxu0 0.0
        %1862 = vmatprep.subr.mxu0 0.0
        %1863 = vmatpush1.msra.mxu0 0.0
        %1864 = vmatprep.subr.mxu0 0.0
        %1865 = vmatpush1.msra.mxu0 0.0
        %1866 = vmatprep.subr.mxu0 0.0
        %1867 = vmatpush1.msra.mxu0 0.0
        %1868 = vmatprep.subr.mxu0 0.0
        %1869 = vmatpush1.msra.mxu0 0.0
        %1870 = vmatprep.subr.mxu0 0.0
        %1871 = vmatpush1.msra.mxu0 0.0
        %1872 = vmatprep.subr.mxu0 0.0
        %1873 = vmatpush1.msra.mxu0 0.0
        %1874 = vmatprep.subr.mxu0 0.0
        %1875 = vmatpush1.msra.mxu0 0.0
        %1876 = vmatprep.subr.mxu0 0.0
        %1877 = vmatpush1.msra.mxu0 0.0
        %1878 = vmatprep.subr.mxu0 0.0
        %1879 = vmatpush1.msra.mxu0 0.0
        %1880 = vmatprep.subr.mxu0 0.0
        %1881 = vmatpush1.msra.mxu0 0.0
        %1882 = vmatprep.subr.mxu0 0.0
        %1883 = vmatpush1.msra.mxu0 0.0
        %1884 = vmatprep.subr.mxu0 0.0
        %1885 = vmatpush1.msra.mxu0 0.0
        %1886 = vmatprep.mubr.f32.mxu0 0.0
        %1887 = vmatmul.mubr.f32.gmra.mrb[0].mxu0 %v1820
        %v1888 = vpop.f32.mrb[0].mxu0
        %v1889 = vadd.f32 0.0, %v1888
        %v1890 = vpop.f32.mrb[0].mxu0
        %1891 = vdwg.mxu0
        %1892 = vrot.lane.b32.xlu0 %v1632, 120
        %v1893 = vpop.permute.xlu0 %1892
        %1894 = vrot.lane.b32.xlu0 %v1714, 120
        %v1895 = vpop.permute.xlu0 %1894
        %1896 = vrot.lane.b32.xlu0 %v1719, 120
        %v1897 = vpop.permute.xlu0 %1896
        %v1898 = vsel %vm782, %v1893, 0
        %v1900 = vsel %vm782, %v1895, 0
        %v1902 = vsel %vm782, %v1897, 0
        %1904 = vmatprep.subr.mxu0 0.0
        %1905 = vmatpush1.xpose.msra.mxu0 %v1900
        %1906 = vmatprep.subr.mxu0 0.0
        %1907 = vmatpush1.xpose.msra.mxu0 %v1902
        %1908 = vmatprep.subr.mxu0 0.0
        %1909 = vmatpush1.xpose.msra.mxu0 0.0
        %1910 = vmatprep.subr.mxu0 0.0
        %1911 = vmatpush1.xpose.msra.mxu0 0.0
        %1912 = vmatprep.subr.mxu0 0.0
        %1913 = vmatpush1.xpose.msra.mxu0 0.0
        %1914 = vmatprep.subr.mxu0 0.0
        %1915 = vmatpush1.xpose.msra.mxu0 0.0
        %1916 = vmatprep.subr.mxu0 0.0
        %1917 = vmatpush1.xpose.msra.mxu0 0.0
        %1918 = vmatprep.subr.mxu0 0.0
        %1919 = vmatpush1.xpose.msra.mxu0 0.0
        %1920 = vmatprep.subr.mxu0 0.0
        %1921 = vmatpush1.xpose.msra.mxu0 0.0
        %1922 = vmatprep.subr.mxu0 0.0
        %1923 = vmatpush1.xpose.msra.mxu0 0.0
        %1924 = vmatprep.subr.mxu0 0.0
        %1925 = vmatpush1.xpose.msra.mxu0 0.0
        %1926 = vmatprep.subr.mxu0 0.0
        %1927 = vmatpush1.xpose.msra.mxu0 0.0
        %1928 = vmatprep.subr.mxu0 0.0
        %1929 = vmatpush1.xpose.msra.mxu0 0.0
        %1930 = vmatprep.subr.mxu0 0.0
        %1931 = vmatpush1.xpose.msra.mxu0 0.0
        %1932 = vmatprep.subr.mxu0 0.0
        %1933 = vmatpush1.xpose.msra.mxu0 0.0
        %1934 = vmatprep.subr.mxu0 0.0
        %1935 = vmatpush1.xpose.msra.mxu0 0.0
        %1936 = vmatprep.subr.mxu0 0.0
        %1937 = vmatpush1.xpose.msra.mxu0 0.0
        %1938 = vmatprep.subr.mxu0 0.0
        %1939 = vmatpush1.xpose.msra.mxu0 0.0
        %1940 = vmatprep.subr.mxu0 0.0
        %1941 = vmatpush1.xpose.msra.mxu0 0.0
        %1942 = vmatprep.subr.mxu0 0.0
        %1943 = vmatpush1.xpose.msra.mxu0 0.0
        %1944 = vmatprep.subr.mxu0 0.0
        %1945 = vmatpush1.xpose.msra.mxu0 0.0
        %1946 = vmatprep.subr.mxu0 0.0
        %1947 = vmatpush1.xpose.msra.mxu0 0.0
        %1948 = vmatprep.subr.mxu0 0.0
        %1949 = vmatpush1.xpose.msra.mxu0 0.0
        %1950 = vmatprep.subr.mxu0 0.0
        %1951 = vmatpush1.xpose.msra.mxu0 0.0
        %1952 = vmatprep.subr.mxu0 0.0
        %1953 = vmatpush1.xpose.msra.mxu0 0.0
        %1954 = vmatprep.subr.mxu0 0.0
        %1955 = vmatpush1.xpose.msra.mxu0 0.0
        %1956 = vmatprep.subr.mxu0 0.0
        %1957 = vmatpush1.xpose.msra.mxu0 0.0
        %1958 = vmatprep.subr.mxu0 0.0
        %1959 = vmatpush1.xpose.msra.mxu0 0.0
        %1960 = vmatprep.subr.mxu0 0.0
        %1961 = vmatpush1.xpose.msra.mxu0 0.0
        %1962 = vmatprep.subr.mxu0 0.0
        %1963 = vmatpush1.xpose.msra.mxu0 0.0
        %1964 = vmatprep.subr.mxu0 0.0
        %1965 = vmatpush1.xpose.msra.mxu0 0.0
        %1966 = vmatprep.subr.mxu0 0.0
        %1967 = vmatpush1.xpose.msra.mxu0 0.0
        %1968 = vmatprep.mubr.f32.mxu0 0.0
        %1969 = vmatmul.mubr.f32.gmra.mrb[0].mxu0 %v1898
        %v1970 = vpop.f32.mrb[0].mxu0
        %v1971 = vadd.f32 0.0, %v1970
        %v1972 = vpop.f32.mrb[0].mxu0
        %1973 = vdwg.mxu0
        %v1974 = vmul.f32 %v1971, 0.35355338
        %v1975 = vsel %vm1458, %v1974, -inf
        %1976 = vmax.xlane.f32.xlu0 %v1975
        %v1977 = vpop.xlane.xlu0 %1976
        %v1978 = vsub.f32 %v1974, %v1977
        %v1979 = vmul.f32 %v1978, 1.442695
        %v1980 = vpow.pop %v1979
        %v1981 = vsel %vm1458, %v1980, 0.0
        %1982 = vadd.xlane.f32.xlu0 %v1981
        %v1983 = vpop.xlane.xlu0 %1982
        %v1984 = vrcp.pop %v1983
        %v1985 = vmul.f32 %v1980, %v1984
        %1986 = vrot.lane.b32.xlu0 %v1714, 88
        %v1987 = vpop.permute.xlu0 %1986
        %1988 = vrot.lane.b32.xlu0 %v1719, 88
        %v1989 = vpop.permute.xlu0 %1988
        %v1993 = vsel %vm1458, %v1985, 0
        %1995 = vmatprep.subr.mxu0 0.0
        %1996 = vmatpush1.msra.mxu0 %v1987
        %1997 = vmatprep.subr.mxu0 0.0
        %1998 = vmatpush1.msra.mxu0 %v1989
        %1999 = vmatprep.subr.mxu0 0.0
        %2000 = vmatpush1.msra.mxu0 0.0
        %2001 = vmatprep.subr.mxu0 0.0
        %2002 = vmatpush1.msra.mxu0 0.0
        %2003 = vmatprep.subr.mxu0 0.0
        %2004 = vmatpush1.msra.mxu0 0.0
        %2005 = vmatprep.subr.mxu0 0.0
        %2006 = vmatpush1.msra.mxu0 0.0
        %2007 = vmatprep.subr.mxu0 0.0
        %2008 = vmatpush1.msra.mxu0 0.0
        %2009 = vmatprep.subr.mxu0 0.0
        %2010 = vmatpush1.msra.mxu0 0.0
        %2011 = vmatprep.subr.mxu0 0.0
        %2012 = vmatpush1.msra.mxu0 0.0
        %2013 = vmatprep.subr.mxu0 0.0
        %2014 = vmatpush1.msra.mxu0 0.0
        %2015 = vmatprep.subr.mxu0 0.0
        %2016 = vmatpush1.msra.mxu0 0.0
        %2017 = vmatprep.subr.mxu0 0.0
        %2018 = vmatpush1.msra.mxu0 0.0
        %2019 = vmatprep.subr.mxu0 0.0
        %2020 = vmatpush1.msra.mxu0 0.0
        %2021 = vmatprep.subr.mxu0 0.0
        %2022 = vmatpush1.msra.mxu0 0.0
        %2023 = vmatprep.subr.mxu0 0.0
        %2024 = vmatpush1.msra.mxu0 0.0
        %2025 = vmatprep.subr.mxu0 0.0
        %2026 = vmatpush1.msra.mxu0 0.0
        %2027 = vmatprep.subr.mxu0 0.0
        %2028 = vmatpush1.msra.mxu0 0.0
        %2029 = vmatprep.subr.mxu0 0.0
        %2030 = vmatpush1.msra.mxu0 0.0
        %2031 = vmatprep.subr.mxu0 0.0
        %2032 = vmatpush1.msra.mxu0 0.0
        %2033 = vmatprep.subr.mxu0 0.0
        %2034 = vmatpush1.msra.mxu0 0.0
        %2035 = vmatprep.subr.mxu0 0.0
        %2036 = vmatpush1.msra.mxu0 0.0
        %2037 = vmatprep.subr.mxu0 0.0
        %2038 = vmatpush1.msra.mxu0 0.0
        %2039 = vmatprep.subr.mxu0 0.0
        %2040 = vmatpush1.msra.mxu0 0.0
        %2041 = vmatprep.subr.mxu0 0.0
        %2042 = vmatpush1.msra.mxu0 0.0
        %2043 = vmatprep.subr.mxu0 0.0
        %2044 = vmatpush1.msra.mxu0 0.0
        %2045 = vmatprep.subr.mxu0 0.0
        %2046 = vmatpush1.msra.mxu0 0.0
        %2047 = vmatprep.subr.mxu0 0.0
        %2048 = vmatpush1.msra.mxu0 0.0
        %2049 = vmatprep.subr.mxu0 0.0
        %2050 = vmatpush1.msra.mxu0 0.0
        %2051 = vmatprep.subr.mxu0 0.0
        %2052 = vmatpush1.msra.mxu0 0.0
        %2053 = vmatprep.subr.mxu0 0.0
        %2054 = vmatpush1.msra.mxu0 0.0
        %2055 = vmatprep.subr.mxu0 0.0
        %2056 = vmatpush1.msra.mxu0 0.0
        %2057 = vmatprep.subr.mxu0 0.0
        %2058 = vmatpush1.msra.mxu0 0.0
        %2059 = vmatprep.mubr.f32.mxu0 0.0
        %2060 = vmatmul.mubr.f32.gmra.mrb[0].mxu0 %v1993
        %v2061 = vpop.f32.mrb[0].mxu0
        %v2062 = vadd.f32 0.0, %v2061
        %v2063 = vpop.f32.mrb[0].mxu0
        %2064 = vdwg.mxu0
        %2065 = vrot.lane.b32.xlu0 %v1632, 112
        %v2066 = vpop.permute.xlu0 %2065
        %2067 = vrot.lane.b32.xlu0 %v1714, 112
        %v2068 = vpop.permute.xlu0 %2067
        %2069 = vrot.lane.b32.xlu0 %v1719, 112
        %v2070 = vpop.permute.xlu0 %2069
        %v2071 = vsel %vm782, %v2066, 0
        %v2073 = vsel %vm782, %v2068, 0
        %v2075 = vsel %vm782, %v2070, 0
        %2077 = vmatprep.subr.mxu0 0.0
        %2078 = vmatpush1.xpose.msra.mxu0 %v2073
        %2079 = vmatprep.subr.mxu0 0.0
        %2080 = vmatpush1.xpose.msra.mxu0 %v2075
        %2081 = vmatprep.subr.mxu0 0.0
        %2082 = vmatpush1.xpose.msra.mxu0 0.0
        %2083 = vmatprep.subr.mxu0 0.0
        %2084 = vmatpush1.xpose.msra.mxu0 0.0
        %2085 = vmatprep.subr.mxu0 0.0
        %2086 = vmatpush1.xpose.msra.mxu0 0.0
        %2087 = vmatprep.subr.mxu0 0.0
        %2088 = vmatpush1.xpose.msra.mxu0 0.0
        %2089 = vmatprep.subr.mxu0 0.0
        %2090 = vmatpush1.xpose.msra.mxu0 0.0
        %2091 = vmatprep.subr.mxu0 0.0
        %2092 = vmatpush1.xpose.msra.mxu0 0.0
        %2093 = vmatprep.subr.mxu0 0.0
        %2094 = vmatpush1.xpose.msra.mxu0 0.0
        %2095 = vmatprep.subr.mxu0 0.0
        %2096 = vmatpush1.xpose.msra.mxu0 0.0
        %2097 = vmatprep.subr.mxu0 0.0
        %2098 = vmatpush1.xpose.msra.mxu0 0.0
        %2099 = vmatprep.subr.mxu0 0.0
        %2100 = vmatpush1.xpose.msra.mxu0 0.0
        %2101 = vmatprep.subr.mxu0 0.0
        %2102 = vmatpush1.xpose.msra.mxu0 0.0
        %2103 = vmatprep.subr.mxu0 0.0
        %2104 = vmatpush1.xpose.msra.mxu0 0.0
        %2105 = vmatprep.subr.mxu0 0.0
        %2106 = vmatpush1.xpose.msra.mxu0 0.0
        %2107 = vmatprep.subr.mxu0 0.0
        %2108 = vmatpush1.xpose.msra.mxu0 0.0
        %2109 = vmatprep.subr.mxu0 0.0
        %2110 = vmatpush1.xpose.msra.mxu0 0.0
        %2111 = vmatprep.subr.mxu0 0.0
        %2112 = vmatpush1.xpose.msra.mxu0 0.0
        %2113 = vmatprep.subr.mxu0 0.0
        %2114 = vmatpush1.xpose.msra.mxu0 0.0
        %2115 = vmatprep.subr.mxu0 0.0
        %2116 = vmatpush1.xpose.msra.mxu0 0.0
        %2117 = vmatprep.subr.mxu0 0.0
        %2118 = vmatpush1.xpose.msra.mxu0 0.0
        %2119 = vmatprep.subr.mxu0 0.0
        %2120 = vmatpush1.xpose.msra.mxu0 0.0
        %2121 = vmatprep.subr.mxu0 0.0
        %2122 = vmatpush1.xpose.msra.mxu0 0.0
        %2123 = vmatprep.subr.mxu0 0.0
        %2124 = vmatpush1.xpose.msra.mxu0 0.0
        %2125 = vmatprep.subr.mxu0 0.0
        %2126 = vmatpush1.xpose.msra.mxu0 0.0
        %2127 = vmatprep.subr.mxu0 0.0
        %2128 = vmatpush1.xpose.msra.mxu0 0.0
        %2129 = vmatprep.subr.mxu0 0.0
        %2130 = vmatpush1.xpose.msra.mxu0 0.0
        %2131 = vmatprep.subr.mxu0 0.0
        %2132 = vmatpush1.xpose.msra.mxu0 0.0
        %2133 = vmatprep.subr.mxu0 0.0
        %2134 = vmatpush1.xpose.msra.mxu0 0.0
        %2135 = vmatprep.subr.mxu0 0.0
        %2136 = vmatpush1.xpose.msra.mxu0 0.0
        %2137 = vmatprep.subr.mxu0 0.0
        %2138 = vmatpush1.xpose.msra.mxu0 0.0
        %2139 = vmatprep.subr.mxu0 0.0
        %2140 = vmatpush1.xpose.msra.mxu0 0.0
        %2141 = vmatprep.mubr.f32.mxu0 0.0
        %2142 = vmatmul.mubr.f32.gmra.mrb[0].mxu0 %v2071
        %v2143 = vpop.f32.mrb[0].mxu0
        %v2144 = vadd.f32 0.0, %v2143
        %v2145 = vpop.f32.mrb[0].mxu0
        %2146 = vdwg.mxu0
        %v2147 = vmul.f32 %v2144, 0.35355338
        %v2148 = vsel %vm1458, %v2147, -inf
        %2149 = vmax.xlane.f32.xlu0 %v2148
        %v2150 = vpop.xlane.xlu0 %2149
        %v2151 = vsub.f32 %v2147, %v2150
        %v2152 = vmul.f32 %v2151, 1.442695
        %v2153 = vpow.pop %v2152
        %v2154 = vsel %vm1458, %v2153, 0.0
        %2155 = vadd.xlane.f32.xlu0 %v2154
        %v2156 = vpop.xlane.xlu0 %2155
        %v2157 = vrcp.pop %v2156
        %v2158 = vmul.f32 %v2153, %v2157
        %2159 = vrot.lane.b32.xlu0 %v1714, 80
        %v2160 = vpop.permute.xlu0 %2159
        %2161 = vrot.lane.b32.xlu0 %v1719, 80
        %v2162 = vpop.permute.xlu0 %2161
        %v2166 = vsel %vm1458, %v2158, 0
        %2168 = vmatprep.subr.mxu0 0.0
        %2169 = vmatpush1.msra.mxu0 %v2160
        %2170 = vmatprep.subr.mxu0 0.0
        %2171 = vmatpush1.msra.mxu0 %v2162
        %2172 = vmatprep.subr.mxu0 0.0
        %2173 = vmatpush1.msra.mxu0 0.0
        %2174 = vmatprep.subr.mxu0 0.0
        %2175 = vmatpush1.msra.mxu0 0.0
        %2176 = vmatprep.subr.mxu0 0.0
        %2177 = vmatpush1.msra.mxu0 0.0
        %2178 = vmatprep.subr.mxu0 0.0
        %2179 = vmatpush1.msra.mxu0 0.0
        %2180 = vmatprep.subr.mxu0 0.0
        %2181 = vmatpush1.msra.mxu0 0.0
        %2182 = vmatprep.subr.mxu0 0.0
        %2183 = vmatpush1.msra.mxu0 0.0
        %2184 = vmatprep.subr.mxu0 0.0
        %2185 = vmatpush1.msra.mxu0 0.0
        %2186 = vmatprep.subr.mxu0 0.0
        %2187 = vmatpush1.msra.mxu0 0.0
        %2188 = vmatprep.subr.mxu0 0.0
        %2189 = vmatpush1.msra.mxu0 0.0
        %2190 = vmatprep.subr.mxu0 0.0
        %2191 = vmatpush1.msra.mxu0 0.0
        %2192 = vmatprep.subr.mxu0 0.0
        %2193 = vmatpush1.msra.mxu0 0.0
        %2194 = vmatprep.subr.mxu0 0.0
        %2195 = vmatpush1.msra.mxu0 0.0
        %2196 = vmatprep.subr.mxu0 0.0
        %2197 = vmatpush1.msra.mxu0 0.0
        %2198 = vmatprep.subr.mxu0 0.0
        %2199 = vmatpush1.msra.mxu0 0.0
        %2200 = vmatprep.subr.mxu0 0.0
        %2201 = vmatpush1.msra.mxu0 0.0
        %2202 = vmatprep.subr.mxu0 0.0
        %2203 = vmatpush1.msra.mxu0 0.0
        %2204 = vmatprep.subr.mxu0 0.0
        %2205 = vmatpush1.msra.mxu0 0.0
        %2206 = vmatprep.subr.mxu0 0.0
        %2207 = vmatpush1.msra.mxu0 0.0
        %2208 = vmatprep.subr.mxu0 0.0
        %2209 = vmatpush1.msra.mxu0 0.0
        %2210 = vmatprep.subr.mxu0 0.0
        %2211 = vmatpush1.msra.mxu0 0.0
        %2212 = vmatprep.subr.mxu0 0.0
        %2213 = vmatpush1.msra.mxu0 0.0
        %2214 = vmatprep.subr.mxu0 0.0
        %2215 = vmatpush1.msra.mxu0 0.0
        %2216 = vmatprep.subr.mxu0 0.0
        %2217 = vmatpush1.msra.mxu0 0.0
        %2218 = vmatprep.subr.mxu0 0.0
        %2219 = vmatpush1.msra.mxu0 0.0
        %2220 = vmatprep.subr.mxu0 0.0
        %2221 = vmatpush1.msra.mxu0 0.0
        %2222 = vmatprep.subr.mxu0 0.0
        %2223 = vmatpush1.msra.mxu0 0.0
        %2224 = vmatprep.subr.mxu0 0.0
        %2225 = vmatpush1.msra.mxu0 0.0
        %2226 = vmatprep.subr.mxu0 0.0
        %2227 = vmatpush1.msra.mxu0 0.0
        %2228 = vmatprep.subr.mxu0 0.0
        %2229 = vmatpush1.msra.mxu0 0.0
        %2230 = vmatprep.subr.mxu0 0.0
        %2231 = vmatpush1.msra.mxu0 0.0
        %2232 = vmatprep.mubr.f32.mxu0 0.0
        %2233 = vmatmul.mubr.f32.gmra.mrb[0].mxu0 %v2166
        %v2234 = vpop.f32.mrb[0].mxu0
        %v2235 = vadd.f32 0.0, %v2234
        %v2236 = vpop.f32.mrb[0].mxu0
        %2237 = vdwg.mxu0
        %2238 = vrot.lane.b32.xlu0 %v1632, 104
        %v2239 = vpop.permute.xlu0 %2238
        %2240 = vrot.lane.b32.xlu0 %v1714, 104
        %v2241 = vpop.permute.xlu0 %2240
        %2242 = vrot.lane.b32.xlu0 %v1719, 104
        %v2243 = vpop.permute.xlu0 %2242
        %v2244 = vsel %vm782, %v2239, 0
        %v2246 = vsel %vm782, %v2241, 0
        %v2248 = vsel %vm782, %v2243, 0
        %2250 = vmatprep.subr.mxu0 0.0
        %2251 = vmatpush1.xpose.msra.mxu0 %v2246
        %2252 = vmatprep.subr.mxu0 0.0
        %2253 = vmatpush1.xpose.msra.mxu0 %v2248
        %2254 = vmatprep.subr.mxu0 0.0
        %2255 = vmatpush1.xpose.msra.mxu0 0.0
        %2256 = vmatprep.subr.mxu0 0.0
        %2257 = vmatpush1.xpose.msra.mxu0 0.0
        %2258 = vmatprep.subr.mxu0 0.0
        %2259 = vmatpush1.xpose.msra.mxu0 0.0
        %2260 = vmatprep.subr.mxu0 0.0
        %2261 = vmatpush1.xpose.msra.mxu0 0.0
        %2262 = vmatprep.subr.mxu0 0.0
        %2263 = vmatpush1.xpose.msra.mxu0 0.0
        %2264 = vmatprep.subr.mxu0 0.0
        %2265 = vmatpush1.xpose.msra.mxu0 0.0
        %2266 = vmatprep.subr.mxu0 0.0
        %2267 = vmatpush1.xpose.msra.mxu0 0.0
        %2268 = vmatprep.subr.mxu0 0.0
        %2269 = vmatpush1.xpose.msra.mxu0 0.0
        %2270 = vmatprep.subr.mxu0 0.0
        %2271 = vmatpush1.xpose.msra.mxu0 0.0
        %2272 = vmatprep.subr.mxu0 0.0
        %2273 = vmatpush1.xpose.msra.mxu0 0.0
        %2274 = vmatprep.subr.mxu0 0.0
        %2275 = vmatpush1.xpose.msra.mxu0 0.0
        %2276 = vmatprep.subr.mxu0 0.0
        %2277 = vmatpush1.xpose.msra.mxu0 0.0
        %2278 = vmatprep.subr.mxu0 0.0
        %2279 = vmatpush1.xpose.msra.mxu0 0.0
        %2280 = vmatprep.subr.mxu0 0.0
        %2281 = vmatpush1.xpose.msra.mxu0 0.0
        %2282 = vmatprep.subr.mxu0 0.0
        %2283 = vmatpush1.xpose.msra.mxu0 0.0
        %2284 = vmatprep.subr.mxu0 0.0
        %2285 = vmatpush1.xpose.msra.mxu0 0.0
        %2286 = vmatprep.subr.mxu0 0.0
        %2287 = vmatpush1.xpose.msra.mxu0 0.0
        %2288 = vmatprep.subr.mxu0 0.0
        %2289 = vmatpush1.xpose.msra.mxu0 0.0
        %2290 = vmatprep.subr.mxu0 0.0
        %2291 = vmatpush1.xpose.msra.mxu0 0.0
        %2292 = vmatprep.subr.mxu0 0.0
        %2293 = vmatpush1.xpose.msra.mxu0 0.0
        %2294 = vmatprep.subr.mxu0 0.0
        %2295 = vmatpush1.xpose.msra.mxu0 0.0
        %2296 = vmatprep.subr.mxu0 0.0
        %2297 = vmatpush1.xpose.msra.mxu0 0.0
        %2298 = vmatprep.subr.mxu0 0.0
        %2299 = vmatpush1.xpose.msra.mxu0 0.0
        %2300 = vmatprep.subr.mxu0 0.0
        %2301 = vmatpush1.xpose.msra.mxu0 0.0
        %2302 = vmatprep.subr.mxu0 0.0
        %2303 = vmatpush1.xpose.msra.mxu0 0.0
        %2304 = vmatprep.subr.mxu0 0.0
        %2305 = vmatpush1.xpose.msra.mxu0 0.0
        %2306 = vmatprep.subr.mxu0 0.0
        %2307 = vmatpush1.xpose.msra.mxu0 0.0
        %2308 = vmatprep.subr.mxu0 0.0
        %2309 = vmatpush1.xpose.msra.mxu0 0.0
        %2310 = vmatprep.subr.mxu0 0.0
        %2311 = vmatpush1.xpose.msra.mxu0 0.0
        %2312 = vmatprep.subr.mxu0 0.0
        %2313 = vmatpush1.xpose.msra.mxu0 0.0
        %2314 = vmatprep.mubr.f32.mxu0 0.0
        %2315 = vmatmul.mubr.f32.gmra.mrb[0].mxu0 %v2244
        %v2316 = vpop.f32.mrb[0].mxu0
        %v2317 = vadd.f32 0.0, %v2316
        %v2318 = vpop.f32.mrb[0].mxu0
        %2319 = vdwg.mxu0
        %v2320 = vmul.f32 %v2317, 0.35355338
        %v2321 = vsel %vm1458, %v2320, -inf
        %2322 = vmax.xlane.f32.xlu0 %v2321
        %v2323 = vpop.xlane.xlu0 %2322
        %v2324 = vsub.f32 %v2320, %v2323
        %v2325 = vmul.f32 %v2324, 1.442695
        %v2326 = vpow.pop %v2325
        %v2327 = vsel %vm1458, %v2326, 0.0
        %2328 = vadd.xlane.f32.xlu0 %v2327
        %v2329 = vpop.xlane.xlu0 %2328
        %v2330 = vrcp.pop %v2329
        %v2331 = vmul.f32 %v2326, %v2330
        %2332 = vrot.lane.b32.xlu0 %v1714, 72
        %v2333 = vpop.permute.xlu0 %2332
        %2334 = vrot.lane.b32.xlu0 %v1719, 72
        %v2335 = vpop.permute.xlu0 %2334
        %v2339 = vsel %vm1458, %v2331, 0
        %2341 = vmatprep.subr.mxu0 0.0
        %2342 = vmatpush1.msra.mxu0 %v2333
        %2343 = vmatprep.subr.mxu0 0.0
        %2344 = vmatpush1.msra.mxu0 %v2335
        %2345 = vmatprep.subr.mxu0 0.0
        %2346 = vmatpush1.msra.mxu0 0.0
        %2347 = vmatprep.subr.mxu0 0.0
        %2348 = vmatpush1.msra.mxu0 0.0
        %2349 = vmatprep.subr.mxu0 0.0
        %2350 = vmatpush1.msra.mxu0 0.0
        %2351 = vmatprep.subr.mxu0 0.0
        %2352 = vmatpush1.msra.mxu0 0.0
        %2353 = vmatprep.subr.mxu0 0.0
        %2354 = vmatpush1.msra.mxu0 0.0
        %2355 = vmatprep.subr.mxu0 0.0
        %2356 = vmatpush1.msra.mxu0 0.0
        %2357 = vmatprep.subr.mxu0 0.0
        %2358 = vmatpush1.msra.mxu0 0.0
        %2359 = vmatprep.subr.mxu0 0.0
        %2360 = vmatpush1.msra.mxu0 0.0
        %2361 = vmatprep.subr.mxu0 0.0
        %2362 = vmatpush1.msra.mxu0 0.0
        %2363 = vmatprep.subr.mxu0 0.0
        %2364 = vmatpush1.msra.mxu0 0.0
        %2365 = vmatprep.subr.mxu0 0.0
        %2366 = vmatpush1.msra.mxu0 0.0
        %2367 = vmatprep.subr.mxu0 0.0
        %2368 = vmatpush1.msra.mxu0 0.0
        %2369 = vmatprep.subr.mxu0 0.0
        %2370 = vmatpush1.msra.mxu0 0.0
        %2371 = vmatprep.subr.mxu0 0.0
        %2372 = vmatpush1.msra.mxu0 0.0
        %2373 = vmatprep.subr.mxu0 0.0
        %2374 = vmatpush1.msra.mxu0 0.0
        %2375 = vmatprep.subr.mxu0 0.0
        %2376 = vmatpush1.msra.mxu0 0.0
        %2377 = vmatprep.subr.mxu0 0.0
        %2378 = vmatpush1.msra.mxu0 0.0
        %2379 = vmatprep.subr.mxu0 0.0
        %2380 = vmatpush1.msra.mxu0 0.0
        %2381 = vmatprep.subr.mxu0 0.0
        %2382 = vmatpush1.msra.mxu0 0.0
        %2383 = vmatprep.subr.mxu0 0.0
        %2384 = vmatpush1.msra.mxu0 0.0
        %2385 = vmatprep.subr.mxu0 0.0
        %2386 = vmatpush1.msra.mxu0 0.0
        %2387 = vmatprep.subr.mxu0 0.0
        %2388 = vmatpush1.msra.mxu0 0.0
        %2389 = vmatprep.subr.mxu0 0.0
        %2390 = vmatpush1.msra.mxu0 0.0
        %2391 = vmatprep.subr.mxu0 0.0
        %2392 = vmatpush1.msra.mxu0 0.0
        %2393 = vmatprep.subr.mxu0 0.0
        %2394 = vmatpush1.msra.mxu0 0.0
        %2395 = vmatprep.subr.mxu0 0.0
        %2396 = vmatpush1.msra.mxu0 0.0
        %2397 = vmatprep.subr.mxu0 0.0
        %2398 = vmatpush1.msra.mxu0 0.0
        %2399 = vmatprep.subr.mxu0 0.0
        %2400 = vmatpush1.msra.mxu0 0.0
        %2401 = vmatprep.subr.mxu0 0.0
        %2402 = vmatpush1.msra.mxu0 0.0
        %2403 = vmatprep.subr.mxu0 0.0
        %2404 = vmatpush1.msra.mxu0 0.0
        %2405 = vmatprep.mubr.f32.mxu0 0.0
        %2406 = vmatmul.mubr.f32.gmra.mrb[0].mxu0 %v2339
        %v2407 = vpop.f32.mrb[0].mxu0
        %v2408 = vadd.f32 0.0, %v2407
        %v2409 = vpop.f32.mrb[0].mxu0
        %2410 = vdwg.mxu0
        %2412 = vrot.lane.b32.xlu0 %v2062, 8
        %v2413 = vpop.permute.xlu0 %2412
        %2416 = vrot.lane.b32.xlu0 %v2235, 16
        %v2417 = vpop.permute.xlu0 %2416
        %2420 = vrot.lane.b32.xlu0 %v2408, 24
        %v2421 = vpop.permute.xlu0 %2420
        %v2423 = vsel %vm782, %v1889, %v2413
        %v2424 = vsel %vm1458, %v2423, %v2417
        %v2425 = vsel %vm1460, %v2424, %v2421
        %v2427 = vlaneseq
        %v2428 = vshrl.u32 %v2427, 7
        %v2429 = vsub.s32 0, %v2428
        %v2430 = vrot.slane %v1555, %v2429
        %v2433 = vsel %vm632, %v2425, 0
        %2435 = vmatprep.subr.mxu0 0.0
        %2436 = vmatpush1.msra.mxu0 %v1551
        %2437 = vmatprep.subr.mxu0 0.0
        %2438 = vmatpush1.msra.mxu0 %v1552
        %2439 = vmatprep.subr.mxu0 0.0
        %2440 = vmatpush1.msra.mxu0 %v1553
        %2441 = vmatprep.subr.mxu0 0.0
        %2442 = vmatpush1.msra.mxu0 %v1554
        %2443 = vmatprep.subr.mxu0 0.0
        %2444 = vmatpush1.msra.mxu0 0.0
        %2445 = vmatprep.subr.mxu0 0.0
        %2446 = vmatpush1.msra.mxu0 0.0
        %2447 = vmatprep.subr.mxu0 0.0
        %2448 = vmatpush1.msra.mxu0 0.0
        %2449 = vmatprep.subr.mxu0 0.0
        %2450 = vmatpush1.msra.mxu0 0.0
        %2451 = vmatprep.subr.mxu0 0.0
        %2452 = vmatpush1.msra.mxu0 0.0
        %2453 = vmatprep.subr.mxu0 0.0
        %2454 = vmatpush1.msra.mxu0 0.0
        %2455 = vmatprep.subr.mxu0 0.0
        %2456 = vmatpush1.msra.mxu0 0.0
        %2457 = vmatprep.subr.mxu0 0.0
        %2458 = vmatpush1.msra.mxu0 0.0
        %2459 = vmatprep.subr.mxu0 0.0
        %2460 = vmatpush1.msra.mxu0 0.0
        %2461 = vmatprep.subr.mxu0 0.0
        %2462 = vmatpush1.msra.mxu0 0.0
        %2463 = vmatprep.subr.mxu0 0.0
        %2464 = vmatpush1.msra.mxu0 0.0
        %2465 = vmatprep.subr.mxu0 0.0
        %2466 = vmatpush1.msra.mxu0 0.0
        %2467 = vmatprep.subr.mxu0 0.0
        %2468 = vmatpush1.msra.mxu0 0.0
        %2469 = vmatprep.subr.mxu0 0.0
        %2470 = vmatpush1.msra.mxu0 0.0
        %2471 = vmatprep.subr.mxu0 0.0
        %2472 = vmatpush1.msra.mxu0 0.0
        %2473 = vmatprep.subr.mxu0 0.0
        %2474 = vmatpush1.msra.mxu0 0.0
        %2475 = vmatprep.subr.mxu0 0.0
        %2476 = vmatpush1.msra.mxu0 0.0
        %2477 = vmatprep.subr.mxu0 0.0
        %2478 = vmatpush1.msra.mxu0 0.0
        %2479 = vmatprep.subr.mxu0 0.0
        %2480 = vmatpush1.msra.mxu0 0.0
        %2481 = vmatprep.subr.mxu0 0.0
        %2482 = vmatpush1.msra.mxu0 0.0
        %2483 = vmatprep.subr.mxu0 0.0
        %2484 = vmatpush1.msra.mxu0 0.0
        %2485 = vmatprep.subr.mxu0 0.0
        %2486 = vmatpush1.msra.mxu0 0.0
        %2487 = vmatprep.subr.mxu0 0.0
        %2488 = vmatpush1.msra.mxu0 0.0
        %2489 = vmatprep.subr.mxu0 0.0
        %2490 = vmatpush1.msra.mxu0 0.0
        %2491 = vmatprep.subr.mxu0 0.0
        %2492 = vmatpush1.msra.mxu0 0.0
        %2493 = vmatprep.subr.mxu0 0.0
        %2494 = vmatpush1.msra.mxu0 0.0
        %2495 = vmatprep.subr.mxu0 0.0
        %2496 = vmatpush1.msra.mxu0 0.0
        %2497 = vmatprep.subr.mxu0 0.0
        %2498 = vmatpush1.msra.mxu0 0.0
        %2499 = vmatprep.mubr.f32.mxu0 0.0
        %2500 = vmatmul.mubr.f32.gmra.mrb[0].mxu0 %v2433
        %v2501 = vpop.f32.mrb[0].mxu0
        %v2502 = vadd.f32 %v2430, %v2501
        %v2503 = vpop.f32.mrb[0].mxu0
        %2504 = vdwg.mxu0
        %2505 = vst.msk [vmem:[%s607] sm:$0xff] %vm632, %v2502
        %s2506 = sand.u32 %s349, 1
        %s2507 = scalar_lea.sflag [#allocation4], %s2506
        %s2508 = sand.u32 %s349, 1
        %s2509 = smul.addr %s2508, 8
        %s2510 = scalar_lea.vmem [#allocation16], %s2509
        // Predicated region
        $region109: #{tpu_custom_call.1} parent=75 // pred_check
          %p2511 = pneg %p359
        $region110: #{tpu_custom_call.1} parent=75 // pred_check_branch
          %2513 = sbr.rel (%p2511) target = $region112
        $region111: #{tpu_custom_call.1} parent=75 // pred_region
          %s2515 = ssub.s32 128, 128
          %2516 = vsyncadd %s2507, %s2515
          %s2517 = smul.addr %s37, 128
          %s2518 = scalar_lea.hbm %s14, %s2517
          %s2520 = sshll.u32 %s2510, 4
          %s2521 = int_to_ptr.vmem [resolvable:$true] %s2520
          %2523 = dma.vmem_to_hbm [thread:$0]  %s2521, 128, %s2518, %s2507
        $region112: #{tpu_custom_call.1} parent=75 // pred_fallthru
          _
      $region76: #{tpu_custom_call.1} parent=5 // pred_fallthru
        _
      %p2524 = scmp.le.s32.totalorder 2, %s32
      // Predicated region
      $region113: #{tpu_custom_call.1} parent=5 // pred_check
        %p2525 = pneg %p2524
      $region114: #{tpu_custom_call.1} parent=5 // pred_check_branch
        %2527 = sbr.rel (%p2525) target = $region116
      $region115: #{tpu_custom_call.1} parent=5 // pred_region
        %s2528 = ssub.s32 %s32, 2
        // Predicated region
        $region117: #{tpu_custom_call.1} parent=115 // pred_check
          %p2529 = pneg %p365
        $region118: #{tpu_custom_call.1} parent=115 // pred_check_branch
          %2531 = sbr.rel (%p2529) target = $region120
        $region119: #{tpu_custom_call.1} parent=115 // pred_region
          %s2532 = sand.u32 %s350, 1
          %s2533 = scalar_lea.sflag [#allocation4], %s2532
          %s2534 = sand.u32 %s350, 1
          %s2535 = smul.addr %s2534, 8
          %s2536 = scalar_lea.vmem [#allocation16], %s2535
          %2537 = dma.done %s2533, 128
        $region120: #{tpu_custom_call.1} parent=115 // pred_fallthru
          _
      $region116: #{tpu_custom_call.1} parent=5 // pred_fallthru
        _
    $region6: #{tpu_custom_call.1} parent=1 // loop_footer
      %s36 = sadd.s32 1, %s32
    $region7: #{tpu_custom_call.1} parent=1 // loop_footer_branch
      %31 = sbr.rel target = $region3
    $region8: #{tpu_custom_call.1} parent=1 // loop_exit
      _
    %2538 = vsyncpa [#allocation3], 1
    %s2539 = scalar_lea.sflag [#allocation3], 1
    %2540 = vsyncpa %s2539, 1
    %2541 = vsyncpa [#allocation6], 1
    %s2542 = scalar_lea.sflag [#allocation6], 1
    %2543 = vsyncpa %s2542, 1
    %2544 = vsyncpa [#allocation9], 1
    %2545 = vsyncpa [#allocation12], 1
    %2546 = vsyncpa [#allocation15], 1
    %2547 = vsyncpa [#allocation4], 1
    %s2548 = scalar_lea.sflag [#allocation4], 1
    %2549 = vsyncpa %s2548, 1

</llo_original>
